<compile_context>
chip_gen: v5e
topology: v5e:2x2
jax: 0.10.0
libtpu: 0.0.40
codegen_flags: <defaults>
</compile_context>

<pallas_src>
import math
from functools import partial

import jax
import jax.numpy as jnp
from jax.experimental import pallas as pl
from jax.experimental.pallas import tpu as pltpu

PAD_IDX = 0
LN_EPS = 1e-5
NEG_INF = -1e30                      # finite large-negative mask (avoids -inf NaN hazard)


def _vmem_limit_bytes():
    # Generation-dependent VMEM budget: ~85% of physical, capped at 110 MiB.
    try:
        cap = int(pltpu.get_tpu_info().vmem_capacity_bytes)
    except Exception:
        cap = 64 * 1024 * 1024        # conservative fallback (v7x per-TC VMEM)
    return min(int(cap * 0.85), 110 * 1024 * 1024)


VMEM_LIMIT = _vmem_limit_bytes()


def _pick_tile(m):
    """Largest token tile that divides M and respects the sublane-8 rule."""
    for t in (1024, 512, 256, 128, 64, 32, 16, 8):
        if t <= m and m % t == 0:
            return t
    return m


def _resident(shape):
    # Whole-array block, pinned to block index 0 -> stays resident across the grid.
    return pl.BlockSpec(shape, lambda *_: (0,) * len(shape))


# --------------------------- fused attention block ---------------------------

def attn_block_kernel(x_ref, kv_ref, kb_ref, wq_ref, bq_ref, wk_ref, bk_ref,
                      wv_ref, bv_ref, wo_ref, bo_ref, g_ref, b_ref, o_ref,
                      *, n_heads, causal, q_tile):
    x_bf = x_ref[0]                              # [tq, D]  bf16
    src_bf = kv_ref[0]                           # [Lk, D]  bf16
    kbias = kb_ref[0]                            # [1,  Lk] f32 additive key-padding bias

    tq, D = x_bf.shape
    Lk = src_bf.shape[0]
    Dh = D // n_heads

    # Projections (Q-scale folded into Wq/bq in the wrapper).  bf16 MXU, f32 accumulate.
    q = jnp.dot(x_bf, wq_ref[...], preferred_element_type=jnp.float32) + bq_ref[...]
    k = jnp.dot(src_bf, wk_ref[...], preferred_element_type=jnp.float32) + bk_ref[...]
    v = jnp.dot(src_bf, wv_ref[...], preferred_element_type=jnp.float32) + bv_ref[...]

    # Head-batched layout [H, L, Dh]: one relayout, then batched MXU dots
    # (no per-head lane slices, no lane-dim concatenate).
    qh = jnp.transpose(q.reshape(tq, n_heads, Dh), (1, 0, 2)).astype(jnp.bfloat16)
    kh = jnp.transpose(k.reshape(Lk, n_heads, Dh), (1, 0, 2)).astype(jnp.bfloat16)
    vh = jnp.transpose(v.reshape(Lk, n_heads, Dh), (1, 0, 2)).astype(jnp.bfloat16)

    s = jnp.einsum('hqd,hkd->hqk', qh, kh,
                   preferred_element_type=jnp.float32)                    # [H, tq, Lk]

    # In-kernel masking: key-padding bias (+ causal for decoder self-attention).
    s = s + kbias                                                         # bcast [1,Lk]
    if causal:
        q0 = pl.program_id(1) * q_tile
        qi = q0 + jax.lax.broadcasted_iota(jnp.int32, (tq, Lk), 0)
        ki = jax.lax.broadcasted_iota(jnp.int32, (tq, Lk), 1)
        s = s + jnp.where(ki > qi, jnp.float32(NEG_INF), jnp.float32(0.0))[None]

    # Softmax over keys (f32), approximate reciprocal on the EUP.
    m = jnp.max(s, axis=-1, keepdims=True)
    p = jnp.exp(s - m)
    p = p * pl.reciprocal(jnp.sum(p, axis=-1, keepdims=True), approx=True)

    ctx = jnp.einsum('hqk,hkd->hqd', p.astype(jnp.bfloat16), vh,
                     preferred_element_type=jnp.float32)                  # [H, tq, Dh]
    attn = jnp.transpose(ctx, (1, 0, 2)).reshape(tq, D)                   # [tq, D]

    # Output projection + residual + LayerNorm (f32), store bf16.
    proj = jnp.dot(attn.astype(jnp.bfloat16), wo_ref[...],
                   preferred_element_type=jnp.float32) + bo_ref[...]
    r = x_bf.astype(jnp.float32) + proj
    mean = jnp.mean(r, axis=-1, keepdims=True)
    var = jnp.mean((r - mean) ** 2, axis=-1, keepdims=True)
    y = (r - mean) * jax.lax.rsqrt(var + LN_EPS) * g_ref[...] + b_ref[...]
    o_ref[0] = y.astype(o_ref.dtype)


def attention_block(x, kv, key_bias, p, ln_g, ln_b, n_heads, causal):
    """Fused MHA + residual + LayerNorm. x:[B,Lq,D] bf16, kv:[B,Lk,D] bf16,
    key_bias:[B,1,Lk] f32.  Returns bf16 [B,Lq,D]."""
    B, Lq, D = x.shape
    Lk = kv.shape[1]
    Dh = D // n_heads
    scale = 1.0 / math.sqrt(Dh)
    tq = _pick_tile(Lq)
    n_qt = Lq // tq

    wq = (p['wq'] * scale).astype(jnp.bfloat16)
    bq = (p['bq'] * scale).reshape(1, D).astype(jnp.float32)
    wk = p['wk'].astype(jnp.bfloat16)
    bk = p['bk'].reshape(1, D).astype(jnp.float32)
    wv = p['wv'].astype(jnp.bfloat16)
    bv = p['bv'].reshape(1, D).astype(jnp.float32)
    wo = p['wo'].astype(jnp.bfloat16)
    bo = p['bo'].reshape(1, D).astype(jnp.float32)
    g = ln_g.reshape(1, D).astype(jnp.float32)
    b = ln_b.reshape(1, D).astype(jnp.float32)

    flops = int(2 * B * (2 * Lq * D * D + 2 * Lk * D * D + 2 * Lq * Lk * D))
    bytes_accessed = int(2 * B * Lq * D + 2 * B * Lk * D + 2 * B * Lq * D
                         + 4 * 2 * D * D + 4 * B * Lk)
    transcendentals = int(B * n_heads * Lq * Lk)

    grid_spec = pltpu.PrefetchScalarGridSpec(
        num_scalar_prefetch=0,
        grid=(B, n_qt),
        in_specs=[
            pl.BlockSpec((1, tq, D), lambda i, j: (i, j, 0)),
            pl.BlockSpec((1, Lk, D), lambda i, j: (i, 0, 0)),
            pl.BlockSpec((1, 1, Lk), lambda i, j: (i, 0, 0)),
            _resident((D, D)), _resident((1, D)),     # wq, bq
            _resident((D, D)), _resident((1, D)),     # wk, bk
            _resident((D, D)), _resident((1, D)),     # wv, bv
            _resident((D, D)), _resident((1, D)),     # wo, bo
            _resident((1, D)), _resident((1, D)),     # ln gamma, beta
        ],
        out_specs=pl.BlockSpec((1, tq, D), lambda i, j: (i, j, 0)),
    )
    return pl.pallas_call(
        partial(attn_block_kernel, n_heads=n_heads, causal=causal, q_tile=tq),
        out_shape=jax.ShapeDtypeStruct((B, Lq, D), jnp.bfloat16),
        grid_spec=grid_spec,
        compiler_params=pltpu.CompilerParams(
            dimension_semantics=("parallel", "parallel"),
            vmem_limit_bytes=VMEM_LIMIT),
        cost_estimate=pl.CostEstimate(
            flops=flops, transcendentals=transcendentals,
            bytes_accessed=bytes_accessed),
    )(x, kv, key_bias, wq, bq, wk, bk, wv, bv, wo, bo, g, b)


# ------------------------------ fused FFN block ------------------------------

def ffn_block_kernel(x_ref, w1_ref, b1_ref, w2_ref, b2_ref, g_ref, b_ref, o_ref):
    x_bf = x_ref[...]                                                    # [tm, D] bf16
    h = jnp.dot(x_bf, w1_ref[...], preferred_element_type=jnp.float32) + b1_ref[...]
    h = jnp.maximum(h, 0.0)
    y = jnp.dot(h.astype(jnp.bfloat16), w2_ref[...],
                preferred_element_type=jnp.float32) + b2_ref[...]
    r = x_bf.astype(jnp.float32) + y
    mean = jnp.mean(r, axis=-1, keepdims=True)
    var = jnp.mean((r - mean) ** 2, axis=-1, keepdims=True)
    o_ref[...] = ((r - mean) * jax.lax.rsqrt(var + LN_EPS)
                  * g_ref[...] + b_ref[...]).astype(o_ref.dtype)


def ffn_ln_block(x, p, ln_g, ln_b):
    B, L, D = x.shape
    M = B * L
    d_ff = p['w1'].shape[1]
    tm = _pick_tile(M)
    x2 = x.reshape(M, D)
    out = pl.pallas_call(
        ffn_block_kernel,
        out_shape=jax.ShapeDtypeStruct((M, D), jnp.bfloat16),
        grid_spec=pltpu.PrefetchScalarGridSpec(
            num_scalar_prefetch=0,
            grid=(M // tm,),
            in_specs=[pl.BlockSpec((tm, D), lambda i: (i, 0)),
                      _resident((D, d_ff)), _resident((1, d_ff)),
                      _resident((d_ff, D)), _resident((1, D)),
                      _resident((1, D)), _resident((1, D))],
            out_specs=pl.BlockSpec((tm, D), lambda i: (i, 0))),
        compiler_params=pltpu.CompilerParams(
            dimension_semantics=("parallel",),
            vmem_limit_bytes=VMEM_LIMIT),
        cost_estimate=pl.CostEstimate(
            flops=int(4 * M * D * d_ff), transcendentals=0,
            bytes_accessed=int(4 * M * D + 4 * D * d_ff)),
    )(x2,
      p['w1'].astype(jnp.bfloat16), p['b1'].reshape(1, d_ff).astype(jnp.float32),
      p['w2'].astype(jnp.bfloat16), p['b2'].reshape(1, D).astype(jnp.float32),
      ln_g.reshape(1, D).astype(jnp.float32), ln_b.reshape(1, D).astype(jnp.float32))
    return out.reshape(B, L, D)


# ------------------------------- output kernel --------------------------------

def linear_kernel(x_ref, w_ref, b_ref, o_ref):
    o_ref[...] = jnp.dot(x_ref[...], w_ref[...],
                         preferred_element_type=jnp.float32) + b_ref[...]


def linear_proj(x2d, w, b):
    """fc_out: x2d [M,D] bf16 @ w [D,N] + b.  Output padded to lane-dense N,
    tiled over (tokens, vocab), then sliced back to N."""
    M, D = x2d.shape
    N = w.shape[1]
    n_pad = ((N + 127) // 128) * 128
    if n_pad != N:
        w = jnp.pad(w, ((0, 0), (0, n_pad - N)))
        b = jnp.pad(b, (0, n_pad - N))
    tm = _pick_tile(M)
    tn = 512 if n_pad % 512 == 0 else (256 if n_pad % 256 == 0 else 128)
    out = pl.pallas_call(
        linear_kernel,
        out_shape=jax.ShapeDtypeStruct((M, n_pad), jnp.float32),
        grid_spec=pltpu.PrefetchScalarGridSpec(
            num_scalar_prefetch=0,
            grid=(M // tm, n_pad // tn),
            in_specs=[pl.BlockSpec((tm, D), lambda i, j: (i, 0)),
                      pl.BlockSpec((D, tn), lambda i, j: (0, j)),
                      pl.BlockSpec((1, tn), lambda i, j: (0, j))],
            out_specs=pl.BlockSpec((tm, tn), lambda i, j: (i, j))),
        compiler_params=pltpu.CompilerParams(
            dimension_semantics=("parallel", "parallel"),
            vmem_limit_bytes=VMEM_LIMIT),
        cost_estimate=pl.CostEstimate(
            flops=int(2 * M * D * n_pad), transcendentals=0,
            bytes_accessed=int(2 * M * D + 2 * D * n_pad + 4 * M * n_pad)),
    )(x2d, w.astype(jnp.bfloat16), b.reshape(1, n_pad).astype(jnp.float32))
    return out[:, :N]


# --------------------------------- model glue ---------------------------------

def encoder_layer(src, p, n_heads, src_key_bias):
    src = attention_block(src, src, src_key_bias, p['self_attn'],
                          p['ln1_g'], p['ln1_b'], n_heads, causal=False)
    src = ffn_ln_block(src, p, p['ln2_g'], p['ln2_b'])
    return src


def decoder_layer(tgt, memory, p, n_heads, tgt_key_bias, mem_key_bias):
    tgt = attention_block(tgt, tgt, tgt_key_bias, p['self_attn'],
                          p['ln1_g'], p['ln1_b'], n_heads, causal=True)
    tgt = attention_block(tgt, memory, mem_key_bias, p['cross_attn'],
                          p['ln2_g'], p['ln2_b'], n_heads, causal=False)
    tgt = ffn_ln_block(tgt, p, p['ln3_g'], p['ln3_b'])
    return tgt


def positional_encoding_table(max_len, d_model):
    pos = jnp.arange(max_len, dtype=jnp.float32)[:, None]
    div = jnp.exp(jnp.arange(0, d_model, 2, dtype=jnp.float32)
                  * (-math.log(10000.0) / d_model))
    pe = jnp.zeros((max_len, d_model), dtype=jnp.float32)
    pe = pe.at[:, 0::2].set(jnp.sin(pos * div))
    pe = pe.at[:, 1::2].set(jnp.cos(pos * div))
    return pe


def seq2seq_forward(params, src, tgt, cfg):
    B, Ls = src.shape
    Lt = tgt.shape[1]
    D, H = cfg['d_model'], cfg['n_heads']
    emb_scale = math.sqrt(D)

    # Small per-sequence additive key-padding biases (masking happens inside kernels).
    src_kb = jnp.where(src == PAD_IDX, NEG_INF, 0.0).astype(jnp.float32)[:, None, :]
    tgt_kb = jnp.where(tgt == PAD_IDX, NEG_INF, 0.0).astype(jnp.float32)[:, None, :]

    pe = positional_encoding_table(cfg['max_len'], D)

    # Encoder — embedding gather, scale and positional add are glue (XLA fuses with
    # the gather); activations are carried in bf16 between Pallas calls.
    x = (jnp.take(params['enc_emb'], src, axis=0) * emb_scale
         + pe[:Ls][None]).astype(jnp.bfloat16)                            # [B, Ls, D]
    for lp in params['enc_layers']:
        x = encoder_layer(x, lp, H, src_kb)
    memory = x

    # Decoder
    y = (jnp.take(params['dec_emb'], tgt, axis=0) * emb_scale
         + pe[:Lt][None]).astype(jnp.bfloat16)                            # [B, Lt, D]
    for lp in params['dec_layers']:
        y = decoder_layer(y, memory, lp, H, tgt_kb, src_kb)

    # fc_out (lane-dense padded output, N-tiled)
    logits = linear_proj(y.reshape(B * Lt, D), params['fc_w'], params['fc_b'])
    return logits.reshape(B, Lt, cfg['out_vocab'])


# ----------------------------- parameter creation ------------------------------

def _init_linear(key, d_in, d_out):
    k1, k2 = jax.random.split(key)
    lim = 1.0 / math.sqrt(d_in)
    w = jax.random.uniform(k1, (d_in, d_out), jnp.float32, -lim, lim)
    b = jax.random.uniform(k2, (d_out,), jnp.float32, -lim, lim)
    return w, b


def _init_mha(key, d_model):
    ks = jax.random.split(key, 4)
    wq, bq = _init_linear(ks[0], d_model, d_model)
    wk, bk = _init_linear(ks[1], d_model, d_model)
    wv, bv = _init_linear(ks[2], d_model, d_model)
    wo, bo = _init_linear(ks[3], d_model, d_model)
    return dict(wq=wq, bq=bq, wk=wk, bk=bk, wv=wv, bv=bv, wo=wo, bo=bo)


def _init_enc_layer(key, d_model, d_ff):
    ks = jax.random.split(key, 3)
    w1, b1 = _init_linear(ks[1], d_model, d_ff)
    w2, b2 = _init_linear(ks[2], d_ff, d_model)
    return dict(self_attn=_init_mha(ks[0], d_model),
                w1=w1, b1=b1, w2=w2, b2=b2,
                ln1_g=jnp.ones((d_model,), jnp.float32),
                ln1_b=jnp.zeros((d_model,), jnp.float32),
                ln2_g=jnp.ones((d_model,), jnp.float32),
                ln2_b=jnp.zeros((d_model,), jnp.float32))


def _init_dec_layer(key, d_model, d_ff):
    ks = jax.random.split(key, 4)
    w1, b1 = _init_linear(ks[2], d_model, d_ff)
    w2, b2 = _init_linear(ks[3], d_ff, d_model)
    return dict(self_attn=_init_mha(ks[0], d_model),
                cross_attn=_init_mha(ks[1], d_model),
                w1=w1, b1=b1, w2=w2, b2=b2,
                ln1_g=jnp.ones((d_model,), jnp.float32),
                ln1_b=jnp.zeros((d_model,), jnp.float32),
                ln2_g=jnp.ones((d_model,), jnp.float32),
                ln2_b=jnp.zeros((d_model,), jnp.float32),
                ln3_g=jnp.ones((d_model,), jnp.float32),
                ln3_b=jnp.zeros((d_model,), jnp.float32))


def init_params(key, cfg):
    ks = jax.random.split(key, 5)
    enc_keys = jax.random.split(ks[2], cfg['n_enc'])
    dec_keys = jax.random.split(ks[3], cfg['n_dec'])
    fc_w, fc_b = _init_linear(ks[4], cfg['d_model'], cfg['out_vocab'])
    return dict(
        enc_emb=jax.random.normal(ks[0], (cfg['in_vocab'], cfg['d_model']), jnp.float32),
        dec_emb=jax.random.normal(ks[1], (cfg['out_vocab'], cfg['d_model']), jnp.float32),
        enc_layers=[_init_enc_layer(k, cfg['d_model'], cfg['d_ff']) for k in enc_keys],
        dec_layers=[_init_dec_layer(k, cfg['d_model'], cfg['d_ff']) for k in dec_keys],
        fc_w=fc_w, fc_b=fc_b,
    )


# ------------------------------------ main -------------------------------------

if __name__ == "__main__":
    cfg = dict(n_enc=2, n_dec=2, d_model=32, n_heads=4,
               in_vocab=50, out_vocab=60, d_ff=64, max_len=64)

    key = jax.random.PRNGKey(0)
    kp, ks, kt = jax.random.split(key, 3)
    params = init_params(kp, cfg)

    B, Ls, Lt = 2, 8, 8
    src = jax.random.randint(ks, (B, Ls), 1, cfg['in_vocab'], dtype=jnp.int32)
    tgt = jax.random.randint(kt, (B, Lt), 1, cfg['out_vocab'], dtype=jnp.int32)
    # exercise the key-padding-mask path on one src position
    src = src.at[0, Ls - 1].set(PAD_IDX)

    forward = jax.jit(lambda p, s, t: seq2seq_forward(p, s, t, cfg))
    out = forward(params, src, tgt)                 # [B, Lt, out_vocab]
    out = jax.block_until_ready(out)
    assert out.shape == (B, Lt, cfg['out_vocab'])
    assert bool(jnp.all(jnp.isfinite(out)))
    print("KERNEL_OK")
</pallas_src>

<mosaic_0001>
module attributes {stable_mosaic.version = 11 : i64} {
  func.func @attn_block_kernel(%arg0: i32, %arg1: i32, %arg2: memref<1x8x32xbf16, #tpu.memory_space<vmem>>, %arg3: memref<1x8x32xbf16, #tpu.memory_space<vmem>>, %arg4: memref<1x1x8xf32, #tpu.memory_space<vmem>>, %arg5: memref<32x32xbf16, #tpu.memory_space<vmem>>, %arg6: memref<1x32xf32, #tpu.memory_space<vmem>>, %arg7: memref<32x32xbf16, #tpu.memory_space<vmem>>, %arg8: memref<1x32xf32, #tpu.memory_space<vmem>>, %arg9: memref<32x32xbf16, #tpu.memory_space<vmem>>, %arg10: memref<1x32xf32, #tpu.memory_space<vmem>>, %arg11: memref<32x32xbf16, #tpu.memory_space<vmem>>, %arg12: memref<1x32xf32, #tpu.memory_space<vmem>>, %arg13: memref<1x32xf32, #tpu.memory_space<vmem>>, %arg14: memref<1x32xf32, #tpu.memory_space<vmem>>, %arg15: memref<1x8x32xbf16, #tpu.memory_space<vmem>>) attributes {dimension_semantics = [#tpu.dimension_semantics<parallel>, #tpu.dimension_semantics<parallel>], iteration_bounds = array<i64: 2, 1>, scalar_prefetch = 0 : i64, scratch_operands = 0 : i64, tpu.core_type = #tpu.core_type<tc>, window_params = [{transform_indices = @transform_0, window_bounds = array<i64: 1, 8, 32>}, {transform_indices = @transform_1, window_bounds = array<i64: 1, 8, 32>}, {transform_indices = @transform_2, window_bounds = array<i64: 1, 1, 8>}, {pipeline_mode = #tpu.pipeline_mode<synchronous>, transform_indices = @transform_3, window_bounds = array<i64: 32, 32>}, {pipeline_mode = #tpu.pipeline_mode<synchronous>, transform_indices = @transform_4, window_bounds = array<i64: 1, 32>}, {pipeline_mode = #tpu.pipeline_mode<synchronous>, transform_indices = @transform_5, window_bounds = array<i64: 32, 32>}, {pipeline_mode = #tpu.pipeline_mode<synchronous>, transform_indices = @transform_6, window_bounds = array<i64: 1, 32>}, {pipeline_mode = #tpu.pipeline_mode<synchronous>, transform_indices = @transform_7, window_bounds = array<i64: 32, 32>}, {pipeline_mode = #tpu.pipeline_mode<synchronous>, transform_indices = @transform_8, window_bounds = array<i64: 1, 32>}, {pipeline_mode = #tpu.pipeline_mode<synchronous>, transform_indices = @transform_9, window_bounds = array<i64: 32, 32>}, {pipeline_mode = #tpu.pipeline_mode<synchronous>, transform_indices = @transform_10, window_bounds = array<i64: 1, 32>}, {pipeline_mode = #tpu.pipeline_mode<synchronous>, transform_indices = @transform_11, window_bounds = array<i64: 1, 32>}, {pipeline_mode = #tpu.pipeline_mode<synchronous>, transform_indices = @transform_12, window_bounds = array<i64: 1, 32>}, {transform_indices = @transform_13, window_bounds = array<i64: 1, 8, 32>}]} {
    %c0 = arith.constant 0 : index
    %c0_0 = arith.constant 0 : index
    %c0_1 = arith.constant 0 : index
    %0 = vector.load %arg2[%c0, %c0_0, %c0_1] : memref<1x8x32xbf16, #tpu.memory_space<vmem>>, vector<1x8x32xbf16>
    %1 = vector.shape_cast %0 : vector<1x8x32xbf16> to vector<8x32xbf16>
    %c0_2 = arith.constant 0 : index
    %c0_3 = arith.constant 0 : index
    %c0_4 = arith.constant 0 : index
    %2 = vector.load %arg3[%c0_2, %c0_3, %c0_4] : memref<1x8x32xbf16, #tpu.memory_space<vmem>>, vector<1x8x32xbf16>
    %3 = vector.shape_cast %2 : vector<1x8x32xbf16> to vector<8x32xbf16>
    %c0_5 = arith.constant 0 : index
    %c0_6 = arith.constant 0 : index
    %c0_7 = arith.constant 0 : index
    %4 = vector.load %arg4[%c0_5, %c0_6, %c0_7] : memref<1x1x8xf32, #tpu.memory_space<vmem>>, vector<1x1x8xf32>
    %5 = vector.shape_cast %4 : vector<1x1x8xf32> to vector<1x8xf32>
    %c0_8 = arith.constant 0 : index
    %c0_9 = arith.constant 0 : index
    %6 = vector.load %arg5[%c0_8, %c0_9] : memref<32x32xbf16, #tpu.memory_space<vmem>>, vector<32x32xbf16>
    %cst = arith.constant dense<0.000000e+00> : vector<8x32xf32>
    %7 = tpu.matmul %1, %6, %cst {dimension_numbers = #tpu.dot_dimension_numbers<[1], [0], [0], [1], [0, 0, 1, 1], [], []>} : vector<8x32xbf16>, vector<32x32xbf16>, vector<8x32xf32> -> vector<8x32xf32>
    %c0_10 = arith.constant 0 : index
    %c0_11 = arith.constant 0 : index
    %8 = vector.load %arg6[%c0_10, %c0_11] : memref<1x32xf32, #tpu.memory_space<vmem>>, vector<1x32xf32>
    %9 = vector.broadcast %8 : vector<1x32xf32> to vector<8x32xf32>
    %10 = arith.addf %7, %9 : vector<8x32xf32>
    %c0_12 = arith.constant 0 : index
    %c0_13 = arith.constant 0 : index
    %11 = vector.load %arg7[%c0_12, %c0_13] : memref<32x32xbf16, #tpu.memory_space<vmem>>, vector<32x32xbf16>
    %cst_14 = arith.constant dense<0.000000e+00> : vector<8x32xf32>
    %12 = tpu.matmul %3, %11, %cst_14 {dimension_numbers = #tpu.dot_dimension_numbers<[1], [0], [0], [1], [0, 0, 1, 1], [], []>} : vector<8x32xbf16>, vector<32x32xbf16>, vector<8x32xf32> -> vector<8x32xf32>
    %c0_15 = arith.constant 0 : index
    %c0_16 = arith.constant 0 : index
    %13 = vector.load %arg8[%c0_15, %c0_16] : memref<1x32xf32, #tpu.memory_space<vmem>>, vector<1x32xf32>
    %14 = vector.broadcast %13 : vector<1x32xf32> to vector<8x32xf32>
    %15 = arith.addf %12, %14 : vector<8x32xf32>
    %c0_17 = arith.constant 0 : index
    %c0_18 = arith.constant 0 : index
    %16 = vector.load %arg9[%c0_17, %c0_18] : memref<32x32xbf16, #tpu.memory_space<vmem>>, vector<32x32xbf16>
    %cst_19 = arith.constant dense<0.000000e+00> : vector<8x32xf32>
    %17 = tpu.matmul %3, %16, %cst_19 {dimension_numbers = #tpu.dot_dimension_numbers<[1], [0], [0], [1], [0, 0, 1, 1], [], []>} : vector<8x32xbf16>, vector<32x32xbf16>, vector<8x32xf32> -> vector<8x32xf32>
    %c0_20 = arith.constant 0 : index
    %c0_21 = arith.constant 0 : index
    %18 = vector.load %arg10[%c0_20, %c0_21] : memref<1x32xf32, #tpu.memory_space<vmem>>, vector<1x32xf32>
    %19 = vector.broadcast %18 : vector<1x32xf32> to vector<8x32xf32>
    %20 = arith.addf %17, %19 : vector<8x32xf32>
    %21 = vector.shape_cast %10 : vector<8x32xf32> to vector<8x4x8xf32>
    %22 = tpu.transpose %21, [1, 0, 2] : vector<8x4x8xf32> -> vector<4x8x8xf32>
    %23 = arith.truncf %22 : vector<4x8x8xf32> to vector<4x8x8xbf16>
    %24 = vector.shape_cast %15 : vector<8x32xf32> to vector<8x4x8xf32>
    %25 = tpu.transpose %24, [1, 0, 2] : vector<8x4x8xf32> -> vector<4x8x8xf32>
    %26 = arith.truncf %25 : vector<4x8x8xf32> to vector<4x8x8xbf16>
    %27 = vector.shape_cast %20 : vector<8x32xf32> to vector<8x4x8xf32>
    %28 = tpu.transpose %27, [1, 0, 2] : vector<8x4x8xf32> -> vector<4x8x8xf32>
    %29 = arith.truncf %28 : vector<4x8x8xf32> to vector<4x8x8xbf16>
    "tpu.trace_start"() <{level = 10 : i32, message = "hqd,hkd->hqk"}> : () -> ()
    %cst_22 = arith.constant dense<0.000000e+00> : vector<4x8x8xf32>
    %30 = tpu.matmul %23, %26, %cst_22 {dimension_numbers = #tpu.dot_dimension_numbers<[2], [2], [1], [1], [0, 0, 0, 1, 1, 1], [0], [0]>} : vector<4x8x8xbf16>, vector<4x8x8xbf16>, vector<4x8x8xf32> -> vector<4x8x8xf32>
    "tpu.trace_stop"() : () -> ()
    %31 = vector.shape_cast %5 : vector<1x8xf32> to vector<1x1x8xf32>
    %32 = vector.broadcast %31 : vector<1x1x8xf32> to vector<4x8x8xf32>
    %33 = arith.addf %30, %32 : vector<4x8x8xf32>
    %cst_23 = arith.constant dense<0xFF800000> : vector<4x8xf32>
    %34 = vector.multi_reduction <maximumf>, %33, %cst_23 [2] : vector<4x8x8xf32> to vector<4x8xf32>
    %35 = vector.shape_cast %34 : vector<4x8xf32> to vector<4x8x1xf32>
    %36 = vector.broadcast %35 : vector<4x8x1xf32> to vector<4x8x8xf32>
    %37 = arith.subf %33, %36 : vector<4x8x8xf32>
    %38 = math.exp %37 : vector<4x8x8xf32>
    %cst_24 = arith.constant dense<0.000000e+00> : vector<4x8xf32>
    %39 = vector.multi_reduction <add>, %38, %cst_24 [2] : vector<4x8x8xf32> to vector<4x8xf32>
    %40 = vector.shape_cast %39 : vector<4x8xf32> to vector<4x8x1xf32>
    %41 = tpu.reciprocal %40 {approx = true} : vector<4x8x1xf32> -> vector<4x8x1xf32>
    %42 = vector.broadcast %41 : vector<4x8x1xf32> to vector<4x8x8xf32>
    %43 = arith.mulf %38, %42 : vector<4x8x8xf32>
    %44 = arith.truncf %43 : vector<4x8x8xf32> to vector<4x8x8xbf16>
    "tpu.trace_start"() <{level = 10 : i32, message = "hqk,hkd->hqd"}> : () -> ()
    %cst_25 = arith.constant dense<0.000000e+00> : vector<4x8x8xf32>
    %45 = tpu.matmul %44, %29, %cst_25 {dimension_numbers = #tpu.dot_dimension_numbers<[2], [1], [1], [2], [0, 0, 0, 1, 1, 2], [0], [0]>} : vector<4x8x8xbf16>, vector<4x8x8xbf16>, vector<4x8x8xf32> -> vector<4x8x8xf32>
    "tpu.trace_stop"() : () -> ()
    %46 = tpu.transpose %45, [1, 0, 2] : vector<4x8x8xf32> -> vector<8x4x8xf32>
    %47 = vector.shape_cast %46 : vector<8x4x8xf32> to vector<8x32xf32>
    %48 = arith.truncf %47 : vector<8x32xf32> to vector<8x32xbf16>
    %c0_26 = arith.constant 0 : index
    %c0_27 = arith.constant 0 : index
    %49 = vector.load %arg11[%c0_26, %c0_27] : memref<32x32xbf16, #tpu.memory_space<vmem>>, vector<32x32xbf16>
    %cst_28 = arith.constant dense<0.000000e+00> : vector<8x32xf32>
    %50 = tpu.matmul %48, %49, %cst_28 {dimension_numbers = #tpu.dot_dimension_numbers<[1], [0], [0], [1], [0, 0, 1, 1], [], []>} : vector<8x32xbf16>, vector<32x32xbf16>, vector<8x32xf32> -> vector<8x32xf32>
    %c0_29 = arith.constant 0 : index
    %c0_30 = arith.constant 0 : index
    %51 = vector.load %arg12[%c0_29, %c0_30] : memref<1x32xf32, #tpu.memory_space<vmem>>, vector<1x32xf32>
    %52 = vector.broadcast %51 : vector<1x32xf32> to vector<8x32xf32>
    %53 = arith.addf %50, %52 : vector<8x32xf32>
    %54 = arith.extf %1 : vector<8x32xbf16> to vector<8x32xf32>
    %55 = arith.addf %54, %53 : vector<8x32xf32>
    %cst_31 = arith.constant dense<0.000000e+00> : vector<8xf32>
    %56 = vector.multi_reduction <add>, %55, %cst_31 [1] : vector<8x32xf32> to vector<8xf32>
    %57 = vector.shape_cast %56 : vector<8xf32> to vector<8x1xf32>
    %cst_32 = arith.constant 3.200000e+01 : f32
    %58 = vector.broadcast %cst_32 : f32 to vector<8x1xf32>
    %59 = arith.divf %57, %58 : vector<8x1xf32>
    %60 = vector.broadcast %59 : vector<8x1xf32> to vector<8x32xf32>
    %61 = arith.subf %55, %60 : vector<8x32xf32>
    %62 = arith.mulf %61, %61 : vector<8x32xf32>
    %cst_33 = arith.constant dense<0.000000e+00> : vector<8xf32>
    %63 = vector.multi_reduction <add>, %62, %cst_33 [1] : vector<8x32xf32> to vector<8xf32>
    %64 = vector.shape_cast %63 : vector<8xf32> to vector<8x1xf32>
    %cst_34 = arith.constant 3.200000e+01 : f32
    %65 = vector.broadcast %cst_34 : f32 to vector<8x1xf32>
    %66 = arith.divf %64, %65 : vector<8x1xf32>
    %67 = vector.broadcast %59 : vector<8x1xf32> to vector<8x32xf32>
    %68 = arith.subf %55, %67 : vector<8x32xf32>
    %cst_35 = arith.constant 9.99999974E-6 : f32
    %69 = vector.broadcast %cst_35 : f32 to vector<8x1xf32>
    %70 = arith.addf %66, %69 : vector<8x1xf32>
    %71 = math.rsqrt %70 : vector<8x1xf32>
    %72 = vector.broadcast %71 : vector<8x1xf32> to vector<8x32xf32>
    %73 = arith.mulf %68, %72 : vector<8x32xf32>
    %c0_36 = arith.constant 0 : index
    %c0_37 = arith.constant 0 : index
    %74 = vector.load %arg13[%c0_36, %c0_37] : memref<1x32xf32, #tpu.memory_space<vmem>>, vector<1x32xf32>
    %75 = vector.broadcast %74 : vector<1x32xf32> to vector<8x32xf32>
    %76 = arith.mulf %73, %75 : vector<8x32xf32>
    %c0_38 = arith.constant 0 : index
    %c0_39 = arith.constant 0 : index
    %77 = vector.load %arg14[%c0_38, %c0_39] : memref<1x32xf32, #tpu.memory_space<vmem>>, vector<1x32xf32>
    %78 = vector.broadcast %77 : vector<1x32xf32> to vector<8x32xf32>
    %79 = arith.addf %76, %78 : vector<8x32xf32>
    %80 = arith.truncf %79 : vector<8x32xf32> to vector<8x32xbf16>
    %c0_40 = arith.constant 0 : index
    %c0_41 = arith.constant 0 : index
    %c0_42 = arith.constant 0 : index
    %81 = vector.load %arg15[%c0_40, %c0_41, %c0_42] : memref<1x8x32xbf16, #tpu.memory_space<vmem>>, vector<1x8x32xbf16>
    %82 = vector.shape_cast %81 : vector<1x8x32xbf16> to vector<8x32xbf16>
    %83 = vector.shape_cast %80 : vector<8x32xbf16> to vector<1x8x32xbf16>
    tpu.vector_store %arg15[%c0_40, %c0_41, %c0_42], %83 {strides = array<i32>} : memref<1x8x32xbf16, #tpu.memory_space<vmem>>, vector<1x8x32xbf16>,
    return
  }
  func.func @transform_0(%arg0: i32, %arg1: i32) -> (i32, i32, i32) {
    %c0_i32 = arith.constant 0 : i32
    %c0_i32_0 = arith.constant 0 : i32
    return %arg0, %arg1, %c0_i32 : i32, i32, i32
  }
  func.func @transform_1(%arg0: i32, %arg1: i32) -> (i32, i32, i32) {
    %c0_i32 = arith.constant 0 : i32
    %c0_i32_0 = arith.constant 0 : i32
    %c0_i32_1 = arith.constant 0 : i32
    return %arg0, %c0_i32, %c0_i32_0 : i32, i32, i32
  }
  func.func @transform_2(%arg0: i32, %arg1: i32) -> (i32, i32, i32) {
    %c0_i32 = arith.constant 0 : i32
    %c0_i32_0 = arith.constant 0 : i32
    %c0_i32_1 = arith.constant 0 : i32
    return %arg0, %c0_i32, %c0_i32_0 : i32, i32, i32
  }
  func.func @transform_3(%arg0: i32, %arg1: i32) -> (i32, i32) {
    %c0_i32 = arith.constant 0 : i32
    %c0_i32_0 = arith.constant 0 : i32
    %c0_i32_1 = arith.constant 0 : i32
    return %c0_i32, %c0_i32_0 : i32, i32
  }
  func.func @transform_4(%arg0: i32, %arg1: i32) -> (i32, i32) {
    %c0_i32 = arith.constant 0 : i32
    %c0_i32_0 = arith.constant 0 : i32
    %c0_i32_1 = arith.constant 0 : i32
    return %c0_i32, %c0_i32_0 : i32, i32
  }
  func.func @transform_5(%arg0: i32, %arg1: i32) -> (i32, i32) {
    %c0_i32 = arith.constant 0 : i32
    %c0_i32_0 = arith.constant 0 : i32
    %c0_i32_1 = arith.constant 0 : i32
    return %c0_i32, %c0_i32_0 : i32, i32
  }
  func.func @transform_6(%arg0: i32, %arg1: i32) -> (i32, i32) {
    %c0_i32 = arith.constant 0 : i32
    %c0_i32_0 = arith.constant 0 : i32
    %c0_i32_1 = arith.constant 0 : i32
    return %c0_i32, %c0_i32_0 : i32, i32
  }
  func.func @transform_7(%arg0: i32, %arg1: i32) -> (i32, i32) {
    %c0_i32 = arith.constant 0 : i32
    %c0_i32_0 = arith.constant 0 : i32
    %c0_i32_1 = arith.constant 0 : i32
    return %c0_i32, %c0_i32_0 : i32, i32
  }
  func.func @transform_8(%arg0: i32, %arg1: i32) -> (i32, i32) {
    %c0_i32 = arith.constant 0 : i32
    %c0_i32_0 = arith.constant 0 : i32
    %c0_i32_1 = arith.constant 0 : i32
    return %c0_i32, %c0_i32_0 : i32, i32
  }
  func.func @transform_9(%arg0: i32, %arg1: i32) -> (i32, i32) {
    %c0_i32 = arith.constant 0 : i32
    %c0_i32_0 = arith.constant 0 : i32
    %c0_i32_1 = arith.constant 0 : i32
    return %c0_i32, %c0_i32_0 : i32, i32
  }
  func.func @transform_10(%arg0: i32, %arg1: i32) -> (i32, i32) {
    %c0_i32 = arith.constant 0 : i32
    %c0_i32_0 = arith.constant 0 : i32
    %c0_i32_1 = arith.constant 0 : i32
    return %c0_i32, %c0_i32_0 : i32, i32
  }
  func.func @transform_11(%arg0: i32, %arg1: i32) -> (i32, i32) {
    %c0_i32 = arith.constant 0 : i32
    %c0_i32_0 = arith.constant 0 : i32
    %c0_i32_1 = arith.constant 0 : i32
    return %c0_i32, %c0_i32_0 : i32, i32
  }
  func.func @transform_12(%arg0: i32, %arg1: i32) -> (i32, i32) {
    %c0_i32 = arith.constant 0 : i32
    %c0_i32_0 = arith.constant 0 : i32
    %c0_i32_1 = arith.constant 0 : i32
    return %c0_i32, %c0_i32_0 : i32, i32
  }
  func.func @transform_13(%arg0: i32, %arg1: i32) -> (i32, i32, i32) {
    %c0_i32 = arith.constant 0 : i32
    %c0_i32_0 = arith.constant 0 : i32
    return %arg0, %arg1, %c0_i32 : i32, i32, i32
  }
}

module attributes {stable_mosaic.version = 11 : i64} {
  func.func @ffn_block_kernel(%arg0: i32, %arg1: memref<16x32xbf16, #tpu.memory_space<vmem>>, %arg2: memref<32x64xbf16, #tpu.memory_space<vmem>>, %arg3: memref<1x64xf32, #tpu.memory_space<vmem>>, %arg4: memref<64x32xbf16, #tpu.memory_space<vmem>>, %arg5: memref<1x32xf32, #tpu.memory_space<vmem>>, %arg6: memref<1x32xf32, #tpu.memory_space<vmem>>, %arg7: memref<1x32xf32, #tpu.memory_space<vmem>>, %arg8: memref<16x32xbf16, #tpu.memory_space<vmem>>) attributes {dimension_semantics = [#tpu.dimension_semantics<parallel>], iteration_bounds = array<i64: 1>, scalar_prefetch = 0 : i64, scratch_operands = 0 : i64, tpu.core_type = #tpu.core_type<tc>, window_params = [{transform_indices = @transform_0, window_bounds = array<i64: 16, 32>}, {pipeline_mode = #tpu.pipeline_mode<synchronous>, transform_indices = @transform_1, window_bounds = array<i64: 32, 64>}, {pipeline_mode = #tpu.pipeline_mode<synchronous>, transform_indices = @transform_2, window_bounds = array<i64: 1, 64>}, {pipeline_mode = #tpu.pipeline_mode<synchronous>, transform_indices = @transform_3, window_bounds = array<i64: 64, 32>}, {pipeline_mode = #tpu.pipeline_mode<synchronous>, transform_indices = @transform_4, window_bounds = array<i64: 1, 32>}, {pipeline_mode = #tpu.pipeline_mode<synchronous>, transform_indices = @transform_5, window_bounds = array<i64: 1, 32>}, {pipeline_mode = #tpu.pipeline_mode<synchronous>, transform_indices = @transform_6, window_bounds = array<i64: 1, 32>}, {transform_indices = @transform_7, window_bounds = array<i64: 16, 32>}]} {
    %c0 = arith.constant 0 : index
    %c0_0 = arith.constant 0 : index
    %0 = vector.load %arg1[%c0, %c0_0] : memref<16x32xbf16, #tpu.memory_space<vmem>>, vector<16x32xbf16>
    %c0_1 = arith.constant 0 : index
    %c0_2 = arith.constant 0 : index
    %1 = vector.load %arg2[%c0_1, %c0_2] : memref<32x64xbf16, #tpu.memory_space<vmem>>, vector<32x64xbf16>
    %cst = arith.constant dense<0.000000e+00> : vector<16x64xf32>
    %2 = tpu.matmul %0, %1, %cst {dimension_numbers = #tpu.dot_dimension_numbers<[1], [0], [0], [1], [0, 0, 1, 1], [], []>} : vector<16x32xbf16>, vector<32x64xbf16>, vector<16x64xf32> -> vector<16x64xf32>
    %c0_3 = arith.constant 0 : index
    %c0_4 = arith.constant 0 : index
    %3 = vector.load %arg3[%c0_3, %c0_4] : memref<1x64xf32, #tpu.memory_space<vmem>>, vector<1x64xf32>
    %4 = vector.broadcast %3 : vector<1x64xf32> to vector<16x64xf32>
    %5 = arith.addf %2, %4 : vector<16x64xf32>
    %cst_5 = arith.constant 0.000000e+00 : f32
    %6 = vector.broadcast %cst_5 : f32 to vector<16x64xf32>
    %7 = arith.maximumf %5, %6 : vector<16x64xf32>
    %8 = arith.truncf %7 : vector<16x64xf32> to vector<16x64xbf16>
    %c0_6 = arith.constant 0 : index
    %c0_7 = arith.constant 0 : index
    %9 = vector.load %arg4[%c0_6, %c0_7] : memref<64x32xbf16, #tpu.memory_space<vmem>>, vector<64x32xbf16>
    %cst_8 = arith.constant dense<0.000000e+00> : vector<16x32xf32>
    %10 = tpu.matmul %8, %9, %cst_8 {dimension_numbers = #tpu.dot_dimension_numbers<[1], [0], [0], [1], [0, 0, 1, 1], [], []>} : vector<16x64xbf16>, vector<64x32xbf16>, vector<16x32xf32> -> vector<16x32xf32>
    %c0_9 = arith.constant 0 : index
    %c0_10 = arith.constant 0 : index
    %11 = vector.load %arg5[%c0_9, %c0_10] : memref<1x32xf32, #tpu.memory_space<vmem>>, vector<1x32xf32>
    %12 = vector.broadcast %11 : vector<1x32xf32> to vector<16x32xf32>
    %13 = arith.addf %10, %12 : vector<16x32xf32>
    %14 = arith.extf %0 : vector<16x32xbf16> to vector<16x32xf32>
    %15 = arith.addf %14, %13 : vector<16x32xf32>
    %cst_11 = arith.constant dense<0.000000e+00> : vector<16xf32>
    %16 = vector.multi_reduction <add>, %15, %cst_11 [1] : vector<16x32xf32> to vector<16xf32>
    %17 = vector.shape_cast %16 : vector<16xf32> to vector<16x1xf32>
    %cst_12 = arith.constant 3.200000e+01 : f32
    %18 = vector.broadcast %cst_12 : f32 to vector<16x1xf32>
    %19 = arith.divf %17, %18 : vector<16x1xf32>
    %20 = vector.broadcast %19 : vector<16x1xf32> to vector<16x32xf32>
    %21 = arith.subf %15, %20 : vector<16x32xf32>
    %22 = arith.mulf %21, %21 : vector<16x32xf32>
    %cst_13 = arith.constant dense<0.000000e+00> : vector<16xf32>
    %23 = vector.multi_reduction <add>, %22, %cst_13 [1] : vector<16x32xf32> to vector<16xf32>
    %24 = vector.shape_cast %23 : vector<16xf32> to vector<16x1xf32>
    %cst_14 = arith.constant 3.200000e+01 : f32
    %25 = vector.broadcast %cst_14 : f32 to vector<16x1xf32>
    %26 = arith.divf %24, %25 : vector<16x1xf32>
    %27 = vector.broadcast %19 : vector<16x1xf32> to vector<16x32xf32>
    %28 = arith.subf %15, %27 : vector<16x32xf32>
    %cst_15 = arith.constant 9.99999974E-6 : f32
    %29 = vector.broadcast %cst_15 : f32 to vector<16x1xf32>
    %30 = arith.addf %26, %29 : vector<16x1xf32>
    %31 = math.rsqrt %30 : vector<16x1xf32>
    %32 = vector.broadcast %31 : vector<16x1xf32> to vector<16x32xf32>
    %33 = arith.mulf %28, %32 : vector<16x32xf32>
    %c0_16 = arith.constant 0 : index
    %c0_17 = arith.constant 0 : index
    %34 = vector.load %arg6[%c0_16, %c0_17] : memref<1x32xf32, #tpu.memory_space<vmem>>, vector<1x32xf32>
    %35 = vector.broadcast %34 : vector<1x32xf32> to vector<16x32xf32>
    %36 = arith.mulf %33, %35 : vector<16x32xf32>
    %c0_18 = arith.constant 0 : index
    %c0_19 = arith.constant 0 : index
    %37 = vector.load %arg7[%c0_18, %c0_19] : memref<1x32xf32, #tpu.memory_space<vmem>>, vector<1x32xf32>
    %38 = vector.broadcast %37 : vector<1x32xf32> to vector<16x32xf32>
    %39 = arith.addf %36, %38 : vector<16x32xf32>
    %40 = arith.truncf %39 : vector<16x32xf32> to vector<16x32xbf16>
    %c0_20 = arith.constant 0 : index
    %c0_21 = arith.constant 0 : index
    %41 = vector.load %arg8[%c0_20, %c0_21] : memref<16x32xbf16, #tpu.memory_space<vmem>>, vector<16x32xbf16>
    tpu.vector_store %arg8[%c0_20, %c0_21], %40 {strides = array<i32>} : memref<16x32xbf16, #tpu.memory_space<vmem>>, vector<16x32xbf16>,
    return
  }
  func.func @transform_0(%arg0: i32) -> (i32, i32) {
    %c0_i32 = arith.constant 0 : i32
    %c0_i32_0 = arith.constant 0 : i32
    return %arg0, %c0_i32 : i32, i32
  }
  func.func @transform_1(%arg0: i32) -> (i32, i32) {
    %c0_i32 = arith.constant 0 : i32
    %c0_i32_0 = arith.constant 0 : i32
    %c0_i32_1 = arith.constant 0 : i32
    return %c0_i32, %c0_i32_0 : i32, i32
  }
  func.func @transform_2(%arg0: i32) -> (i32, i32) {
    %c0_i32 = arith.constant 0 : i32
    %c0_i32_0 = arith.constant 0 : i32
    %c0_i32_1 = arith.constant 0 : i32
    return %c0_i32, %c0_i32_0 : i32, i32
  }
  func.func @transform_3(%arg0: i32) -> (i32, i32) {
    %c0_i32 = arith.constant 0 : i32
    %c0_i32_0 = arith.constant 0 : i32
    %c0_i32_1 = arith.constant 0 : i32
    return %c0_i32, %c0_i32_0 : i32, i32
  }
  func.func @transform_4(%arg0: i32) -> (i32, i32) {
    %c0_i32 = arith.constant 0 : i32
    %c0_i32_0 = arith.constant 0 : i32
    %c0_i32_1 = arith.constant 0 : i32
    return %c0_i32, %c0_i32_0 : i32, i32
  }
  func.func @transform_5(%arg0: i32) -> (i32, i32) {
    %c0_i32 = arith.constant 0 : i32
    %c0_i32_0 = arith.constant 0 : i32
    %c0_i32_1 = arith.constant 0 : i32
    return %c0_i32, %c0_i32_0 : i32, i32
  }
  func.func @transform_6(%arg0: i32) -> (i32, i32) {
    %c0_i32 = arith.constant 0 : i32
    %c0_i32_0 = arith.constant 0 : i32
    %c0_i32_1 = arith.constant 0 : i32
    return %c0_i32, %c0_i32_0 : i32, i32
  }
  func.func @transform_7(%arg0: i32) -> (i32, i32) {
    %c0_i32 = arith.constant 0 : i32
    %c0_i32_0 = arith.constant 0 : i32
    return %arg0, %c0_i32 : i32, i32
  }
}

module attributes {stable_mosaic.version = 11 : i64} {
  func.func @attn_block_kernel(%arg0: i32, %arg1: i32, %arg2: memref<1x8x32xbf16, #tpu.memory_space<vmem>>, %arg3: memref<1x8x32xbf16, #tpu.memory_space<vmem>>, %arg4: memref<1x1x8xf32, #tpu.memory_space<vmem>>, %arg5: memref<32x32xbf16, #tpu.memory_space<vmem>>, %arg6: memref<1x32xf32, #tpu.memory_space<vmem>>, %arg7: memref<32x32xbf16, #tpu.memory_space<vmem>>, %arg8: memref<1x32xf32, #tpu.memory_space<vmem>>, %arg9: memref<32x32xbf16, #tpu.memory_space<vmem>>, %arg10: memref<1x32xf32, #tpu.memory_space<vmem>>, %arg11: memref<32x32xbf16, #tpu.memory_space<vmem>>, %arg12: memref<1x32xf32, #tpu.memory_space<vmem>>, %arg13: memref<1x32xf32, #tpu.memory_space<vmem>>, %arg14: memref<1x32xf32, #tpu.memory_space<vmem>>, %arg15: memref<1x8x32xbf16, #tpu.memory_space<vmem>>) attributes {dimension_semantics = [#tpu.dimension_semantics<parallel>, #tpu.dimension_semantics<parallel>], iteration_bounds = array<i64: 2, 1>, scalar_prefetch = 0 : i64, scratch_operands = 0 : i64, tpu.core_type = #tpu.core_type<tc>, window_params = [{transform_indices = @transform_0, window_bounds = array<i64: 1, 8, 32>}, {transform_indices = @transform_1, window_bounds = array<i64: 1, 8, 32>}, {transform_indices = @transform_2, window_bounds = array<i64: 1, 1, 8>}, {pipeline_mode = #tpu.pipeline_mode<synchronous>, transform_indices = @transform_3, window_bounds = array<i64: 32, 32>}, {pipeline_mode = #tpu.pipeline_mode<synchronous>, transform_indices = @transform_4, window_bounds = array<i64: 1, 32>}, {pipeline_mode = #tpu.pipeline_mode<synchronous>, transform_indices = @transform_5, window_bounds = array<i64: 32, 32>}, {pipeline_mode = #tpu.pipeline_mode<synchronous>, transform_indices = @transform_6, window_bounds = array<i64: 1, 32>}, {pipeline_mode = #tpu.pipeline_mode<synchronous>, transform_indices = @transform_7, window_bounds = array<i64: 32, 32>}, {pipeline_mode = #tpu.pipeline_mode<synchronous>, transform_indices = @transform_8, window_bounds = array<i64: 1, 32>}, {pipeline_mode = #tpu.pipeline_mode<synchronous>, transform_indices = @transform_9, window_bounds = array<i64: 32, 32>}, {pipeline_mode = #tpu.pipeline_mode<synchronous>, transform_indices = @transform_10, window_bounds = array<i64: 1, 32>}, {pipeline_mode = #tpu.pipeline_mode<synchronous>, transform_indices = @transform_11, window_bounds = array<i64: 1, 32>}, {pipeline_mode = #tpu.pipeline_mode<synchronous>, transform_indices = @transform_12, window_bounds = array<i64: 1, 32>}, {transform_indices = @transform_13, window_bounds = array<i64: 1, 8, 32>}]} {
    %c0 = arith.constant 0 : index
    %c0_0 = arith.constant 0 : index
    %c0_1 = arith.constant 0 : index
    %0 = vector.load %arg2[%c0, %c0_0, %c0_1] : memref<1x8x32xbf16, #tpu.memory_space<vmem>>, vector<1x8x32xbf16>
    %1 = vector.shape_cast %0 : vector<1x8x32xbf16> to vector<8x32xbf16>
    %c0_2 = arith.constant 0 : index
    %c0_3 = arith.constant 0 : index
    %c0_4 = arith.constant 0 : index
    %2 = vector.load %arg3[%c0_2, %c0_3, %c0_4] : memref<1x8x32xbf16, #tpu.memory_space<vmem>>, vector<1x8x32xbf16>
    %3 = vector.shape_cast %2 : vector<1x8x32xbf16> to vector<8x32xbf16>
    %c0_5 = arith.constant 0 : index
    %c0_6 = arith.constant 0 : index
    %c0_7 = arith.constant 0 : index
    %4 = vector.load %arg4[%c0_5, %c0_6, %c0_7] : memref<1x1x8xf32, #tpu.memory_space<vmem>>, vector<1x1x8xf32>
    %5 = vector.shape_cast %4 : vector<1x1x8xf32> to vector<1x8xf32>
    %c0_8 = arith.constant 0 : index
    %c0_9 = arith.constant 0 : index
    %6 = vector.load %arg5[%c0_8, %c0_9] : memref<32x32xbf16, #tpu.memory_space<vmem>>, vector<32x32xbf16>
    %cst = arith.constant dense<0.000000e+00> : vector<8x32xf32>
    %7 = tpu.matmul %1, %6, %cst {dimension_numbers = #tpu.dot_dimension_numbers<[1], [0], [0], [1], [0, 0, 1, 1], [], []>} : vector<8x32xbf16>, vector<32x32xbf16>, vector<8x32xf32> -> vector<8x32xf32>
    %c0_10 = arith.constant 0 : index
    %c0_11 = arith.constant 0 : index
    %8 = vector.load %arg6[%c0_10, %c0_11] : memref<1x32xf32, #tpu.memory_space<vmem>>, vector<1x32xf32>
    %9 = vector.broadcast %8 : vector<1x32xf32> to vector<8x32xf32>
    %10 = arith.addf %7, %9 : vector<8x32xf32>
    %c0_12 = arith.constant 0 : index
    %c0_13 = arith.constant 0 : index
    %11 = vector.load %arg7[%c0_12, %c0_13] : memref<32x32xbf16, #tpu.memory_space<vmem>>, vector<32x32xbf16>
    %cst_14 = arith.constant dense<0.000000e+00> : vector<8x32xf32>
    %12 = tpu.matmul %3, %11, %cst_14 {dimension_numbers = #tpu.dot_dimension_numbers<[1], [0], [0], [1], [0, 0, 1, 1], [], []>} : vector<8x32xbf16>, vector<32x32xbf16>, vector<8x32xf32> -> vector<8x32xf32>
    %c0_15 = arith.constant 0 : index
    %c0_16 = arith.constant 0 : index
    %13 = vector.load %arg8[%c0_15, %c0_16] : memref<1x32xf32, #tpu.memory_space<vmem>>, vector<1x32xf32>
    %14 = vector.broadcast %13 : vector<1x32xf32> to vector<8x32xf32>
    %15 = arith.addf %12, %14 : vector<8x32xf32>
    %c0_17 = arith.constant 0 : index
    %c0_18 = arith.constant 0 : index
    %16 = vector.load %arg9[%c0_17, %c0_18] : memref<32x32xbf16, #tpu.memory_space<vmem>>, vector<32x32xbf16>
    %cst_19 = arith.constant dense<0.000000e+00> : vector<8x32xf32>
    %17 = tpu.matmul %3, %16, %cst_19 {dimension_numbers = #tpu.dot_dimension_numbers<[1], [0], [0], [1], [0, 0, 1, 1], [], []>} : vector<8x32xbf16>, vector<32x32xbf16>, vector<8x32xf32> -> vector<8x32xf32>
    %c0_20 = arith.constant 0 : index
    %c0_21 = arith.constant 0 : index
    %18 = vector.load %arg10[%c0_20, %c0_21] : memref<1x32xf32, #tpu.memory_space<vmem>>, vector<1x32xf32>
    %19 = vector.broadcast %18 : vector<1x32xf32> to vector<8x32xf32>
    %20 = arith.addf %17, %19 : vector<8x32xf32>
    %21 = vector.shape_cast %10 : vector<8x32xf32> to vector<8x4x8xf32>
    %22 = tpu.transpose %21, [1, 0, 2] : vector<8x4x8xf32> -> vector<4x8x8xf32>
    %23 = arith.truncf %22 : vector<4x8x8xf32> to vector<4x8x8xbf16>
    %24 = vector.shape_cast %15 : vector<8x32xf32> to vector<8x4x8xf32>
    %25 = tpu.transpose %24, [1, 0, 2] : vector<8x4x8xf32> -> vector<4x8x8xf32>
    %26 = arith.truncf %25 : vector<4x8x8xf32> to vector<4x8x8xbf16>
    %27 = vector.shape_cast %20 : vector<8x32xf32> to vector<8x4x8xf32>
    %28 = tpu.transpose %27, [1, 0, 2] : vector<8x4x8xf32> -> vector<4x8x8xf32>
    %29 = arith.truncf %28 : vector<4x8x8xf32> to vector<4x8x8xbf16>
    "tpu.trace_start"() <{level = 10 : i32, message = "hqd,hkd->hqk"}> : () -> ()
    %cst_22 = arith.constant dense<0.000000e+00> : vector<4x8x8xf32>
    %30 = tpu.matmul %23, %26, %cst_22 {dimension_numbers = #tpu.dot_dimension_numbers<[2], [2], [1], [1], [0, 0, 0, 1, 1, 1], [0], [0]>} : vector<4x8x8xbf16>, vector<4x8x8xbf16>, vector<4x8x8xf32> -> vector<4x8x8xf32>
    "tpu.trace_stop"() : () -> ()
    %31 = vector.shape_cast %5 : vector<1x8xf32> to vector<1x1x8xf32>
    %32 = vector.broadcast %31 : vector<1x1x8xf32> to vector<4x8x8xf32>
    %33 = arith.addf %30, %32 : vector<4x8x8xf32>
    %c8_i32 = arith.constant 8 : i32
    %34 = arith.muli %arg1, %c8_i32 : i32
    %35 = tpu.iota {dimensions = array<i32: 0>} : vector<8x8xi32>
    %36 = vector.broadcast %34 : i32 to vector<8x8xi32>
    %37 = arith.addi %36, %35 : vector<8x8xi32>
    %38 = tpu.iota {dimensions = array<i32: 1>} : vector<8x8xi32>
    %39 = arith.cmpi sgt, %38, %37 : vector<8x8xi32>
    %cst_23 = arith.constant -1.000000e+30 : f32
    %cst_24 = arith.constant 0.000000e+00 : f32
    %40 = vector.broadcast %cst_23 : f32 to vector<8x8xf32>
    %41 = vector.broadcast %cst_24 : f32 to vector<8x8xf32>
    %42 = arith.select %39, %40, %41 : vector<8x8xi1>, vector<8x8xf32>
    %43 = vector.shape_cast %42 : vector<8x8xf32> to vector<1x8x8xf32>
    %44 = vector.broadcast %43 : vector<1x8x8xf32> to vector<4x8x8xf32>
    %45 = arith.addf %33, %44 : vector<4x8x8xf32>
    %cst_25 = arith.constant dense<0xFF800000> : vector<4x8xf32>
    %46 = vector.multi_reduction <maximumf>, %45, %cst_25 [2] : vector<4x8x8xf32> to vector<4x8xf32>
    %47 = vector.shape_cast %46 : vector<4x8xf32> to vector<4x8x1xf32>
    %48 = vector.broadcast %47 : vector<4x8x1xf32> to vector<4x8x8xf32>
    %49 = arith.subf %45, %48 : vector<4x8x8xf32>
    %50 = math.exp %49 : vector<4x8x8xf32>
    %cst_26 = arith.constant dense<0.000000e+00> : vector<4x8xf32>
    %51 = vector.multi_reduction <add>, %50, %cst_26 [2] : vector<4x8x8xf32> to vector<4x8xf32>
    %52 = vector.shape_cast %51 : vector<4x8xf32> to vector<4x8x1xf32>
    %53 = tpu.reciprocal %52 {approx = true} : vector<4x8x1xf32> -> vector<4x8x1xf32>
    %54 = vector.broadcast %53 : vector<4x8x1xf32> to vector<4x8x8xf32>
    %55 = arith.mulf %50, %54 : vector<4x8x8xf32>
    %56 = arith.truncf %55 : vector<4x8x8xf32> to vector<4x8x8xbf16>
    "tpu.trace_start"() <{level = 10 : i32, message = "hqk,hkd->hqd"}> : () -> ()
    %cst_27 = arith.constant dense<0.000000e+00> : vector<4x8x8xf32>
    %57 = tpu.matmul %56, %29, %cst_27 {dimension_numbers = #tpu.dot_dimension_numbers<[2], [1], [1], [2], [0, 0, 0, 1, 1, 2], [0], [0]>} : vector<4x8x8xbf16>, vector<4x8x8xbf16>, vector<4x8x8xf32> -> vector<4x8x8xf32>
    "tpu.trace_stop"() : () -> ()
    %58 = tpu.transpose %57, [1, 0, 2] : vector<4x8x8xf32> -> vector<8x4x8xf32>
    %59 = vector.shape_cast %58 : vector<8x4x8xf32> to vector<8x32xf32>
    %60 = arith.truncf %59 : vector<8x32xf32> to vector<8x32xbf16>
    %c0_28 = arith.constant 0 : index
    %c0_29 = arith.constant 0 : index
    %61 = vector.load %arg11[%c0_28, %c0_29] : memref<32x32xbf16, #tpu.memory_space<vmem>>, vector<32x32xbf16>
    %cst_30 = arith.constant dense<0.000000e+00> : vector<8x32xf32>
    %62 = tpu.matmul %60, %61, %cst_30 {dimension_numbers = #tpu.dot_dimension_numbers<[1], [0], [0], [1], [0, 0, 1, 1], [], []>} : vector<8x32xbf16>, vector<32x32xbf16>, vector<8x32xf32> -> vector<8x32xf32>
    %c0_31 = arith.constant 0 : index
    %c0_32 = arith.constant 0 : index
    %63 = vector.load %arg12[%c0_31, %c0_32] : memref<1x32xf32, #tpu.memory_space<vmem>>, vector<1x32xf32>
    %64 = vector.broadcast %63 : vector<1x32xf32> to vector<8x32xf32>
    %65 = arith.addf %62, %64 : vector<8x32xf32>
    %66 = arith.extf %1 : vector<8x32xbf16> to vector<8x32xf32>
    %67 = arith.addf %66, %65 : vector<8x32xf32>
    %cst_33 = arith.constant dense<0.000000e+00> : vector<8xf32>
    %68 = vector.multi_reduction <add>, %67, %cst_33 [1] : vector<8x32xf32> to vector<8xf32>
    %69 = vector.shape_cast %68 : vector<8xf32> to vector<8x1xf32>
    %cst_34 = arith.constant 3.200000e+01 : f32
    %70 = vector.broadcast %cst_34 : f32 to vector<8x1xf32>
    %71 = arith.divf %69, %70 : vector<8x1xf32>
    %72 = vector.broadcast %71 : vector<8x1xf32> to vector<8x32xf32>
    %73 = arith.subf %67, %72 : vector<8x32xf32>
    %74 = arith.mulf %73, %73 : vector<8x32xf32>
    %cst_35 = arith.constant dense<0.000000e+00> : vector<8xf32>
    %75 = vector.multi_reduction <add>, %74, %cst_35 [1] : vector<8x32xf32> to vector<8xf32>
    %76 = vector.shape_cast %75 : vector<8xf32> to vector<8x1xf32>
    %cst_36 = arith.constant 3.200000e+01 : f32
    %77 = vector.broadcast %cst_36 : f32 to vector<8x1xf32>
    %78 = arith.divf %76, %77 : vector<8x1xf32>
    %79 = vector.broadcast %71 : vector<8x1xf32> to vector<8x32xf32>
    %80 = arith.subf %67, %79 : vector<8x32xf32>
    %cst_37 = arith.constant 9.99999974E-6 : f32
    %81 = vector.broadcast %cst_37 : f32 to vector<8x1xf32>
    %82 = arith.addf %78, %81 : vector<8x1xf32>
    %83 = math.rsqrt %82 : vector<8x1xf32>
    %84 = vector.broadcast %83 : vector<8x1xf32> to vector<8x32xf32>
    %85 = arith.mulf %80, %84 : vector<8x32xf32>
    %c0_38 = arith.constant 0 : index
    %c0_39 = arith.constant 0 : index
    %86 = vector.load %arg13[%c0_38, %c0_39] : memref<1x32xf32, #tpu.memory_space<vmem>>, vector<1x32xf32>
    %87 = vector.broadcast %86 : vector<1x32xf32> to vector<8x32xf32>
    %88 = arith.mulf %85, %87 : vector<8x32xf32>
    %c0_40 = arith.constant 0 : index
    %c0_41 = arith.constant 0 : index
    %89 = vector.load %arg14[%c0_40, %c0_41] : memref<1x32xf32, #tpu.memory_space<vmem>>, vector<1x32xf32>
    %90 = vector.broadcast %89 : vector<1x32xf32> to vector<8x32xf32>
    %91 = arith.addf %88, %90 : vector<8x32xf32>
    %92 = arith.truncf %91 : vector<8x32xf32> to vector<8x32xbf16>
    %c0_42 = arith.constant 0 : index
    %c0_43 = arith.constant 0 : index
    %c0_44 = arith.constant 0 : index
    %93 = vector.load %arg15[%c0_42, %c0_43, %c0_44] : memref<1x8x32xbf16, #tpu.memory_space<vmem>>, vector<1x8x32xbf16>
    %94 = vector.shape_cast %93 : vector<1x8x32xbf16> to vector<8x32xbf16>
    %95 = vector.shape_cast %92 : vector<8x32xbf16> to vector<1x8x32xbf16>
    tpu.vector_store %arg15[%c0_42, %c0_43, %c0_44], %95 {strides = array<i32>} : memref<1x8x32xbf16, #tpu.memory_space<vmem>>, vector<1x8x32xbf16>,
    return
  }
  func.func @transform_0(%arg0: i32, %arg1: i32) -> (i32, i32, i32) {
    %c0_i32 = arith.constant 0 : i32
    %c0_i32_0 = arith.constant 0 : i32
    return %arg0, %arg1, %c0_i32 : i32, i32, i32
  }
  func.func @transform_1(%arg0: i32, %arg1: i32) -> (i32, i32, i32) {
    %c0_i32 = arith.constant 0 : i32
    %c0_i32_0 = arith.constant 0 : i32
    %c0_i32_1 = arith.constant 0 : i32
    return %arg0, %c0_i32, %c0_i32_0 : i32, i32, i32
  }
  func.func @transform_2(%arg0: i32, %arg1: i32) -> (i32, i32, i32) {
    %c0_i32 = arith.constant 0 : i32
    %c0_i32_0 = arith.constant 0 : i32
    %c0_i32_1 = arith.constant 0 : i32
    return %arg0, %c0_i32, %c0_i32_0 : i32, i32, i32
  }
  func.func @transform_3(%arg0: i32, %arg1: i32) -> (i32, i32) {
    %c0_i32 = arith.constant 0 : i32
    %c0_i32_0 = arith.constant 0 : i32
    %c0_i32_1 = arith.constant 0 : i32
    return %c0_i32, %c0_i32_0 : i32, i32
  }
  func.func @transform_4(%arg0: i32, %arg1: i32) -> (i32, i32) {
    %c0_i32 = arith.constant 0 : i32
    %c0_i32_0 = arith.constant 0 : i32
    %c0_i32_1 = arith.constant 0 : i32
    return %c0_i32, %c0_i32_0 : i32, i32
  }
  func.func @transform_5(%arg0: i32, %arg1: i32) -> (i32, i32) {
    %c0_i32 = arith.constant 0 : i32
    %c0_i32_0 = arith.constant 0 : i32
    %c0_i32_1 = arith.constant 0 : i32
    return %c0_i32, %c0_i32_0 : i32, i32
  }
  func.func @transform_6(%arg0: i32, %arg1: i32) -> (i32, i32) {
    %c0_i32 = arith.constant 0 : i32
    %c0_i32_0 = arith.constant 0 : i32
    %c0_i32_1 = arith.constant 0 : i32
    return %c0_i32, %c0_i32_0 : i32, i32
  }
  func.func @transform_7(%arg0: i32, %arg1: i32) -> (i32, i32) {
    %c0_i32 = arith.constant 0 : i32
    %c0_i32_0 = arith.constant 0 : i32
    %c0_i32_1 = arith.constant 0 : i32
    return %c0_i32, %c0_i32_0 : i32, i32
  }
  func.func @transform_8(%arg0: i32, %arg1: i32) -> (i32, i32) {
    %c0_i32 = arith.constant 0 : i32
    %c0_i32_0 = arith.constant 0 : i32
    %c0_i32_1 = arith.constant 0 : i32
    return %c0_i32, %c0_i32_0 : i32, i32
  }
  func.func @transform_9(%arg0: i32, %arg1: i32) -> (i32, i32) {
    %c0_i32 = arith.constant 0 : i32
    %c0_i32_0 = arith.constant 0 : i32
    %c0_i32_1 = arith.constant 0 : i32
    return %c0_i32, %c0_i32_0 : i32, i32
  }
  func.func @transform_10(%arg0: i32, %arg1: i32) -> (i32, i32) {
    %c0_i32 = arith.constant 0 : i32
    %c0_i32_0 = arith.constant 0 : i32
    %c0_i32_1 = arith.constant 0 : i32
    return %c0_i32, %c0_i32_0 : i32, i32
  }
  func.func @transform_11(%arg0: i32, %arg1: i32) -> (i32, i32) {
    %c0_i32 = arith.constant 0 : i32
    %c0_i32_0 = arith.constant 0 : i32
    %c0_i32_1 = arith.constant 0 : i32
    return %c0_i32, %c0_i32_0 : i32, i32
  }
  func.func @transform_12(%arg0: i32, %arg1: i32) -> (i32, i32) {
    %c0_i32 = arith.constant 0 : i32
    %c0_i32_0 = arith.constant 0 : i32
    %c0_i32_1 = arith.constant 0 : i32
    return %c0_i32, %c0_i32_0 : i32, i32
  }
  func.func @transform_13(%arg0: i32, %arg1: i32) -> (i32, i32, i32) {
    %c0_i32 = arith.constant 0 : i32
    %c0_i32_0 = arith.constant 0 : i32
    return %arg0, %arg1, %c0_i32 : i32, i32, i32
  }
}

module attributes {stable_mosaic.version = 11 : i64} {
  func.func @linear_kernel(%arg0: i32, %arg1: i32, %arg2: memref<16x32xbf16, #tpu.memory_space<vmem>>, %arg3: memref<32x128xbf16, #tpu.memory_space<vmem>>, %arg4: memref<1x128xf32, #tpu.memory_space<vmem>>, %arg5: memref<16x128xf32, #tpu.memory_space<vmem>>) attributes {dimension_semantics = [#tpu.dimension_semantics<parallel>, #tpu.dimension_semantics<parallel>], iteration_bounds = array<i64: 1, 1>, scalar_prefetch = 0 : i64, scratch_operands = 0 : i64, tpu.core_type = #tpu.core_type<tc>, window_params = [{transform_indices = @transform_0, window_bounds = array<i64: 16, 32>}, {transform_indices = @transform_1, window_bounds = array<i64: 32, 128>}, {transform_indices = @transform_2, window_bounds = array<i64: 1, 128>}, {transform_indices = @transform_3, window_bounds = array<i64: 16, 128>}]} {
    %c0 = arith.constant 0 : index
    %c0_0 = arith.constant 0 : index
    %0 = vector.load %arg2[%c0, %c0_0] : memref<16x32xbf16, #tpu.memory_space<vmem>>, vector<16x32xbf16>
    %c0_1 = arith.constant 0 : index
    %c0_2 = arith.constant 0 : index
    %1 = vector.load %arg3[%c0_1, %c0_2] : memref<32x128xbf16, #tpu.memory_space<vmem>>, vector<32x128xbf16>
    %cst = arith.constant dense<0.000000e+00> : vector<16x128xf32>
    %2 = tpu.matmul %0, %1, %cst {dimension_numbers = #tpu.dot_dimension_numbers<[1], [0], [0], [1], [0, 0, 1, 1], [], []>} : vector<16x32xbf16>, vector<32x128xbf16>, vector<16x128xf32> -> vector<16x128xf32>
    %c0_3 = arith.constant 0 : index
    %c0_4 = arith.constant 0 : index
    %3 = vector.load %arg4[%c0_3, %c0_4] : memref<1x128xf32, #tpu.memory_space<vmem>>, vector<1x128xf32>
    %4 = vector.broadcast %3 : vector<1x128xf32> to vector<16x128xf32>
    %5 = arith.addf %2, %4 : vector<16x128xf32>
    %c0_5 = arith.constant 0 : index
    %c0_6 = arith.constant 0 : index
    %6 = vector.load %arg5[%c0_5, %c0_6] : memref<16x128xf32, #tpu.memory_space<vmem>>, vector<16x128xf32>
    tpu.vector_store %arg5[%c0_5, %c0_6], %5 {strides = array<i32>} : memref<16x128xf32, #tpu.memory_space<vmem>>, vector<16x128xf32>,
    return
  }
  func.func @transform_0(%arg0: i32, %arg1: i32) -> (i32, i32) {
    %c0_i32 = arith.constant 0 : i32
    %c0_i32_0 = arith.constant 0 : i32
    return %arg0, %c0_i32 : i32, i32
  }
  func.func @transform_1(%arg0: i32, %arg1: i32) -> (i32, i32) {
    %c0_i32 = arith.constant 0 : i32
    %c0_i32_0 = arith.constant 0 : i32
    return %c0_i32, %arg1 : i32, i32
  }
  func.func @transform_2(%arg0: i32, %arg1: i32) -> (i32, i32) {
    %c0_i32 = arith.constant 0 : i32
    %c0_i32_0 = arith.constant 0 : i32
    return %c0_i32, %arg1 : i32, i32
  }
  func.func @transform_3(%arg0: i32, %arg1: i32) -> (i32, i32) {
    %c0_i32 = arith.constant 0 : i32
    return %arg0, %arg1 : i32, i32
  }
}

</mosaic_0001>

<llo_original>
// kernel: _lambda_.21
$region0: #{_lambda_.21}
  #allocation0 [shape = 'u32[]', space=smem, size = 0x4, offset = 0x4, fixed_abs, tag = 'smem constant byte address 0x4 - core index']
  #allocation1 [shape = 'u32[72,128]{1,0:T(1,128)}', space=vmem, size = 0x9000, scoped, tag = 'internal scratch']
  %s0 = inlined_call_operand.vmem [shape: bf16[16,32], index: 0, kind: input, shape index: {}]
  %s1 = inlined_call_operand.vmem [shape: bf16[32,128], index: 1, kind: input, shape index: {}]
  %s2 = inlined_call_operand.vmem [shape: f32[1,128], index: 2, kind: input, shape index: {}]
  %s3 = inlined_call_operand.vmem [shape: f32[16,128], index: 3, kind: output, shape index: {}]
  %s4 = sld [smem:[#allocation0]]
  $region22: #{_lambda_.21} parent=0
    _
  %s6 = ssub.s32 1, %s4
  %s7 = scalar_select 0, %s6, %s4
  // Predicated region
  $region2: #{_lambda_.21} parent=0 // pred_check
    _
  $region3: #{_lambda_.21} parent=0 // pred_check_branch
    %9 = sbr.rel (0) target = $region5
  $region4: #{_lambda_.21} parent=0 // pred_region
    _
  $region5: #{_lambda_.21} parent=0 // pred_fallthru
    _
  // Predicated region
  $region6: #{_lambda_.21} parent=0 // pred_check
    _
  $region7: #{_lambda_.21} parent=0 // pred_check_branch
    %11 = sbr.rel (0) target = $region9
  $region8: #{_lambda_.21} parent=0 // pred_region
    _
  $region9: #{_lambda_.21} parent=0 // pred_fallthru
    _
  // Predicated region
  $region10: #{_lambda_.21} parent=0 // pred_check
    _
  $region11: #{_lambda_.21} parent=0 // pred_check_branch
    %13 = sbr.rel (0) target = $region13
  $region12: #{_lambda_.21} parent=0 // pred_region
    _
  $region13: #{_lambda_.21} parent=0 // pred_fallthru
    _
  %v15 = vld [vmem:[%s0] sm:$0xf]
  %v16 = vld [vmem:[%s0 + $0x4] sm:$0xf]
  %v17 = vld [vmem:[%s1] sm:$0xf]
  %v18 = vld [vmem:[%s1 + $0x4] sm:$0xf]
  %v19 = vld [vmem:[%s1 + $0x8] sm:$0xf]
  %v20 = vld [vmem:[%s1 + $0xc] sm:$0xf]
  %v21 = vld [vmem:[%s2] sm:$0x1]
  %v23 = vperm.slane %v21, 0
  %v27 = vunpack.c.l.b16 %v15
  %v28 = vunpack.c.l.b16 %v16
  %v29 = vpack.c.b16 %v28, %v27
  %v34 = vunpack.c.l.b16 %v17
  %v35 = vunpack.c.l.b16 %v18
  %v36 = vunpack.c.l.b16 %v19
  %v37 = vunpack.c.l.b16 %v20
  %v38 = vpack.c.b16 %v35, %v34
  %v39 = vpack.c.b16 %v37, %v36
  %vm42 = vcmask 261120
  %v44 = vsel %vm42, %v29, 0
  %46 = vmatpush.bf16.msra.mxu0 0
  %47 = vmatpush.bf16.msra.mxu0 0
  %48 = vmatpush.bf16.msra.mxu0 0
  %49 = vmatpush.bf16.msra.mxu0 0
  %50 = vmatpush.bf16.msra.mxu0 0
  %51 = vmatpush.bf16.msra.mxu0 0
  %52 = vmatpush.bf16.msra.mxu0 %v39
  %53 = vmatpush.bf16.msra.mxu0 %v38
  %54 = vmatmul.bf16.gmra.mxu0 %v44
  %v55 = vpop.f32.mrf.mxu0
  %v56 = vadd.f32 %v23, %v55
  %v57 = vpop.f32.mrf.mxu0
  %v58 = vadd.f32 %v23, %v57
  %59 = vdwg.mxu0
  %60 = vst [vmem:[%s3] sm:$0xff] %v56
  %61 = vst [vmem:[%s3 + $0x8] sm:$0xff] %v58
  // Predicated region
  $region14: #{_lambda_.21} parent=0 // pred_check
    _
  $region15: #{_lambda_.21} parent=0 // pred_check_branch
    %63 = sbr.rel (0) target = $region17
  $region16: #{_lambda_.21} parent=0 // pred_region
    _
  $region17: #{_lambda_.21} parent=0 // pred_fallthru
    _
  // Predicated region
  $region18: #{_lambda_.21} parent=0 // pred_check
    _
  $region19: #{_lambda_.21} parent=0 // pred_check_branch
    %65 = sbr.rel (0) target = $region21
  $region20: #{_lambda_.21} parent=0 // pred_region
    _
  $region21: #{_lambda_.21} parent=0 // pred_fallthru
    _

// kernel: _lambda_.12
$region0: #{_lambda_.12}
  #allocation0 [shape = 'u32[]', space=smem, size = 0x4, offset = 0x4, fixed_abs, tag = 'smem constant byte address 0x4 - core index']
  #allocation1 [shape = 'u32[72,128]{1,0:T(1,128)}', space=vmem, size = 0x9000, scoped, tag = 'internal scratch']
  %s0 = inlined_call_operand.vmem [shape: bf16[16,32], index: 0, kind: input, shape index: {}]
  %s1 = inlined_call_operand.vmem [shape: bf16[32,64], index: 1, kind: input, shape index: {}]
  %s2 = inlined_call_operand.vmem [shape: f32[1,64], index: 2, kind: input, shape index: {}]
  %s3 = inlined_call_operand.vmem [shape: bf16[64,32], index: 3, kind: input, shape index: {}]
  %s4 = inlined_call_operand.vmem [shape: f32[1,32], index: 4, kind: input, shape index: {}]
  %s5 = inlined_call_operand.vmem [shape: f32[1,32], index: 5, kind: input, shape index: {}]
  %s6 = inlined_call_operand.vmem [shape: f32[1,32], index: 6, kind: input, shape index: {}]
  %s7 = inlined_call_operand.vmem [shape: bf16[16,32], index: 7, kind: output, shape index: {}]
  %s8 = sld [smem:[#allocation0]]
  $region38: #{_lambda_.12} parent=0
    _
  %s10 = ssub.s32 1, %s8
  %s11 = scalar_select 0, %s10, %s8
  // Predicated region
  $region2: #{_lambda_.12} parent=0 // pred_check
    _
  $region3: #{_lambda_.12} parent=0 // pred_check_branch
    %13 = sbr.rel (0) target = $region5
  $region4: #{_lambda_.12} parent=0 // pred_region
    _
  $region5: #{_lambda_.12} parent=0 // pred_fallthru
    _
  // Predicated region
  $region6: #{_lambda_.12} parent=0 // pred_check
    _
  $region7: #{_lambda_.12} parent=0 // pred_check_branch
    %15 = sbr.rel (0) target = $region9
  $region8: #{_lambda_.12} parent=0 // pred_region
    _
  $region9: #{_lambda_.12} parent=0 // pred_fallthru
    _
  // Predicated region
  $region10: #{_lambda_.12} parent=0 // pred_check
    _
  $region11: #{_lambda_.12} parent=0 // pred_check_branch
    %17 = sbr.rel (0) target = $region13
  $region12: #{_lambda_.12} parent=0 // pred_region
    _
  $region13: #{_lambda_.12} parent=0 // pred_fallthru
    _
  // Predicated region
  $region14: #{_lambda_.12} parent=0 // pred_check
    _
  $region15: #{_lambda_.12} parent=0 // pred_check_branch
    %19 = sbr.rel (0) target = $region17
  $region16: #{_lambda_.12} parent=0 // pred_region
    _
  $region17: #{_lambda_.12} parent=0 // pred_fallthru
    _
  // Predicated region
  $region18: #{_lambda_.12} parent=0 // pred_check
    _
  $region19: #{_lambda_.12} parent=0 // pred_check_branch
    %21 = sbr.rel (0) target = $region21
  $region20: #{_lambda_.12} parent=0 // pred_region
    _
  $region21: #{_lambda_.12} parent=0 // pred_fallthru
    _
  // Predicated region
  $region22: #{_lambda_.12} parent=0 // pred_check
    _
  $region23: #{_lambda_.12} parent=0 // pred_check_branch
    %23 = sbr.rel (0) target = $region25
  $region24: #{_lambda_.12} parent=0 // pred_region
    _
  $region25: #{_lambda_.12} parent=0 // pred_fallthru
    _
  // Predicated region
  $region26: #{_lambda_.12} parent=0 // pred_check
    _
  $region27: #{_lambda_.12} parent=0 // pred_check_branch
    %25 = sbr.rel (0) target = $region29
  $region28: #{_lambda_.12} parent=0 // pred_region
    _
  $region29: #{_lambda_.12} parent=0 // pred_fallthru
    _
  %v27 = vld [vmem:[%s0] sm:$0xf]
  %v28 = vld [vmem:[%s0 + $0x4] sm:$0xf]
  %v29 = vld [vmem:[%s1] sm:$0xf]
  %v30 = vld [vmem:[%s1 + $0x4] sm:$0xf]
  %v31 = vld [vmem:[%s1 + $0x8] sm:$0xf]
  %v32 = vld [vmem:[%s1 + $0xc] sm:$0xf]
  %v33 = vld [vmem:[%s2] sm:$0x1]
  %v35 = vperm.slane %v33, 0
  %v39 = vunpack.c.l.b16 %v27
  %v40 = vunpack.c.l.b16 %v28
  %v41 = vpack.c.b16 %v40, %v39
  %v46 = vunpack.c.l.b16 %v29
  %v47 = vunpack.c.l.b16 %v30
  %v48 = vunpack.c.l.b16 %v31
  %v49 = vunpack.c.l.b16 %v32
  %v50 = vpack.c.b16 %v47, %v46
  %v51 = vpack.c.b16 %v49, %v48
  %vm54 = vcmask 261120
  %v56 = vsel %vm54, %v41, 0
  %58 = vmatpush.bf16.msra.mxu0 0
  %59 = vmatpush.bf16.msra.mxu0 0
  %60 = vmatpush.bf16.msra.mxu0 0
  %61 = vmatpush.bf16.msra.mxu0 0
  %62 = vmatpush.bf16.msra.mxu0 0
  %63 = vmatpush.bf16.msra.mxu0 0
  %64 = vmatpush.bf16.msra.mxu0 %v51
  %65 = vmatpush.bf16.msra.mxu0 %v50
  %66 = vmatmul.bf16.gmra.mxu0 %v56
  %v67 = vpop.f32.mrf.mxu0
  %v68 = vadd.f32 %v35, %v67
  %v69 = vpop.f32.mrf.mxu0
  %v70 = vadd.f32 %v35, %v69
  %71 = vdwg.mxu0
  %v72 = vmax.f32 %v68, 0.0
  %v73 = vmax.f32 %v70, 0.0
  %v74 = vpack.c.bf16 %v73, %v72
  %v75 = vld [vmem:[%s3] sm:$0xf]
  %v76 = vld [vmem:[%s3 + $0x4] sm:$0xf]
  %v77 = vld [vmem:[%s3 + $0x8] sm:$0xf]
  %v78 = vld [vmem:[%s3 + $0xc] sm:$0xf]
  %v79 = vld [vmem:[%s3 + $0x10] sm:$0xf]
  %v80 = vld [vmem:[%s3 + $0x14] sm:$0xf]
  %v81 = vld [vmem:[%s3 + $0x18] sm:$0xf]
  %v82 = vld [vmem:[%s3 + $0x1c] sm:$0xf]
  %v83 = vld [vmem:[%s4] sm:$0x1]
  %v85 = vperm.slane %v83, 0
  %v95 = vunpack.c.l.b16 %v75
  %v96 = vunpack.c.l.b16 %v76
  %v97 = vunpack.c.l.b16 %v77
  %v98 = vunpack.c.l.b16 %v78
  %v99 = vunpack.c.l.b16 %v79
  %v100 = vunpack.c.l.b16 %v80
  %v101 = vunpack.c.l.b16 %v81
  %v102 = vunpack.c.l.b16 %v82
  %v103 = vpack.c.b16 %v96, %v95
  %v104 = vpack.c.b16 %v98, %v97
  %v105 = vpack.c.b16 %v100, %v99
  %v106 = vpack.c.b16 %v102, %v101
  %vm111 = vcmask 523264
  %v113 = vsel %vm111, %v74, 0
  %115 = vmatpush.bf16.msra.mxu0 0
  %116 = vmatpush.bf16.msra.mxu0 0
  %117 = vmatpush.bf16.msra.mxu0 0
  %118 = vmatpush.bf16.msra.mxu0 0
  %119 = vmatpush.bf16.msra.mxu0 %v106
  %120 = vmatpush.bf16.msra.mxu0 %v105
  %121 = vmatpush.bf16.msra.mxu0 %v104
  %122 = vmatpush.bf16.msra.mxu0 %v103
  %123 = vmatmul.bf16.gmra.mxu0 %v113
  %v124 = vpop.f32.mrf.mxu0
  %v125 = vadd.f32 %v85, %v124
  %v126 = vpop.f32.mrf.mxu0
  %v127 = vadd.f32 %v85, %v126
  %128 = vdwg.mxu0
  %v129 = vunpack.c.l.bf16 %v27
  %v130 = vunpack.c.l.bf16 %v28
  %v131 = vadd.f32 %v129, %v125
  %v132 = vadd.f32 %v130, %v127
  %v133 = vsel %vm54, %v131, 0.0
  %134 = vadd.xlane.f32.xlu0 %v133
  %v135 = vpop.xlane.xlu0 %134
  %v136 = vsel %vm54, %v132, 0.0
  %137 = vadd.xlane.f32.xlu0 %v136
  %v138 = vpop.xlane.xlu0 %137
  %v139 = vrcp.pop 32.0
  %v140 = vmul.f32 32.0, %v139
  %v141 = vsub.f32 1.0, %v140
  %v142 = vmul.f32 %v139, %v141
  %v143 = vadd.f32 %v139, %v142
  %vm144 = vweird.f32 %v139
  %v145 = vsel %vm144, %v139, %v143
  %v146 = vmul.f32 %v135, %v145
  %v147 = vmul.f32 %v138, %v145
  %v148 = vsub.f32 %v131, %v146
  %v149 = vsub.f32 %v132, %v147
  %v150 = vmul.f32 %v148, %v148
  %v151 = vmul.f32 %v149, %v149
  %v152 = vsel %vm54, %v150, 0.0
  %153 = vadd.xlane.f32.xlu0 %v152
  %v154 = vpop.xlane.xlu0 %153
  %v155 = vsel %vm54, %v151, 0.0
  %156 = vadd.xlane.f32.xlu0 %v155
  %v157 = vpop.xlane.xlu0 %156
  %v158 = vmul.f32 %v154, %v145
  %v159 = vmul.f32 %v157, %v145
  %v160 = vadd.f32 %v158, 1e-05
  %v161 = vadd.f32 %v159, 1e-05
  %v162 = vrsqrt.pop %v160
  %v163 = vmul.f32 %v162, %v160
  %v164 = vmul.f32 %v163, %v162
  %v165 = vmul.f32 0.5, %v164
  %v166 = vsub.f32 1.5, %v165
  %v167 = vmul.f32 %v162, %v166
  %vm168 = vweird.f32 %v160
  %vm169 = vweird.f32 %v162
  %vm170 = vmor %vm168, %vm169
  %v171 = vsel %vm170, %v162, %v167
  %v172 = vrsqrt.pop %v161
  %v173 = vmul.f32 %v172, %v161
  %v174 = vmul.f32 %v173, %v172
  %v175 = vmul.f32 0.5, %v174
  %v176 = vsub.f32 1.5, %v175
  %v177 = vmul.f32 %v172, %v176
  %vm178 = vweird.f32 %v161
  %vm179 = vweird.f32 %v172
  %vm180 = vmor %vm178, %vm179
  %v181 = vsel %vm180, %v172, %v177
  %v182 = vmul.f32 %v148, %v171
  %v183 = vmul.f32 %v149, %v181
  %v184 = vld [vmem:[%s5] sm:$0x1]
  %v186 = vperm.slane %v184, 0
  %v188 = vmul.f32 %v182, %v186
  %v189 = vmul.f32 %v183, %v186
  %v190 = vld [vmem:[%s6] sm:$0x1]
  %v192 = vperm.slane %v190, 0
  %v194 = vadd.f32 %v188, %v192
  %v195 = vadd.f32 %v189, %v192
  %v196 = vpack.c.bf16 %v194, %v194
  %v197 = vpack.c.bf16 %v195, %v195
  %vm198 = vcmask 257024
  %199 = vst.msk [vmem:[%s7] sm:$0xf] %vm198, %v196
  %200 = vst.msk [vmem:[%s7 + $0x4] sm:$0xf] %vm198, %v197
  // Predicated region
  $region30: #{_lambda_.12} parent=0 // pred_check
    _
  $region31: #{_lambda_.12} parent=0 // pred_check_branch
    %202 = sbr.rel (0) target = $region33
  $region32: #{_lambda_.12} parent=0 // pred_region
    _
  $region33: #{_lambda_.12} parent=0 // pred_fallthru
    _
  // Predicated region
  $region34: #{_lambda_.12} parent=0 // pred_check
    _
  $region35: #{_lambda_.12} parent=0 // pred_check_branch
    %204 = sbr.rel (0) target = $region37
  $region36: #{_lambda_.12} parent=0 // pred_region
    _
  $region37: #{_lambda_.12} parent=0 // pred_fallthru
    _

// kernel: _lambda_.11
$region0: #{_lambda_.11}
  #allocation0 [shape = 'u32[]', space=smem, size = 0x4, offset = 0x4, fixed_abs, tag = 'smem constant byte address 0x4 - core index']
  #allocation1 [shape = 'u32[72,128]{1,0:T(1,128)}', space=vmem, size = 0x9000, scoped, tag = 'internal scratch']
  %s0 = inlined_call_operand.vmem [shape: bf16[2,8,32], index: 0, kind: input, shape index: {}, may-alias: {0,1}]
  %s1 = inlined_call_operand.vmem [shape: bf16[2,8,32], index: 1, kind: input, shape index: {}, may-alias: {0,1}]
  %s2 = inlined_call_operand.vmem [shape: f32[2,1,8], index: 2, kind: input, shape index: {}]
  %s3 = inlined_call_operand.vmem [shape: bf16[32,32], index: 3, kind: input, shape index: {}]
  %s4 = inlined_call_operand.vmem [shape: f32[1,32], index: 4, kind: input, shape index: {}]
  %s5 = inlined_call_operand.vmem [shape: bf16[32,32], index: 5, kind: input, shape index: {}]
  %s6 = inlined_call_operand.vmem [shape: f32[1,32], index: 6, kind: input, shape index: {}]
  %s7 = inlined_call_operand.vmem [shape: bf16[32,32], index: 7, kind: input, shape index: {}]
  %s8 = inlined_call_operand.vmem [shape: f32[1,32], index: 8, kind: input, shape index: {}]
  %s9 = inlined_call_operand.vmem [shape: bf16[32,32], index: 9, kind: input, shape index: {}]
  %s10 = inlined_call_operand.vmem [shape: f32[1,32], index: 10, kind: input, shape index: {}]
  %s11 = inlined_call_operand.vmem [shape: f32[1,32], index: 11, kind: input, shape index: {}]
  %s12 = inlined_call_operand.vmem [shape: f32[1,32], index: 12, kind: input, shape index: {}]
  %s13 = inlined_call_operand.vmem [shape: bf16[2,8,32], index: 13, kind: output, shape index: {}]
  %s14 = sld [smem:[#allocation0]]
  $region85: #{_lambda_.11} parent=0
    _
  %s16 = ssub.s32 1, %s14
  %s17 = scalar_select 0, %s16, %s14
  loop: start=0, step=1, limit=4
  $region2: #{_lambda_.11} parent=0 // loop_pre_header
    _
  $region3: #{_lambda_.11} parent=0 // loop_header
    %s19 = sphi 0, %s23
    %p20 = scmp.ge.s32.totalorder %s19, 4
    %s26 = sphi 0, %s38
    %s27 = sphi 0, %s34
    %s28 = sphi 0, %s26
    %s29 = sphi 0, %s27
    %s30 = sphi 0, %s28
    %s31 = sphi 0, %s29
    %s43 = sphi 0, %s45
    %s46 = sphi 0, %s43
    %s47 = sphi 0, %s46
    %s63 = sphi 0, %s47
    %s69 = sphi 0, %s71
    %s72 = sphi 0, %s69
    %s73 = sphi 0, %s72
    %s89 = sphi 0, %s73
    %s95 = sphi 0, %s97
    %s98 = sphi 0, %s95
    %s99 = sphi 0, %s98
    %s115 = sphi 0, %s99
    %s119 = sphi 0, %s119
    %s121 = sphi 0, %s119
    %s122 = sphi 0, %s121
    %s136 = sphi 0, %s122
    %s140 = sphi 0, %s140
    %s142 = sphi 0, %s140
    %s143 = sphi 0, %s142
    %s157 = sphi 0, %s143
    %s161 = sphi 0, %s161
    %s163 = sphi 0, %s161
    %s164 = sphi 0, %s163
    %s178 = sphi 0, %s164
    %s182 = sphi 0, %s182
    %s184 = sphi 0, %s182
    %s185 = sphi 0, %s184
    %s199 = sphi 0, %s185
    %s203 = sphi 0, %s203
    %s205 = sphi 0, %s203
    %s206 = sphi 0, %s205
    %s220 = sphi 0, %s206
    %s224 = sphi 0, %s224
    %s226 = sphi 0, %s224
    %s227 = sphi 0, %s226
    %s241 = sphi 0, %s227
    %s245 = sphi 0, %s245
    %s247 = sphi 0, %s245
    %s248 = sphi 0, %s247
    %s262 = sphi 0, %s248
    %s266 = sphi 0, %s266
    %s268 = sphi 0, %s266
    %s269 = sphi 0, %s268
    %s283 = sphi 0, %s269
    %s287 = sphi 0, %s287
    %s289 = sphi 0, %s287
    %s290 = sphi 0, %s289
    %s304 = sphi 0, %s290
    %s308 = sphi 0, %s308
    %s310 = sphi 0, %s308
    %s311 = sphi 0, %s310
    %s325 = sphi 0, %s311
    %s333 = sphi 0, %s335
    %s336 = sphi 0, %s333
    %s337 = sphi 0, %s336
    %s353 = sphi 0, %s337
  $region4: #{_lambda_.11} parent=0 // loop_header_branch
    %22 = sbr.rel (%p20) target = $region8
  $region5: #{_lambda_.11} parent=0 // loop_body
    %s24 = ssub.s32 %s19, 1
    %s25 = ssub.s32 %s19, 2
    %s32 = sadd.s32 1, %s27
    %p33 = scmp.ge.s32.totalorder %s32, 1
    %s34 = scalar_select %p33, 0, %s32
    %s35 = sadd.s32 1, %s26
    %s36 = scalar_select %p33, %s35, %s26
    %p37 = scmp.ge.s32.totalorder %s36, 2
    %s38 = scalar_select %p37, 0, %s36
    %s39 = ssub.s32 %s26, %s38
    %s40 = ssub.s32 %s27, %s34
    %s41 = sor.u32 %s39, %s40
    %p42 = scmp.eq.s32.totalorder %s41, 0
    %s44 = sadd.s32 %s43, 1
    %s45 = scalar_select %p42, %s43, %s44
    %p48 = pneg %p42
    %p49 = scmp.eq.s32.totalorder %s19, 1
    %p50 = por %p48, %p49
    %p51 = scmp.ne.s32.totalorder %s43, %s46
    %p52 = scmp.eq.s32.totalorder %s19, 0
    %p53 = por %p51, %p52
    %p54 = scmp.ne.s32.totalorder %s43, %s46
    %p55 = scmp.eq.s32.totalorder %s24, 1
    %p56 = por %p54, %p55
    %p57 = scmp.ne.s32.totalorder %s46, %s47
    %p58 = scmp.eq.s32.totalorder %s24, 0
    %p59 = por %p57, %p58
    %p60 = scmp.ne.s32.totalorder %s46, %s47
    %p61 = scmp.eq.s32.totalorder %s25, 1
    %p62 = por %p60, %p61
    %p64 = scmp.ne.s32.totalorder %s47, %s63
    %p65 = scmp.eq.s32.totalorder %s25, 0
    %p66 = por %p64, %p65
    %s67 = ssub.s32 %s26, %s38
    %p68 = scmp.eq.s32.totalorder %s67, 0
    %s70 = sadd.s32 %s69, 1
    %s71 = scalar_select %p68, %s69, %s70
    %p74 = pneg %p68
    %p75 = scmp.eq.s32.totalorder %s19, 1
    %p76 = por %p74, %p75
    %p77 = scmp.ne.s32.totalorder %s69, %s72
    %p78 = scmp.eq.s32.totalorder %s19, 0
    %p79 = por %p77, %p78
    %p80 = scmp.ne.s32.totalorder %s69, %s72
    %p81 = scmp.eq.s32.totalorder %s24, 1
    %p82 = por %p80, %p81
    %p83 = scmp.ne.s32.totalorder %s72, %s73
    %p84 = scmp.eq.s32.totalorder %s24, 0
    %p85 = por %p83, %p84
    %p86 = scmp.ne.s32.totalorder %s72, %s73
    %p87 = scmp.eq.s32.totalorder %s25, 1
    %p88 = por %p86, %p87
    %p90 = scmp.ne.s32.totalorder %s73, %s89
    %p91 = scmp.eq.s32.totalorder %s25, 0
    %p92 = por %p90, %p91
    %s93 = ssub.s32 %s26, %s38
    %p94 = scmp.eq.s32.totalorder %s93, 0
    %s96 = sadd.s32 %s95, 1
    %s97 = scalar_select %p94, %s95, %s96
    %p100 = pneg %p94
    %p101 = scmp.eq.s32.totalorder %s19, 1
    %p102 = por %p100, %p101
    %p103 = scmp.ne.s32.totalorder %s95, %s98
    %p104 = scmp.eq.s32.totalorder %s19, 0
    %p105 = por %p103, %p104
    %p106 = scmp.ne.s32.totalorder %s95, %s98
    %p107 = scmp.eq.s32.totalorder %s24, 1
    %p108 = por %p106, %p107
    %p109 = scmp.ne.s32.totalorder %s98, %s99
    %p110 = scmp.eq.s32.totalorder %s24, 0
    %p111 = por %p109, %p110
    %p112 = scmp.ne.s32.totalorder %s98, %s99
    %p113 = scmp.eq.s32.totalorder %s25, 1
    %p114 = por %p112, %p113
    %p116 = scmp.ne.s32.totalorder %s99, %s115
    %p117 = scmp.eq.s32.totalorder %s25, 0
    %p118 = por %p116, %p117
    %s120 = sadd.s32 %s119, 1
    %p123 = scmp.eq.s32.totalorder %s19, 1
    %p124 = scmp.ne.s32.totalorder %s119, %s121
    %p125 = scmp.eq.s32.totalorder %s19, 0
    %p126 = por %p124, %p125
    %p127 = scmp.ne.s32.totalorder %s119, %s121
    %p128 = scmp.eq.s32.totalorder %s24, 1
    %p129 = por %p127, %p128
    %p130 = scmp.ne.s32.totalorder %s121, %s122
    %p131 = scmp.eq.s32.totalorder %s24, 0
    %p132 = por %p130, %p131
    %p133 = scmp.ne.s32.totalorder %s121, %s122
    %p134 = scmp.eq.s32.totalorder %s25, 1
    %p135 = por %p133, %p134
    %p137 = scmp.ne.s32.totalorder %s122, %s136
    %p138 = scmp.eq.s32.totalorder %s25, 0
    %p139 = por %p137, %p138
    %s141 = sadd.s32 %s140, 1
    %p144 = scmp.eq.s32.totalorder %s19, 1
    %p145 = scmp.ne.s32.totalorder %s140, %s142
    %p146 = scmp.eq.s32.totalorder %s19, 0
    %p147 = por %p145, %p146
    %p148 = scmp.ne.s32.totalorder %s140, %s142
    %p149 = scmp.eq.s32.totalorder %s24, 1
    %p150 = por %p148, %p149
    %p151 = scmp.ne.s32.totalorder %s142, %s143
    %p152 = scmp.eq.s32.totalorder %s24, 0
    %p153 = por %p151, %p152
    %p154 = scmp.ne.s32.totalorder %s142, %s143
    %p155 = scmp.eq.s32.totalorder %s25, 1
    %p156 = por %p154, %p155
    %p158 = scmp.ne.s32.totalorder %s143, %s157
    %p159 = scmp.eq.s32.totalorder %s25, 0
    %p160 = por %p158, %p159
    %s162 = sadd.s32 %s161, 1
    %p165 = scmp.eq.s32.totalorder %s19, 1
    %p166 = scmp.ne.s32.totalorder %s161, %s163
    %p167 = scmp.eq.s32.totalorder %s19, 0
    %p168 = por %p166, %p167
    %p169 = scmp.ne.s32.totalorder %s161, %s163
    %p170 = scmp.eq.s32.totalorder %s24, 1
    %p171 = por %p169, %p170
    %p172 = scmp.ne.s32.totalorder %s163, %s164
    %p173 = scmp.eq.s32.totalorder %s24, 0
    %p174 = por %p172, %p173
    %p175 = scmp.ne.s32.totalorder %s163, %s164
    %p176 = scmp.eq.s32.totalorder %s25, 1
    %p177 = por %p175, %p176
    %p179 = scmp.ne.s32.totalorder %s164, %s178
    %p180 = scmp.eq.s32.totalorder %s25, 0
    %p181 = por %p179, %p180
    %s183 = sadd.s32 %s182, 1
    %p186 = scmp.eq.s32.totalorder %s19, 1
    %p187 = scmp.ne.s32.totalorder %s182, %s184
    %p188 = scmp.eq.s32.totalorder %s19, 0
    %p189 = por %p187, %p188
    %p190 = scmp.ne.s32.totalorder %s182, %s184
    %p191 = scmp.eq.s32.totalorder %s24, 1
    %p192 = por %p190, %p191
    %p193 = scmp.ne.s32.totalorder %s184, %s185
    %p194 = scmp.eq.s32.totalorder %s24, 0
    %p195 = por %p193, %p194
    %p196 = scmp.ne.s32.totalorder %s184, %s185
    %p197 = scmp.eq.s32.totalorder %s25, 1
    %p198 = por %p196, %p197
    %p200 = scmp.ne.s32.totalorder %s185, %s199
    %p201 = scmp.eq.s32.totalorder %s25, 0
    %p202 = por %p200, %p201
    %s204 = sadd.s32 %s203, 1
    %p207 = scmp.eq.s32.totalorder %s19, 1
    %p208 = scmp.ne.s32.totalorder %s203, %s205
    %p209 = scmp.eq.s32.totalorder %s19, 0
    %p210 = por %p208, %p209
    %p211 = scmp.ne.s32.totalorder %s203, %s205
    %p212 = scmp.eq.s32.totalorder %s24, 1
    %p213 = por %p211, %p212
    %p214 = scmp.ne.s32.totalorder %s205, %s206
    %p215 = scmp.eq.s32.totalorder %s24, 0
    %p216 = por %p214, %p215
    %p217 = scmp.ne.s32.totalorder %s205, %s206
    %p218 = scmp.eq.s32.totalorder %s25, 1
    %p219 = por %p217, %p218
    %p221 = scmp.ne.s32.totalorder %s206, %s220
    %p222 = scmp.eq.s32.totalorder %s25, 0
    %p223 = por %p221, %p222
    %s225 = sadd.s32 %s224, 1
    %p228 = scmp.eq.s32.totalorder %s19, 1
    %p229 = scmp.ne.s32.totalorder %s224, %s226
    %p230 = scmp.eq.s32.totalorder %s19, 0
    %p231 = por %p229, %p230
    %p232 = scmp.ne.s32.totalorder %s224, %s226
    %p233 = scmp.eq.s32.totalorder %s24, 1
    %p234 = por %p232, %p233
    %p235 = scmp.ne.s32.totalorder %s226, %s227
    %p236 = scmp.eq.s32.totalorder %s24, 0
    %p237 = por %p235, %p236
    %p238 = scmp.ne.s32.totalorder %s226, %s227
    %p239 = scmp.eq.s32.totalorder %s25, 1
    %p240 = por %p238, %p239
    %p242 = scmp.ne.s32.totalorder %s227, %s241
    %p243 = scmp.eq.s32.totalorder %s25, 0
    %p244 = por %p242, %p243
    %s246 = sadd.s32 %s245, 1
    %p249 = scmp.eq.s32.totalorder %s19, 1
    %p250 = scmp.ne.s32.totalorder %s245, %s247
    %p251 = scmp.eq.s32.totalorder %s19, 0
    %p252 = por %p250, %p251
    %p253 = scmp.ne.s32.totalorder %s245, %s247
    %p254 = scmp.eq.s32.totalorder %s24, 1
    %p255 = por %p253, %p254
    %p256 = scmp.ne.s32.totalorder %s247, %s248
    %p257 = scmp.eq.s32.totalorder %s24, 0
    %p258 = por %p256, %p257
    %p259 = scmp.ne.s32.totalorder %s247, %s248
    %p260 = scmp.eq.s32.totalorder %s25, 1
    %p261 = por %p259, %p260
    %p263 = scmp.ne.s32.totalorder %s248, %s262
    %p264 = scmp.eq.s32.totalorder %s25, 0
    %p265 = por %p263, %p264
    %s267 = sadd.s32 %s266, 1
    %p270 = scmp.eq.s32.totalorder %s19, 1
    %p271 = scmp.ne.s32.totalorder %s266, %s268
    %p272 = scmp.eq.s32.totalorder %s19, 0
    %p273 = por %p271, %p272
    %p274 = scmp.ne.s32.totalorder %s266, %s268
    %p275 = scmp.eq.s32.totalorder %s24, 1
    %p276 = por %p274, %p275
    %p277 = scmp.ne.s32.totalorder %s268, %s269
    %p278 = scmp.eq.s32.totalorder %s24, 0
    %p279 = por %p277, %p278
    %p280 = scmp.ne.s32.totalorder %s268, %s269
    %p281 = scmp.eq.s32.totalorder %s25, 1
    %p282 = por %p280, %p281
    %p284 = scmp.ne.s32.totalorder %s269, %s283
    %p285 = scmp.eq.s32.totalorder %s25, 0
    %p286 = por %p284, %p285
    %s288 = sadd.s32 %s287, 1
    %p291 = scmp.eq.s32.totalorder %s19, 1
    %p292 = scmp.ne.s32.totalorder %s287, %s289
    %p293 = scmp.eq.s32.totalorder %s19, 0
    %p294 = por %p292, %p293
    %p295 = scmp.ne.s32.totalorder %s287, %s289
    %p296 = scmp.eq.s32.totalorder %s24, 1
    %p297 = por %p295, %p296
    %p298 = scmp.ne.s32.totalorder %s289, %s290
    %p299 = scmp.eq.s32.totalorder %s24, 0
    %p300 = por %p298, %p299
    %p301 = scmp.ne.s32.totalorder %s289, %s290
    %p302 = scmp.eq.s32.totalorder %s25, 1
    %p303 = por %p301, %p302
    %p305 = scmp.ne.s32.totalorder %s290, %s304
    %p306 = scmp.eq.s32.totalorder %s25, 0
    %p307 = por %p305, %p306
    %s309 = sadd.s32 %s308, 1
    %p312 = scmp.eq.s32.totalorder %s19, 1
    %p313 = scmp.ne.s32.totalorder %s308, %s310
    %p314 = scmp.eq.s32.totalorder %s19, 0
    %p315 = por %p313, %p314
    %p316 = scmp.ne.s32.totalorder %s308, %s310
    %p317 = scmp.eq.s32.totalorder %s24, 1
    %p318 = por %p316, %p317
    %p319 = scmp.ne.s32.totalorder %s310, %s311
    %p320 = scmp.eq.s32.totalorder %s24, 0
    %p321 = por %p319, %p320
    %p322 = scmp.ne.s32.totalorder %s310, %s311
    %p323 = scmp.eq.s32.totalorder %s25, 1
    %p324 = por %p322, %p323
    %p326 = scmp.ne.s32.totalorder %s311, %s325
    %p327 = scmp.eq.s32.totalorder %s25, 0
    %p328 = por %p326, %p327
    %s329 = ssub.s32 %s26, %s38
    %s330 = ssub.s32 %s27, %s34
    %s331 = sor.u32 %s329, %s330
    %p332 = scmp.eq.s32.totalorder %s331, 0
    %s334 = sadd.s32 %s333, 1
    %s335 = scalar_select %p332, %s333, %s334
    %p338 = pneg %p332
    %p339 = scmp.eq.s32.totalorder %s19, 1
    %p340 = por %p338, %p339
    %p341 = scmp.ne.s32.totalorder %s333, %s336
    %p342 = scmp.eq.s32.totalorder %s19, 0
    %p343 = por %p341, %p342
    %p344 = scmp.ne.s32.totalorder %s333, %s336
    %p345 = scmp.eq.s32.totalorder %s24, 1
    %p346 = por %p344, %p345
    %p347 = scmp.ne.s32.totalorder %s336, %s337
    %p348 = scmp.eq.s32.totalorder %s24, 0
    %p349 = por %p347, %p348
    %p350 = scmp.ne.s32.totalorder %s336, %s337
    %p351 = scmp.eq.s32.totalorder %s25, 1
    %p352 = por %p350, %p351
    %p354 = scmp.ne.s32.totalorder %s337, %s353
    %p355 = scmp.eq.s32.totalorder %s25, 0
    %p356 = por %p354, %p355
    %p357 = scmp.le.s32.totalorder 1, %s19
    %p358 = scmp.lt.s32.totalorder %s19, 3
    %p359 = pnand %p357, %p358
    %p360 = pneg %p359
    // Predicated region
    $region9: #{_lambda_.11} parent=5 // pred_check
      _
    $region10: #{_lambda_.11} parent=5 // pred_check_branch
      %362 = sbr.rel (%p359) target = $region12
    $region11: #{_lambda_.11} parent=5 // pred_region
      %s363 = ssub.s32 %s19, 1
      // Predicated region
      $region13: #{_lambda_.11} parent=11 // pred_check
        %p364 = pneg %p132
      $region14: #{_lambda_.11} parent=11 // pred_check_branch
        %366 = sbr.rel (%p364) target = $region16
      $region15: #{_lambda_.11} parent=11 // pred_region
        _
      $region16: #{_lambda_.11} parent=11 // pred_fallthru
        _
      // Predicated region
      $region17: #{_lambda_.11} parent=11 // pred_check
        %p367 = pneg %p153
      $region18: #{_lambda_.11} parent=11 // pred_check_branch
        %369 = sbr.rel (%p367) target = $region20
      $region19: #{_lambda_.11} parent=11 // pred_region
        _
      $region20: #{_lambda_.11} parent=11 // pred_fallthru
        _
      // Predicated region
      $region21: #{_lambda_.11} parent=11 // pred_check
        %p370 = pneg %p174
      $region22: #{_lambda_.11} parent=11 // pred_check_branch
        %372 = sbr.rel (%p370) target = $region24
      $region23: #{_lambda_.11} parent=11 // pred_region
        _
      $region24: #{_lambda_.11} parent=11 // pred_fallthru
        _
      // Predicated region
      $region25: #{_lambda_.11} parent=11 // pred_check
        %p373 = pneg %p195
      $region26: #{_lambda_.11} parent=11 // pred_check_branch
        %375 = sbr.rel (%p373) target = $region28
      $region27: #{_lambda_.11} parent=11 // pred_region
        _
      $region28: #{_lambda_.11} parent=11 // pred_fallthru
        _
      // Predicated region
      $region29: #{_lambda_.11} parent=11 // pred_check
        %p376 = pneg %p216
      $region30: #{_lambda_.11} parent=11 // pred_check_branch
        %378 = sbr.rel (%p376) target = $region32
      $region31: #{_lambda_.11} parent=11 // pred_region
        _
      $region32: #{_lambda_.11} parent=11 // pred_fallthru
        _
      // Predicated region
      $region33: #{_lambda_.11} parent=11 // pred_check
        %p379 = pneg %p237
      $region34: #{_lambda_.11} parent=11 // pred_check_branch
        %381 = sbr.rel (%p379) target = $region36
      $region35: #{_lambda_.11} parent=11 // pred_region
        _
      $region36: #{_lambda_.11} parent=11 // pred_fallthru
        _
      // Predicated region
      $region37: #{_lambda_.11} parent=11 // pred_check
        %p382 = pneg %p258
      $region38: #{_lambda_.11} parent=11 // pred_check_branch
        %384 = sbr.rel (%p382) target = $region40
      $region39: #{_lambda_.11} parent=11 // pred_region
        _
      $region40: #{_lambda_.11} parent=11 // pred_fallthru
        _
      // Predicated region
      $region41: #{_lambda_.11} parent=11 // pred_check
        %p385 = pneg %p279
      $region42: #{_lambda_.11} parent=11 // pred_check_branch
        %387 = sbr.rel (%p385) target = $region44
      $region43: #{_lambda_.11} parent=11 // pred_region
        _
      $region44: #{_lambda_.11} parent=11 // pred_fallthru
        _
      // Predicated region
      $region45: #{_lambda_.11} parent=11 // pred_check
        %p388 = pneg %p300
      $region46: #{_lambda_.11} parent=11 // pred_check_branch
        %390 = sbr.rel (%p388) target = $region48
      $region47: #{_lambda_.11} parent=11 // pred_region
        _
      $region48: #{_lambda_.11} parent=11 // pred_fallthru
        _
      // Predicated region
      $region49: #{_lambda_.11} parent=11 // pred_check
        %p391 = pneg %p321
      $region50: #{_lambda_.11} parent=11 // pred_check_branch
        %393 = sbr.rel (%p391) target = $region52
      $region51: #{_lambda_.11} parent=11 // pred_region
        _
      $region52: #{_lambda_.11} parent=11 // pred_fallthru
        _
    $region12: #{_lambda_.11} parent=5 // pred_fallthru
      _
    %p394 = scmp.lt.s32.totalorder %s19, 2
    // Predicated region
    $region53: #{_lambda_.11} parent=5 // pred_check
      %p395 = pneg %p394
    $region54: #{_lambda_.11} parent=5 // pred_check_branch
      %397 = sbr.rel (%p395) target = $region56
    $region55: #{_lambda_.11} parent=5 // pred_region
      // Predicated region
      $region57: #{_lambda_.11} parent=55 // pred_check
        %p398 = pneg %p53
      $region58: #{_lambda_.11} parent=55 // pred_check_branch
        %400 = sbr.rel (%p398) target = $region60
      $region59: #{_lambda_.11} parent=55 // pred_region
        %p401 = scmp.lt.s32.totalorder %s26, 1
        %s402 = scalar_select %p401, %s26, 1
        %p403 = scmp.lt.s32.totalorder %s27, 0
        %s404 = scalar_select %p403, %s27, 0
        %s405 = sadd.s32 %s404, %s402
        %s406 = smul.addr %s405, 4
        %s407 = scalar_lea.vmem %s0, %s406
      $region60: #{_lambda_.11} parent=55 // pred_fallthru
        _
      // Predicated region
      $region61: #{_lambda_.11} parent=55 // pred_check
        %p408 = pneg %p79
      $region62: #{_lambda_.11} parent=55 // pred_check_branch
        %410 = sbr.rel (%p408) target = $region64
      $region63: #{_lambda_.11} parent=55 // pred_region
        %p411 = scmp.lt.s32.totalorder %s26, 1
        %s412 = scalar_select %p411, %s26, 1
        %s413 = smul.addr %s412, 4
        %s414 = scalar_lea.vmem %s1, %s413
      $region64: #{_lambda_.11} parent=55 // pred_fallthru
        _
      // Predicated region
      $region65: #{_lambda_.11} parent=55 // pred_check
        %p415 = pneg %p105
      $region66: #{_lambda_.11} parent=55 // pred_check_branch
        %417 = sbr.rel (%p415) target = $region68
      $region67: #{_lambda_.11} parent=55 // pred_region
        %p418 = scmp.lt.s32.totalorder %s26, 1
        %s419 = scalar_select %p418, %s26, 1
        %s420 = scalar_lea.vmem %s2, %s419
      $region68: #{_lambda_.11} parent=55 // pred_fallthru
        _
    $region56: #{_lambda_.11} parent=5 // pred_fallthru
      _
    %p421 = scmp.le.s32.totalorder 1, %s19
    %p422 = scmp.lt.s32.totalorder %s19, 3
    %p423 = pnand %p421, %p422
    %p424 = pneg %p423
    // Predicated region
    $region69: #{_lambda_.11} parent=5 // pred_check
      _
    $region70: #{_lambda_.11} parent=5 // pred_check_branch
      %426 = sbr.rel (%p423) target = $region72
    $region71: #{_lambda_.11} parent=5 // pred_region
      %s427 = ssub.s32 %s19, 1
      %p428 = scmp.lt.s32.totalorder %s28, 1
      %s429 = scalar_select %p428, %s28, 1
      %p430 = scmp.lt.s32.totalorder %s29, 0
      %s431 = scalar_select %p430, %s29, 0
      %s432 = sadd.s32 %s431, %s429
      %s433 = smul.addr %s432, 4
      %s434 = scalar_lea.vmem %s0, %s433
      %p435 = pneg %p59
      %p436 = pneg %p56
      %p437 = scmp.lt.s32.totalorder %s28, 1
      %s438 = scalar_select %p437, %s28, 1
      %s439 = smul.addr %s438, 4
      %s440 = scalar_lea.vmem %s1, %s439
      %p441 = pneg %p85
      %p442 = pneg %p82
      %p443 = scmp.lt.s32.totalorder %s28, 1
      %s444 = scalar_select %p443, %s28, 1
      %s445 = scalar_lea.vmem %s2, %s444
      %p446 = pneg %p111
      %p447 = pneg %p108
      %p448 = pneg %p132
      %p449 = pneg %p129
      %p450 = pneg %p153
      %p451 = pneg %p150
      %p452 = pneg %p174
      %p453 = pneg %p171
      %p454 = pneg %p195
      %p455 = pneg %p192
      %p456 = pneg %p216
      %p457 = pneg %p213
      %p458 = pneg %p237
      %p459 = pneg %p234
      %p460 = pneg %p258
      %p461 = pneg %p255
      %p462 = pneg %p279
      %p463 = pneg %p276
      %p464 = pneg %p300
      %p465 = pneg %p297
      %p466 = pneg %p321
      %p467 = pneg %p318
      %p468 = pneg %p349
      %p469 = pneg %p346
      %p470 = scmp.lt.s32.totalorder %s28, 1
      %s471 = scalar_select %p470, %s28, 1
      %p472 = scmp.lt.s32.totalorder %s29, 0
      %s473 = scalar_select %p472, %s29, 0
      %s474 = sadd.s32 %s473, %s471
      %s475 = smul.addr %s474, 4
      %s476 = scalar_lea.vmem %s13, %s475
      %p477 = scmp.lt.s32.totalorder %s28, 1
      %s478 = scalar_select %p477, %s28, 1
      %p479 = scmp.lt.s32.totalorder %s29, 0
      %s480 = scalar_select %p479, %s29, 0
      %s481 = sadd.s32 %s480, %s478
      %s482 = smul.addr %s481, 4
      %s483 = scalar_lea.vmem %s0, %s482
      %p484 = scmp.lt.s32.totalorder %s28, 1
      %s485 = scalar_select %p484, %s28, 1
      %s486 = smul.addr %s485, 4
      %s487 = scalar_lea.vmem %s1, %s486
      %p488 = scmp.lt.s32.totalorder %s28, 1
      %s489 = scalar_select %p488, %s28, 1
      %s490 = scalar_lea.vmem %s2, %s489
      %p491 = scmp.lt.s32.totalorder %s28, 1
      %s492 = scalar_select %p491, %s28, 1
      %p493 = scmp.lt.s32.totalorder %s29, 0
      %s494 = scalar_select %p493, %s29, 0
      %s495 = sadd.s32 %s494, %s492
      %s496 = smul.addr %s495, 4
      %s497 = scalar_lea.vmem %s13, %s496
      %v499 = vld [vmem:[%s483] sm:$0xf]
      %v500 = vld [vmem:[%s487] sm:$0xf]
      %v501 = vld [vmem:[%s490] sm:$0x1]
      %v502 = vld [vmem:[%s3] sm:$0xf]
      %v503 = vld [vmem:[%s3 + $0x4] sm:$0xf]
      %v504 = vld [vmem:[%s3 + $0x8] sm:$0xf]
      %v505 = vld [vmem:[%s3 + $0xc] sm:$0xf]
      %v506 = vld [vmem:[%s4] sm:$0x1]
      %v508 = vperm.slane %v506, 0
      %v514 = vunpack.c.l.b16 %v502
      %v515 = vunpack.c.l.b16 %v503
      %v516 = vunpack.c.l.b16 %v504
      %v517 = vunpack.c.l.b16 %v505
      %v518 = vpack.c.b16 %v515, %v514
      %v519 = vpack.c.b16 %v517, %v516
      %vm522 = vcmask 261120
      %v524 = vsel %vm522, %v499, 0
      %526 = vmatpush.bf16.msra.mxu0 0
      %527 = vmatpush.bf16.msra.mxu0 0
      %528 = vmatpush.bf16.msra.mxu0 0
      %529 = vmatpush.bf16.msra.mxu0 0
      %530 = vmatpush.bf16.msra.mxu0 0
      %531 = vmatpush.bf16.msra.mxu0 0
      %532 = vmatpush.bf16.msra.mxu0 %v519
      %533 = vmatpush.bf16.msra.mxu0 %v518
      %534 = vmatmul.bf16.gmra.mxu0 %v524
      %v535 = vpop.f32.mrf.mxu0
      %v536 = vadd.f32 %v508, %v535
      %v537 = vpop.f32.mrf.mxu0
      %538 = vdwg.mxu0
      %v539 = vld [vmem:[%s5] sm:$0xf]
      %v540 = vld [vmem:[%s5 + $0x4] sm:$0xf]
      %v541 = vld [vmem:[%s5 + $0x8] sm:$0xf]
      %v542 = vld [vmem:[%s5 + $0xc] sm:$0xf]
      %v543 = vld [vmem:[%s6] sm:$0x1]
      %v545 = vperm.slane %v543, 0
      %v551 = vunpack.c.l.b16 %v539
      %v552 = vunpack.c.l.b16 %v540
      %v553 = vunpack.c.l.b16 %v541
      %v554 = vunpack.c.l.b16 %v542
      %v555 = vpack.c.b16 %v552, %v551
      %v556 = vpack.c.b16 %v554, %v553
      %v560 = vsel %vm522, %v500, 0
      %562 = vmatpush.bf16.msra.mxu0 0
      %563 = vmatpush.bf16.msra.mxu0 0
      %564 = vmatpush.bf16.msra.mxu0 0
      %565 = vmatpush.bf16.msra.mxu0 0
      %566 = vmatpush.bf16.msra.mxu0 0
      %567 = vmatpush.bf16.msra.mxu0 0
      %568 = vmatpush.bf16.msra.mxu0 %v556
      %569 = vmatpush.bf16.msra.mxu0 %v555
      %570 = vmatmul.bf16.gmra.mxu0 %v560
      %v571 = vpop.f32.mrf.mxu0
      %v572 = vadd.f32 %v545, %v571
      %v573 = vpop.f32.mrf.mxu0
      %574 = vdwg.mxu0
      %v575 = vld [vmem:[%s7] sm:$0xf]
      %v576 = vld [vmem:[%s7 + $0x4] sm:$0xf]
      %v577 = vld [vmem:[%s7 + $0x8] sm:$0xf]
      %v578 = vld [vmem:[%s7 + $0xc] sm:$0xf]
      %v579 = vld [vmem:[%s8] sm:$0x1]
      %v581 = vperm.slane %v579, 0
      %v587 = vunpack.c.l.b16 %v575
      %v588 = vunpack.c.l.b16 %v576
      %v589 = vunpack.c.l.b16 %v577
      %v590 = vunpack.c.l.b16 %v578
      %v591 = vpack.c.b16 %v588, %v587
      %v592 = vpack.c.b16 %v590, %v589
      %595 = vmatpush.bf16.msra.mxu0 0
      %596 = vmatpush.bf16.msra.mxu0 0
      %597 = vmatpush.bf16.msra.mxu0 0
      %598 = vmatpush.bf16.msra.mxu0 0
      %599 = vmatpush.bf16.msra.mxu0 0
      %600 = vmatpush.bf16.msra.mxu0 0
      %601 = vmatpush.bf16.msra.mxu0 %v592
      %602 = vmatpush.bf16.msra.mxu0 %v591
      %603 = vmatmul.bf16.gmra.mxu0 %v560
      %v604 = vpop.f32.mrf.mxu0
      %v605 = vadd.f32 %v581, %v604
      %v606 = vpop.f32.mrf.mxu0
      %607 = vdwg.mxu0
      %609 = vrot.lane.b32.xlu0 %v536, 120
      %v610 = vpop.permute.xlu0 %609
      %612 = vrot.lane.b32.xlu0 %v536, 112
      %v613 = vpop.permute.xlu0 %612
      %615 = vrot.lane.b32.xlu0 %v536, 104
      %v616 = vpop.permute.xlu0 %615
      %v618 = vrot.slane %v613, 4
      %vm619 = vcmask 1047556
      %v620 = vsel %vm619, %v618, %v536
      %v621 = vrot.slane %v536, 4
      %v622 = vsel %vm619, %v613, %v621
      %v624 = vunpack.c.l.s4 1983009808
      %v625 = vunpack.c.0.s8 %v624
      %v626 = vperm.slane %v620, %v625
      %v628 = vunpack.c.l.s4 1983009808
      %v629 = vunpack.c.0.s8 %v628
      %v630 = vperm.slane %v622, %v629
      %v631 = vrot.slane %v616, 4
      %v632 = vsel %vm619, %v631, %v610
      %v633 = vrot.slane %v610, 4
      %v634 = vsel %vm619, %v616, %v633
      %v636 = vunpack.c.l.s4 1983009808
      %v637 = vunpack.c.0.s8 %v636
      %v638 = vperm.slane %v632, %v637
      %v640 = vunpack.c.l.s4 1983009808
      %v641 = vunpack.c.0.s8 %v640
      %v642 = vperm.slane %v634, %v641
      %v643 = vrot.slane %v638, 4
      %v644 = vsel %vm619, %v643, %v626
      %v645 = vrot.slane %v626, 4
      %v646 = vsel %vm619, %v638, %v645
      %v648 = vunpack.c.l.s4 1934713408
      %v649 = vunpack.c.0.s8 %v648
      %v650 = vperm.slane %v644, %v649
      %v652 = vunpack.c.l.s4 1934713408
      %v653 = vunpack.c.0.s8 %v652
      %v654 = vperm.slane %v646, %v653
      %v655 = vrot.slane %v642, 4
      %v656 = vsel %vm619, %v655, %v630
      %v657 = vrot.slane %v630, 4
      %v658 = vsel %vm619, %v642, %v657
      %v660 = vunpack.c.l.s4 1934713408
      %v661 = vunpack.c.0.s8 %v660
      %v662 = vperm.slane %v656, %v661
      %v664 = vunpack.c.l.s4 1934713408
      %v665 = vunpack.c.0.s8 %v664
      %v666 = vperm.slane %v658, %v665
      %v667 = vrot.slane %v650, 4
      %v668 = vsel %vm619, 0.0, %v667
      %v669 = vrot.slane %v654, 4
      %v670 = vsel %vm619, 0.0, %v669
      %v671 = vrot.slane %v662, 4
      %v672 = vsel %vm619, 0.0, %v671
      %v673 = vrot.slane %v666, 4
      %v674 = vsel %vm619, 0.0, %v673
      %v675 = vsel %vm619, %v669, %v650
      %v677 = vunpack.c.l.s4 1983009808
      %v678 = vunpack.c.0.s8 %v677
      %v679 = vperm.slane %v675, %v678
      %v680 = vrot.slane %v670, 4
      %v681 = vsel %vm619, %v680, %v668
      %v683 = vunpack.c.l.s4 1983009808
      %v684 = vunpack.c.0.s8 %v683
      %v685 = vperm.slane %v681, %v684
      %v686 = vsel %vm619, %v673, %v662
      %v688 = vunpack.c.l.s4 1983009808
      %v689 = vunpack.c.0.s8 %v688
      %v690 = vperm.slane %v686, %v689
      %v691 = vrot.slane %v674, 4
      %v692 = vsel %vm619, %v691, %v672
      %v694 = vunpack.c.l.s4 1983009808
      %v695 = vunpack.c.0.s8 %v694
      %v696 = vperm.slane %v692, %v695
      %v697 = vrot.slane %v685, 4
      %v698 = vsel %vm619, %v697, %v679
      %v699 = vrot.slane %v679, 4
      %v700 = vsel %vm619, %v685, %v699
      %v702 = vunpack.c.l.s4 1934713408
      %v703 = vunpack.c.0.s8 %v702
      %v704 = vperm.slane %v698, %v703
      %v706 = vunpack.c.l.s4 1934713408
      %v707 = vunpack.c.0.s8 %v706
      %v708 = vperm.slane %v700, %v707
      %v709 = vrot.slane %v696, 4
      %v710 = vsel %vm619, %v709, %v690
      %v711 = vrot.slane %v690, 4
      %v712 = vsel %vm619, %v696, %v711
      %v714 = vunpack.c.l.s4 1934713408
      %v715 = vunpack.c.0.s8 %v714
      %v716 = vperm.slane %v710, %v715
      %v718 = vunpack.c.l.s4 1934713408
      %v719 = vunpack.c.0.s8 %v718
      %v720 = vperm.slane %v712, %v719
      %v721 = vrot.slane %v716, 4
      %v722 = vsel %vm619, %v721, %v704
      %v723 = vrot.slane %v704, 4
      %v724 = vsel %vm619, %v716, %v723
      %v725 = vrot.slane %v720, 4
      %v726 = vsel %vm619, %v725, %v708
      %v727 = vrot.slane %v708, 4
      %v728 = vsel %vm619, %v720, %v727
      %v729 = vpack.c.bf16 %v722, %v722
      %v730 = vpack.c.bf16 %v724, %v724
      %v731 = vpack.c.bf16 %v726, %v726
      %v732 = vpack.c.bf16 %v728, %v728
      %734 = vrot.lane.b32.xlu0 %v572, 120
      %v735 = vpop.permute.xlu0 %734
      %737 = vrot.lane.b32.xlu0 %v572, 112
      %v738 = vpop.permute.xlu0 %737
      %740 = vrot.lane.b32.xlu0 %v572, 104
      %v741 = vpop.permute.xlu0 %740
      %v743 = vrot.slane %v738, 4
      %v744 = vsel %vm619, %v743, %v572
      %v745 = vrot.slane %v572, 4
      %v746 = vsel %vm619, %v738, %v745
      %v748 = vunpack.c.l.s4 1983009808
      %v749 = vunpack.c.0.s8 %v748
      %v750 = vperm.slane %v744, %v749
      %v752 = vunpack.c.l.s4 1983009808
      %v753 = vunpack.c.0.s8 %v752
      %v754 = vperm.slane %v746, %v753
      %v755 = vrot.slane %v741, 4
      %v756 = vsel %vm619, %v755, %v735
      %v757 = vrot.slane %v735, 4
      %v758 = vsel %vm619, %v741, %v757
      %v760 = vunpack.c.l.s4 1983009808
      %v761 = vunpack.c.0.s8 %v760
      %v762 = vperm.slane %v756, %v761
      %v764 = vunpack.c.l.s4 1983009808
      %v765 = vunpack.c.0.s8 %v764
      %v766 = vperm.slane %v758, %v765
      %v767 = vrot.slane %v762, 4
      %v768 = vsel %vm619, %v767, %v750
      %v769 = vrot.slane %v750, 4
      %v770 = vsel %vm619, %v762, %v769
      %v772 = vunpack.c.l.s4 1934713408
      %v773 = vunpack.c.0.s8 %v772
      %v774 = vperm.slane %v768, %v773
      %v776 = vunpack.c.l.s4 1934713408
      %v777 = vunpack.c.0.s8 %v776
      %v778 = vperm.slane %v770, %v777
      %v779 = vrot.slane %v766, 4
      %v780 = vsel %vm619, %v779, %v754
      %v781 = vrot.slane %v754, 4
      %v782 = vsel %vm619, %v766, %v781
      %v784 = vunpack.c.l.s4 1934713408
      %v785 = vunpack.c.0.s8 %v784
      %v786 = vperm.slane %v780, %v785
      %v788 = vunpack.c.l.s4 1934713408
      %v789 = vunpack.c.0.s8 %v788
      %v790 = vperm.slane %v782, %v789
      %v791 = vrot.slane %v774, 4
      %v792 = vsel %vm619, 0.0, %v791
      %v793 = vrot.slane %v778, 4
      %v794 = vsel %vm619, 0.0, %v793
      %v795 = vrot.slane %v786, 4
      %v796 = vsel %vm619, 0.0, %v795
      %v797 = vrot.slane %v790, 4
      %v798 = vsel %vm619, 0.0, %v797
      %v799 = vsel %vm619, %v793, %v774
      %v801 = vunpack.c.l.s4 1983009808
      %v802 = vunpack.c.0.s8 %v801
      %v803 = vperm.slane %v799, %v802
      %v804 = vrot.slane %v794, 4
      %v805 = vsel %vm619, %v804, %v792
      %v807 = vunpack.c.l.s4 1983009808
      %v808 = vunpack.c.0.s8 %v807
      %v809 = vperm.slane %v805, %v808
      %v810 = vsel %vm619, %v797, %v786
      %v812 = vunpack.c.l.s4 1983009808
      %v813 = vunpack.c.0.s8 %v812
      %v814 = vperm.slane %v810, %v813
      %v815 = vrot.slane %v798, 4
      %v816 = vsel %vm619, %v815, %v796
      %v818 = vunpack.c.l.s4 1983009808
      %v819 = vunpack.c.0.s8 %v818
      %v820 = vperm.slane %v816, %v819
      %v821 = vrot.slane %v809, 4
      %v822 = vsel %vm619, %v821, %v803
      %v823 = vrot.slane %v803, 4
      %v824 = vsel %vm619, %v809, %v823
      %v826 = vunpack.c.l.s4 1934713408
      %v827 = vunpack.c.0.s8 %v826
      %v828 = vperm.slane %v822, %v827
      %v830 = vunpack.c.l.s4 1934713408
      %v831 = vunpack.c.0.s8 %v830
      %v832 = vperm.slane %v824, %v831
      %v833 = vrot.slane %v820, 4
      %v834 = vsel %vm619, %v833, %v814
      %v835 = vrot.slane %v814, 4
      %v836 = vsel %vm619, %v820, %v835
      %v838 = vunpack.c.l.s4 1934713408
      %v839 = vunpack.c.0.s8 %v838
      %v840 = vperm.slane %v834, %v839
      %v842 = vunpack.c.l.s4 1934713408
      %v843 = vunpack.c.0.s8 %v842
      %v844 = vperm.slane %v836, %v843
      %v845 = vrot.slane %v840, 4
      %v846 = vsel %vm619, %v845, %v828
      %v847 = vrot.slane %v828, 4
      %v848 = vsel %vm619, %v840, %v847
      %v849 = vrot.slane %v844, 4
      %v850 = vsel %vm619, %v849, %v832
      %v851 = vrot.slane %v832, 4
      %v852 = vsel %vm619, %v844, %v851
      %v853 = vpack.c.bf16 %v846, %v846
      %v854 = vpack.c.bf16 %v848, %v848
      %v855 = vpack.c.bf16 %v850, %v850
      %v856 = vpack.c.bf16 %v852, %v852
      %858 = vrot.lane.b32.xlu0 %v605, 120
      %v859 = vpop.permute.xlu0 %858
      %861 = vrot.lane.b32.xlu0 %v605, 112
      %v862 = vpop.permute.xlu0 %861
      %864 = vrot.lane.b32.xlu0 %v605, 104
      %v865 = vpop.permute.xlu0 %864
      %v867 = vrot.slane %v862, 4
      %v868 = vsel %vm619, %v867, %v605
      %v869 = vrot.slane %v605, 4
      %v870 = vsel %vm619, %v862, %v869
      %v872 = vunpack.c.l.s4 1983009808
      %v873 = vunpack.c.0.s8 %v872
      %v874 = vperm.slane %v868, %v873
      %v876 = vunpack.c.l.s4 1983009808
      %v877 = vunpack.c.0.s8 %v876
      %v878 = vperm.slane %v870, %v877
      %v879 = vrot.slane %v865, 4
      %v880 = vsel %vm619, %v879, %v859
      %v881 = vrot.slane %v859, 4
      %v882 = vsel %vm619, %v865, %v881
      %v884 = vunpack.c.l.s4 1983009808
      %v885 = vunpack.c.0.s8 %v884
      %v886 = vperm.slane %v880, %v885
      %v888 = vunpack.c.l.s4 1983009808
      %v889 = vunpack.c.0.s8 %v888
      %v890 = vperm.slane %v882, %v889
      %v891 = vrot.slane %v886, 4
      %v892 = vsel %vm619, %v891, %v874
      %v893 = vrot.slane %v874, 4
      %v894 = vsel %vm619, %v886, %v893
      %v896 = vunpack.c.l.s4 1934713408
      %v897 = vunpack.c.0.s8 %v896
      %v898 = vperm.slane %v892, %v897
      %v900 = vunpack.c.l.s4 1934713408
      %v901 = vunpack.c.0.s8 %v900
      %v902 = vperm.slane %v894, %v901
      %v903 = vrot.slane %v890, 4
      %v904 = vsel %vm619, %v903, %v878
      %v905 = vrot.slane %v878, 4
      %v906 = vsel %vm619, %v890, %v905
      %v908 = vunpack.c.l.s4 1934713408
      %v909 = vunpack.c.0.s8 %v908
      %v910 = vperm.slane %v904, %v909
      %v912 = vunpack.c.l.s4 1934713408
      %v913 = vunpack.c.0.s8 %v912
      %v914 = vperm.slane %v906, %v913
      %v915 = vrot.slane %v898, 4
      %v916 = vsel %vm619, 0.0, %v915
      %v917 = vrot.slane %v902, 4
      %v918 = vsel %vm619, 0.0, %v917
      %v919 = vrot.slane %v910, 4
      %v920 = vsel %vm619, 0.0, %v919
      %v921 = vrot.slane %v914, 4
      %v922 = vsel %vm619, 0.0, %v921
      %v923 = vsel %vm619, %v917, %v898
      %v925 = vunpack.c.l.s4 1983009808
      %v926 = vunpack.c.0.s8 %v925
      %v927 = vperm.slane %v923, %v926
      %v928 = vrot.slane %v918, 4
      %v929 = vsel %vm619, %v928, %v916
      %v931 = vunpack.c.l.s4 1983009808
      %v932 = vunpack.c.0.s8 %v931
      %v933 = vperm.slane %v929, %v932
      %v934 = vsel %vm619, %v921, %v910
      %v936 = vunpack.c.l.s4 1983009808
      %v937 = vunpack.c.0.s8 %v936
      %v938 = vperm.slane %v934, %v937
      %v939 = vrot.slane %v922, 4
      %v940 = vsel %vm619, %v939, %v920
      %v942 = vunpack.c.l.s4 1983009808
      %v943 = vunpack.c.0.s8 %v942
      %v944 = vperm.slane %v940, %v943
      %v945 = vrot.slane %v933, 4
      %v946 = vsel %vm619, %v945, %v927
      %v947 = vrot.slane %v927, 4
      %v948 = vsel %vm619, %v933, %v947
      %v950 = vunpack.c.l.s4 1934713408
      %v951 = vunpack.c.0.s8 %v950
      %v952 = vperm.slane %v946, %v951
      %v954 = vunpack.c.l.s4 1934713408
      %v955 = vunpack.c.0.s8 %v954
      %v956 = vperm.slane %v948, %v955
      %v957 = vrot.slane %v944, 4
      %v958 = vsel %vm619, %v957, %v938
      %v959 = vrot.slane %v938, 4
      %v960 = vsel %vm619, %v944, %v959
      %v962 = vunpack.c.l.s4 1934713408
      %v963 = vunpack.c.0.s8 %v962
      %v964 = vperm.slane %v958, %v963
      %v966 = vunpack.c.l.s4 1934713408
      %v967 = vunpack.c.0.s8 %v966
      %v968 = vperm.slane %v960, %v967
      %v969 = vrot.slane %v964, 4
      %v970 = vsel %vm619, %v969, %v952
      %v971 = vrot.slane %v952, 4
      %v972 = vsel %vm619, %v964, %v971
      %v973 = vrot.slane %v968, 4
      %v974 = vsel %vm619, %v973, %v956
      %v975 = vrot.slane %v956, 4
      %v976 = vsel %vm619, %v968, %v975
      %v977 = vpack.c.bf16 %v970, %v970
      %v978 = vpack.c.bf16 %v972, %v972
      %v979 = vpack.c.bf16 %v974, %v974
      %v980 = vpack.c.bf16 %v976, %v976
      %v982 = vperm.slane %v501, 0
      %vm984 = vcmask 64512
      %v986 = vsel %vm984, %v729, 0
      %v989 = vsel %vm984, %v853, 0
      %991 = vmatpush.bf16.xpose.msra.mxu0 0
      %992 = vmatpush.bf16.xpose.msra.mxu0 0
      %993 = vmatpush.bf16.xpose.msra.mxu0 0
      %994 = vmatpush.bf16.xpose.msra.mxu0 0
      %995 = vmatpush.bf16.xpose.msra.mxu0 0
      %996 = vmatpush.bf16.xpose.msra.mxu0 0
      %997 = vmatpush.bf16.xpose.msra.mxu0 0
      %998 = vmatpush.bf16.xpose.msra.mxu0 %v989
      %999 = vmatmul.bf16.gmra.mxu0 %v986
      %v1000 = vpop.f32.mrf.mxu0
      %v1001 = vadd.f32 %v982, %v1000
      %v1002 = vpop.f32.mrf.mxu0
      %1003 = vdwg.mxu0
      %v1005 = vsel %vm984, %v730, 0
      %v1008 = vsel %vm984, %v854, 0
      %1010 = vmatpush.bf16.xpose.msra.mxu0 0
      %1011 = vmatpush.bf16.xpose.msra.mxu0 0
      %1012 = vmatpush.bf16.xpose.msra.mxu0 0
      %1013 = vmatpush.bf16.xpose.msra.mxu0 0
      %1014 = vmatpush.bf16.xpose.msra.mxu0 0
      %1015 = vmatpush.bf16.xpose.msra.mxu0 0
      %1016 = vmatpush.bf16.xpose.msra.mxu0 0
      %1017 = vmatpush.bf16.xpose.msra.mxu0 %v1008
      %1018 = vmatmul.bf16.gmra.mxu0 %v1005
      %v1019 = vpop.f32.mrf.mxu0
      %v1020 = vadd.f32 %v982, %v1019
      %v1021 = vpop.f32.mrf.mxu0
      %1022 = vdwg.mxu0
      %v1024 = vsel %vm984, %v731, 0
      %v1027 = vsel %vm984, %v855, 0
      %1029 = vmatpush.bf16.xpose.msra.mxu0 0
      %1030 = vmatpush.bf16.xpose.msra.mxu0 0
      %1031 = vmatpush.bf16.xpose.msra.mxu0 0
      %1032 = vmatpush.bf16.xpose.msra.mxu0 0
      %1033 = vmatpush.bf16.xpose.msra.mxu0 0
      %1034 = vmatpush.bf16.xpose.msra.mxu0 0
      %1035 = vmatpush.bf16.xpose.msra.mxu0 0
      %1036 = vmatpush.bf16.xpose.msra.mxu0 %v1027
      %1037 = vmatmul.bf16.gmra.mxu0 %v1024
      %v1038 = vpop.f32.mrf.mxu0
      %v1039 = vadd.f32 %v982, %v1038
      %v1040 = vpop.f32.mrf.mxu0
      %1041 = vdwg.mxu0
      %v1043 = vsel %vm984, %v732, 0
      %v1046 = vsel %vm984, %v856, 0
      %1048 = vmatpush.bf16.xpose.msra.mxu0 0
      %1049 = vmatpush.bf16.xpose.msra.mxu0 0
      %1050 = vmatpush.bf16.xpose.msra.mxu0 0
      %1051 = vmatpush.bf16.xpose.msra.mxu0 0
      %1052 = vmatpush.bf16.xpose.msra.mxu0 0
      %1053 = vmatpush.bf16.xpose.msra.mxu0 0
      %1054 = vmatpush.bf16.xpose.msra.mxu0 0
      %1055 = vmatpush.bf16.xpose.msra.mxu0 %v1046
      %1056 = vmatmul.bf16.gmra.mxu0 %v1043
      %v1057 = vpop.f32.mrf.mxu0
      %v1058 = vadd.f32 %v982, %v1057
      %v1059 = vpop.f32.mrf.mxu0
      %1060 = vdwg.mxu0
      %v1061 = vsel %vm984, %v1001, -inf
      %1062 = vmax.xlane.f32.xlu0 %v1061
      %v1063 = vpop.xlane.xlu0 %1062
      %v1064 = vsel %vm984, %v1020, -inf
      %1065 = vmax.xlane.f32.xlu0 %v1064
      %v1066 = vpop.xlane.xlu0 %1065
      %v1067 = vsel %vm984, %v1039, -inf
      %1068 = vmax.xlane.f32.xlu0 %v1067
      %v1069 = vpop.xlane.xlu0 %1068
      %v1070 = vsel %vm984, %v1058, -inf
      %1071 = vmax.xlane.f32.xlu0 %v1070
      %v1072 = vpop.xlane.xlu0 %1071
      %v1073 = vsub.f32 %v1001, %v1063
      %v1074 = vsub.f32 %v1020, %v1066
      %v1075 = vsub.f32 %v1039, %v1069
      %v1076 = vsub.f32 %v1058, %v1072
      %v1077 = vmul.f32 %v1073, 1.442695
      %v1078 = vpow.pop %v1077
      %v1079 = vmul.f32 %v1074, 1.442695
      %v1080 = vpow.pop %v1079
      %v1081 = vmul.f32 %v1075, 1.442695
      %v1082 = vpow.pop %v1081
      %v1083 = vmul.f32 %v1076, 1.442695
      %v1084 = vpow.pop %v1083
      %v1085 = vsel %vm984, %v1078, 0.0
      %1086 = vadd.xlane.f32.xlu0 %v1085
      %v1087 = vpop.xlane.xlu0 %1086
      %v1088 = vsel %vm984, %v1080, 0.0
      %1089 = vadd.xlane.f32.xlu0 %v1088
      %v1090 = vpop.xlane.xlu0 %1089
      %v1091 = vsel %vm984, %v1082, 0.0
      %1092 = vadd.xlane.f32.xlu0 %v1091
      %v1093 = vpop.xlane.xlu0 %1092
      %v1094 = vsel %vm984, %v1084, 0.0
      %1095 = vadd.xlane.f32.xlu0 %v1094
      %v1096 = vpop.xlane.xlu0 %1095
      %v1097 = vrcp.pop %v1087
      %v1098 = vrcp.pop %v1090
      %v1099 = vrcp.pop %v1093
      %v1100 = vrcp.pop %v1096
      %v1101 = vmul.f32 %v1078, %v1097
      %v1102 = vmul.f32 %v1080, %v1098
      %v1103 = vmul.f32 %v1082, %v1099
      %v1104 = vmul.f32 %v1084, %v1100
      %v1105 = vpack.c.bf16 %v1101, %v1101
      %v1106 = vpack.c.bf16 %v1102, %v1102
      %v1107 = vpack.c.bf16 %v1103, %v1103
      %v1108 = vpack.c.bf16 %v1104, %v1104
      %v1110 = vsel %vm984, %v1105, 0
      %vm1112 = vcmask 1043456
      %v1114 = vsel %vm1112, %v977, 0
      %1116 = vmatpush.bf16.msra.mxu0 0
      %1117 = vmatpush.bf16.msra.mxu0 0
      %1118 = vmatpush.bf16.msra.mxu0 0
      %1119 = vmatpush.bf16.msra.mxu0 0
      %1120 = vmatpush.bf16.msra.mxu0 0
      %1121 = vmatpush.bf16.msra.mxu0 0
      %1122 = vmatpush.bf16.msra.mxu0 0
      %1123 = vmatpush.bf16.msra.mxu0 %v1114
      %1124 = vmatmul.bf16.gmra.mxu0 %v1110
      %v1125 = vpop.f32.mrf.mxu0
      %v1126 = vadd.f32 0.0, %v1125
      %v1127 = vpop.f32.mrf.mxu0
      %1128 = vdwg.mxu0
      %v1130 = vsel %vm984, %v1106, 0
      %v1133 = vsel %vm1112, %v978, 0
      %1135 = vmatpush.bf16.msra.mxu0 0
      %1136 = vmatpush.bf16.msra.mxu0 0
      %1137 = vmatpush.bf16.msra.mxu0 0
      %1138 = vmatpush.bf16.msra.mxu0 0
      %1139 = vmatpush.bf16.msra.mxu0 0
      %1140 = vmatpush.bf16.msra.mxu0 0
      %1141 = vmatpush.bf16.msra.mxu0 0
      %1142 = vmatpush.bf16.msra.mxu0 %v1133
      %1143 = vmatmul.bf16.gmra.mxu0 %v1130
      %v1144 = vpop.f32.mrf.mxu0
      %v1145 = vadd.f32 0.0, %v1144
      %v1146 = vpop.f32.mrf.mxu0
      %1147 = vdwg.mxu0
      %v1149 = vsel %vm984, %v1107, 0
      %v1152 = vsel %vm1112, %v979, 0
      %1154 = vmatpush.bf16.msra.mxu0 0
      %1155 = vmatpush.bf16.msra.mxu0 0
      %1156 = vmatpush.bf16.msra.mxu0 0
      %1157 = vmatpush.bf16.msra.mxu0 0
      %1158 = vmatpush.bf16.msra.mxu0 0
      %1159 = vmatpush.bf16.msra.mxu0 0
      %1160 = vmatpush.bf16.msra.mxu0 0
      %1161 = vmatpush.bf16.msra.mxu0 %v1152
      %1162 = vmatmul.bf16.gmra.mxu0 %v1149
      %v1163 = vpop.f32.mrf.mxu0
      %v1164 = vadd.f32 0.0, %v1163
      %v1165 = vpop.f32.mrf.mxu0
      %1166 = vdwg.mxu0
      %v1168 = vsel %vm984, %v1108, 0
      %v1171 = vsel %vm1112, %v980, 0
      %1173 = vmatpush.bf16.msra.mxu0 0
      %1174 = vmatpush.bf16.msra.mxu0 0
      %1175 = vmatpush.bf16.msra.mxu0 0
      %1176 = vmatpush.bf16.msra.mxu0 0
      %1177 = vmatpush.bf16.msra.mxu0 0
      %1178 = vmatpush.bf16.msra.mxu0 0
      %1179 = vmatpush.bf16.msra.mxu0 0
      %1180 = vmatpush.bf16.msra.mxu0 %v1171
      %1181 = vmatmul.bf16.gmra.mxu0 %v1168
      %v1182 = vpop.f32.mrf.mxu0
      %v1183 = vadd.f32 0.0, %v1182
      %v1184 = vpop.f32.mrf.mxu0
      %1185 = vdwg.mxu0
      %v1186 = vrot.slane %v1164, 4
      %v1187 = vsel %vm619, %v1186, %v1126
      %v1188 = vrot.slane %v1126, 4
      %v1189 = vsel %vm619, %v1164, %v1188
      %v1191 = vunpack.c.l.s4 1983009808
      %v1192 = vunpack.c.0.s8 %v1191
      %v1193 = vperm.slane %v1187, %v1192
      %v1195 = vunpack.c.l.s4 1983009808
      %v1196 = vunpack.c.0.s8 %v1195
      %v1197 = vperm.slane %v1189, %v1196
      %v1198 = vrot.slane %v1183, 4
      %v1199 = vsel %vm619, %v1198, %v1145
      %v1200 = vrot.slane %v1145, 4
      %v1201 = vsel %vm619, %v1183, %v1200
      %v1203 = vunpack.c.l.s4 1983009808
      %v1204 = vunpack.c.0.s8 %v1203
      %v1205 = vperm.slane %v1199, %v1204
      %v1207 = vunpack.c.l.s4 1983009808
      %v1208 = vunpack.c.0.s8 %v1207
      %v1209 = vperm.slane %v1201, %v1208
      %v1210 = vrot.slane %v1205, 4
      %v1211 = vsel %vm619, %v1210, %v1193
      %v1212 = vrot.slane %v1193, 4
      %v1213 = vsel %vm619, %v1205, %v1212
      %v1215 = vunpack.c.l.s4 1934713408
      %v1216 = vunpack.c.0.s8 %v1215
      %v1217 = vperm.slane %v1211, %v1216
      %v1219 = vunpack.c.l.s4 1934713408
      %v1220 = vunpack.c.0.s8 %v1219
      %v1221 = vperm.slane %v1213, %v1220
      %v1222 = vrot.slane %v1209, 4
      %v1223 = vsel %vm619, %v1222, %v1197
      %v1224 = vrot.slane %v1197, 4
      %v1225 = vsel %vm619, %v1209, %v1224
      %v1227 = vunpack.c.l.s4 1934713408
      %v1228 = vunpack.c.0.s8 %v1227
      %v1229 = vperm.slane %v1223, %v1228
      %v1231 = vunpack.c.l.s4 1934713408
      %v1232 = vunpack.c.0.s8 %v1231
      %v1233 = vperm.slane %v1225, %v1232
      %v1234 = vrot.slane %v1217, 4
      %v1235 = vsel %vm619, 0.0, %v1234
      %v1236 = vrot.slane %v1221, 4
      %v1237 = vsel %vm619, 0.0, %v1236
      %v1238 = vrot.slane %v1229, 4
      %v1239 = vsel %vm619, 0.0, %v1238
      %v1240 = vrot.slane %v1233, 4
      %v1241 = vsel %vm619, 0.0, %v1240
      %v1242 = vsel %vm619, %v1236, %v1217
      %v1244 = vunpack.c.l.s4 1983009808
      %v1245 = vunpack.c.0.s8 %v1244
      %v1246 = vperm.slane %v1242, %v1245
      %v1247 = vrot.slane %v1237, 4
      %v1248 = vsel %vm619, %v1247, %v1235
      %v1250 = vunpack.c.l.s4 1983009808
      %v1251 = vunpack.c.0.s8 %v1250
      %v1252 = vperm.slane %v1248, %v1251
      %v1253 = vsel %vm619, %v1240, %v1229
      %v1255 = vunpack.c.l.s4 1983009808
      %v1256 = vunpack.c.0.s8 %v1255
      %v1257 = vperm.slane %v1253, %v1256
      %v1258 = vrot.slane %v1241, 4
      %v1259 = vsel %vm619, %v1258, %v1239
      %v1261 = vunpack.c.l.s4 1983009808
      %v1262 = vunpack.c.0.s8 %v1261
      %v1263 = vperm.slane %v1259, %v1262
      %v1264 = vrot.slane %v1252, 4
      %v1265 = vsel %vm619, %v1264, %v1246
      %v1266 = vrot.slane %v1246, 4
      %v1267 = vsel %vm619, %v1252, %v1266
      %v1269 = vunpack.c.l.s4 1934713408
      %v1270 = vunpack.c.0.s8 %v1269
      %v1271 = vperm.slane %v1265, %v1270
      %v1273 = vunpack.c.l.s4 1934713408
      %v1274 = vunpack.c.0.s8 %v1273
      %v1275 = vperm.slane %v1267, %v1274
      %v1276 = vrot.slane %v1263, 4
      %v1277 = vsel %vm619, %v1276, %v1257
      %v1278 = vrot.slane %v1257, 4
      %v1279 = vsel %vm619, %v1263, %v1278
      %v1281 = vunpack.c.l.s4 1934713408
      %v1282 = vunpack.c.0.s8 %v1281
      %v1283 = vperm.slane %v1277, %v1282
      %v1285 = vunpack.c.l.s4 1934713408
      %v1286 = vunpack.c.0.s8 %v1285
      %v1287 = vperm.slane %v1279, %v1286
      %v1288 = vrot.slane %v1283, 4
      %v1289 = vsel %vm619, %v1288, %v1271
      %v1290 = vrot.slane %v1271, 4
      %v1291 = vsel %vm619, %v1283, %v1290
      %v1292 = vrot.slane %v1287, 4
      %v1293 = vsel %vm619, %v1292, %v1275
      %v1294 = vrot.slane %v1275, 4
      %v1295 = vsel %vm619, %v1287, %v1294
      %1297 = vrot.lane.b32.xlu0 %v1291, 8
      %v1298 = vpop.permute.xlu0 %1297
      %1301 = vrot.lane.b32.xlu0 %v1293, 16
      %v1302 = vpop.permute.xlu0 %1301
      %1305 = vrot.lane.b32.xlu0 %v1295, 24
      %v1306 = vpop.permute.xlu0 %1305
      %v1308 = vsel %vm984, %v1289, %v1298
      %vm1309 = vcmask 130048
      %v1310 = vsel %vm1309, %v1308, %v1302
      %vm1311 = vcmask 195584
      %v1312 = vsel %vm1311, %v1310, %v1306
      %v1313 = vpack.c.bf16 %v1312, %v1312
      %v1314 = vld [vmem:[%s9] sm:$0xf]
      %v1315 = vld [vmem:[%s9 + $0x4] sm:$0xf]
      %v1316 = vld [vmem:[%s9 + $0x8] sm:$0xf]
      %v1317 = vld [vmem:[%s9 + $0xc] sm:$0xf]
      %v1318 = vld [vmem:[%s10] sm:$0x1]
      %v1320 = vperm.slane %v1318, 0
      %v1326 = vunpack.c.l.b16 %v1314
      %v1327 = vunpack.c.l.b16 %v1315
      %v1328 = vunpack.c.l.b16 %v1316
      %v1329 = vunpack.c.l.b16 %v1317
      %v1330 = vpack.c.b16 %v1327, %v1326
      %v1331 = vpack.c.b16 %v1329, %v1328
      %v1335 = vsel %vm522, %v1313, 0
      %1337 = vmatpush.bf16.msra.mxu0 0
      %1338 = vmatpush.bf16.msra.mxu0 0
      %1339 = vmatpush.bf16.msra.mxu0 0
      %1340 = vmatpush.bf16.msra.mxu0 0
      %1341 = vmatpush.bf16.msra.mxu0 0
      %1342 = vmatpush.bf16.msra.mxu0 0
      %1343 = vmatpush.bf16.msra.mxu0 %v1331
      %1344 = vmatpush.bf16.msra.mxu0 %v1330
      %1345 = vmatmul.bf16.gmra.mxu0 %v1335
      %v1346 = vpop.f32.mrf.mxu0
      %v1347 = vadd.f32 %v1320, %v1346
      %v1348 = vpop.f32.mrf.mxu0
      %1349 = vdwg.mxu0
      %v1350 = vunpack.c.l.bf16 %v499
      %v1351 = vadd.f32 %v1350, %v1347
      %v1352 = vsel %vm522, %v1351, 0.0
      %1353 = vadd.xlane.f32.xlu0 %v1352
      %v1354 = vpop.xlane.xlu0 %1353
      %v1355 = vrcp.pop 32.0
      %v1356 = vmul.f32 32.0, %v1355
      %v1357 = vsub.f32 1.0, %v1356
      %v1358 = vmul.f32 %v1355, %v1357
      %v1359 = vadd.f32 %v1355, %v1358
      %vm1360 = vweird.f32 %v1355
      %v1361 = vsel %vm1360, %v1355, %v1359
      %v1362 = vmul.f32 %v1354, %v1361
      %v1363 = vsub.f32 %v1351, %v1362
      %v1364 = vmul.f32 %v1363, %v1363
      %v1365 = vsel %vm522, %v1364, 0.0
      %1366 = vadd.xlane.f32.xlu0 %v1365
      %v1367 = vpop.xlane.xlu0 %1366
      %v1368 = vmul.f32 %v1367, %v1361
      %v1369 = vadd.f32 %v1368, 1e-05
      %v1370 = vrsqrt.pop %v1369
      %v1371 = vmul.f32 %v1370, %v1369
      %v1372 = vmul.f32 %v1371, %v1370
      %v1373 = vmul.f32 0.5, %v1372
      %v1374 = vsub.f32 1.5, %v1373
      %v1375 = vmul.f32 %v1370, %v1374
      %vm1376 = vweird.f32 %v1369
      %vm1377 = vweird.f32 %v1370
      %vm1378 = vmor %vm1376, %vm1377
      %v1379 = vsel %vm1378, %v1370, %v1375
      %v1380 = vmul.f32 %v1363, %v1379
      %v1381 = vld [vmem:[%s11] sm:$0x1]
      %v1383 = vperm.slane %v1381, 0
      %v1385 = vmul.f32 %v1380, %v1383
      %v1386 = vld [vmem:[%s12] sm:$0x1]
      %v1388 = vperm.slane %v1386, 0
      %v1390 = vadd.f32 %v1385, %v1388
      %v1391 = vpack.c.bf16 %v1390, %v1390
      %vm1392 = vcmask 257024
      %1393 = vst.msk [vmem:[%s497] sm:$0xf] %vm1392, %v1391
      %p1394 = scmp.lt.s32.totalorder %s28, 1
      %s1395 = scalar_select %p1394, %s28, 1
      %p1396 = scmp.lt.s32.totalorder %s29, 0
      %s1397 = scalar_select %p1396, %s29, 0
      %s1398 = sadd.s32 %s1397, %s1395
      %s1399 = smul.addr %s1398, 4
      %s1400 = scalar_lea.vmem %s13, %s1399
      // Predicated region
      $region73: #{_lambda_.11} parent=71 // pred_check
        %p1401 = pneg %p346
      $region74: #{_lambda_.11} parent=71 // pred_check_branch
        %1403 = sbr.rel (%p1401) target = $region76
      $region75: #{_lambda_.11} parent=71 // pred_region
        _
      $region76: #{_lambda_.11} parent=71 // pred_fallthru
        _
    $region72: #{_lambda_.11} parent=5 // pred_fallthru
      _
    %p1404 = scmp.le.s32.totalorder 2, %s19
    // Predicated region
    $region77: #{_lambda_.11} parent=5 // pred_check
      %p1405 = pneg %p1404
    $region78: #{_lambda_.11} parent=5 // pred_check_branch
      %1407 = sbr.rel (%p1405) target = $region80
    $region79: #{_lambda_.11} parent=5 // pred_region
      %s1408 = ssub.s32 %s19, 2
      // Predicated region
      $region81: #{_lambda_.11} parent=79 // pred_check
        %p1409 = pneg %p352
      $region82: #{_lambda_.11} parent=79 // pred_check_branch
        %1411 = sbr.rel (%p1409) target = $region84
      $region83: #{_lambda_.11} parent=79 // pred_region
        %p1412 = scmp.lt.s32.totalorder %s30, 1
        %s1413 = scalar_select %p1412, %s30, 1
        %p1414 = scmp.lt.s32.totalorder %s31, 0
        %s1415 = scalar_select %p1414, %s31, 0
        %s1416 = sadd.s32 %s1415, %s1413
        %s1417 = smul.addr %s1416, 4
        %s1418 = scalar_lea.vmem %s13, %s1417
      $region84: #{_lambda_.11} parent=79 // pred_fallthru
        _
    $region80: #{_lambda_.11} parent=5 // pred_fallthru
      _
  $region6: #{_lambda_.11} parent=0 // loop_footer
    %s23 = sadd.s32 1, %s19
  $region7: #{_lambda_.11} parent=0 // loop_footer_branch
    %18 = sbr.rel target = $region3
  $region8: #{_lambda_.11} parent=0 // loop_exit
    _

// kernel: _lambda_.15
$region0: #{_lambda_.15}
  #allocation0 [shape = 'u32[]', space=smem, size = 0x4, offset = 0x4, fixed_abs, tag = 'smem constant byte address 0x4 - core index']
  #allocation1 [shape = 'u32[72,128]{1,0:T(1,128)}', space=vmem, size = 0x9000, scoped, tag = 'internal scratch']
  %s0 = inlined_call_operand.vmem [shape: bf16[2,8,32], index: 0, kind: input, shape index: {}, may-alias: {0,1}]
  %s1 = inlined_call_operand.vmem [shape: bf16[2,8,32], index: 1, kind: input, shape index: {}, may-alias: {0,1}]
  %s2 = inlined_call_operand.vmem [shape: f32[2,1,8], index: 2, kind: input, shape index: {}]
  %s3 = inlined_call_operand.vmem [shape: bf16[32,32], index: 3, kind: input, shape index: {}]
  %s4 = inlined_call_operand.vmem [shape: f32[1,32], index: 4, kind: input, shape index: {}]
  %s5 = inlined_call_operand.vmem [shape: bf16[32,32], index: 5, kind: input, shape index: {}]
  %s6 = inlined_call_operand.vmem [shape: f32[1,32], index: 6, kind: input, shape index: {}]
  %s7 = inlined_call_operand.vmem [shape: bf16[32,32], index: 7, kind: input, shape index: {}]
  %s8 = inlined_call_operand.vmem [shape: f32[1,32], index: 8, kind: input, shape index: {}]
  %s9 = inlined_call_operand.vmem [shape: bf16[32,32], index: 9, kind: input, shape index: {}]
  %s10 = inlined_call_operand.vmem [shape: f32[1,32], index: 10, kind: input, shape index: {}]
  %s11 = inlined_call_operand.vmem [shape: f32[1,32], index: 11, kind: input, shape index: {}]
  %s12 = inlined_call_operand.vmem [shape: f32[1,32], index: 12, kind: input, shape index: {}]
  %s13 = inlined_call_operand.vmem [shape: bf16[2,8,32], index: 13, kind: output, shape index: {}]
  %s14 = sld [smem:[#allocation0]]
  $region85: #{_lambda_.15} parent=0
    _
  %s16 = ssub.s32 1, %s14
  %s17 = scalar_select 0, %s16, %s14
  loop: start=0, step=1, limit=4
  $region2: #{_lambda_.15} parent=0 // loop_pre_header
    _
  $region3: #{_lambda_.15} parent=0 // loop_header
    %s19 = sphi 0, %s23
    %p20 = scmp.ge.s32.totalorder %s19, 4
    %s26 = sphi 0, %s38
    %s27 = sphi 0, %s34
    %s28 = sphi 0, %s26
    %s29 = sphi 0, %s27
    %s30 = sphi 0, %s28
    %s31 = sphi 0, %s29
    %s43 = sphi 0, %s45
    %s46 = sphi 0, %s43
    %s47 = sphi 0, %s46
    %s63 = sphi 0, %s47
    %s69 = sphi 0, %s71
    %s72 = sphi 0, %s69
    %s73 = sphi 0, %s72
    %s89 = sphi 0, %s73
    %s95 = sphi 0, %s97
    %s98 = sphi 0, %s95
    %s99 = sphi 0, %s98
    %s115 = sphi 0, %s99
    %s119 = sphi 0, %s119
    %s121 = sphi 0, %s119
    %s122 = sphi 0, %s121
    %s136 = sphi 0, %s122
    %s140 = sphi 0, %s140
    %s142 = sphi 0, %s140
    %s143 = sphi 0, %s142
    %s157 = sphi 0, %s143
    %s161 = sphi 0, %s161
    %s163 = sphi 0, %s161
    %s164 = sphi 0, %s163
    %s178 = sphi 0, %s164
    %s182 = sphi 0, %s182
    %s184 = sphi 0, %s182
    %s185 = sphi 0, %s184
    %s199 = sphi 0, %s185
    %s203 = sphi 0, %s203
    %s205 = sphi 0, %s203
    %s206 = sphi 0, %s205
    %s220 = sphi 0, %s206
    %s224 = sphi 0, %s224
    %s226 = sphi 0, %s224
    %s227 = sphi 0, %s226
    %s241 = sphi 0, %s227
    %s245 = sphi 0, %s245
    %s247 = sphi 0, %s245
    %s248 = sphi 0, %s247
    %s262 = sphi 0, %s248
    %s266 = sphi 0, %s266
    %s268 = sphi 0, %s266
    %s269 = sphi 0, %s268
    %s283 = sphi 0, %s269
    %s287 = sphi 0, %s287
    %s289 = sphi 0, %s287
    %s290 = sphi 0, %s289
    %s304 = sphi 0, %s290
    %s308 = sphi 0, %s308
    %s310 = sphi 0, %s308
    %s311 = sphi 0, %s310
    %s325 = sphi 0, %s311
    %s333 = sphi 0, %s335
    %s336 = sphi 0, %s333
    %s337 = sphi 0, %s336
    %s353 = sphi 0, %s337
  $region4: #{_lambda_.15} parent=0 // loop_header_branch
    %22 = sbr.rel (%p20) target = $region8
  $region5: #{_lambda_.15} parent=0 // loop_body
    %s24 = ssub.s32 %s19, 1
    %s25 = ssub.s32 %s19, 2
    %s32 = sadd.s32 1, %s27
    %p33 = scmp.ge.s32.totalorder %s32, 1
    %s34 = scalar_select %p33, 0, %s32
    %s35 = sadd.s32 1, %s26
    %s36 = scalar_select %p33, %s35, %s26
    %p37 = scmp.ge.s32.totalorder %s36, 2
    %s38 = scalar_select %p37, 0, %s36
    %s39 = ssub.s32 %s26, %s38
    %s40 = ssub.s32 %s27, %s34
    %s41 = sor.u32 %s39, %s40
    %p42 = scmp.eq.s32.totalorder %s41, 0
    %s44 = sadd.s32 %s43, 1
    %s45 = scalar_select %p42, %s43, %s44
    %p48 = pneg %p42
    %p49 = scmp.eq.s32.totalorder %s19, 1
    %p50 = por %p48, %p49
    %p51 = scmp.ne.s32.totalorder %s43, %s46
    %p52 = scmp.eq.s32.totalorder %s19, 0
    %p53 = por %p51, %p52
    %p54 = scmp.ne.s32.totalorder %s43, %s46
    %p55 = scmp.eq.s32.totalorder %s24, 1
    %p56 = por %p54, %p55
    %p57 = scmp.ne.s32.totalorder %s46, %s47
    %p58 = scmp.eq.s32.totalorder %s24, 0
    %p59 = por %p57, %p58
    %p60 = scmp.ne.s32.totalorder %s46, %s47
    %p61 = scmp.eq.s32.totalorder %s25, 1
    %p62 = por %p60, %p61
    %p64 = scmp.ne.s32.totalorder %s47, %s63
    %p65 = scmp.eq.s32.totalorder %s25, 0
    %p66 = por %p64, %p65
    %s67 = ssub.s32 %s26, %s38
    %p68 = scmp.eq.s32.totalorder %s67, 0
    %s70 = sadd.s32 %s69, 1
    %s71 = scalar_select %p68, %s69, %s70
    %p74 = pneg %p68
    %p75 = scmp.eq.s32.totalorder %s19, 1
    %p76 = por %p74, %p75
    %p77 = scmp.ne.s32.totalorder %s69, %s72
    %p78 = scmp.eq.s32.totalorder %s19, 0
    %p79 = por %p77, %p78
    %p80 = scmp.ne.s32.totalorder %s69, %s72
    %p81 = scmp.eq.s32.totalorder %s24, 1
    %p82 = por %p80, %p81
    %p83 = scmp.ne.s32.totalorder %s72, %s73
    %p84 = scmp.eq.s32.totalorder %s24, 0
    %p85 = por %p83, %p84
    %p86 = scmp.ne.s32.totalorder %s72, %s73
    %p87 = scmp.eq.s32.totalorder %s25, 1
    %p88 = por %p86, %p87
    %p90 = scmp.ne.s32.totalorder %s73, %s89
    %p91 = scmp.eq.s32.totalorder %s25, 0
    %p92 = por %p90, %p91
    %s93 = ssub.s32 %s26, %s38
    %p94 = scmp.eq.s32.totalorder %s93, 0
    %s96 = sadd.s32 %s95, 1
    %s97 = scalar_select %p94, %s95, %s96
    %p100 = pneg %p94
    %p101 = scmp.eq.s32.totalorder %s19, 1
    %p102 = por %p100, %p101
    %p103 = scmp.ne.s32.totalorder %s95, %s98
    %p104 = scmp.eq.s32.totalorder %s19, 0
    %p105 = por %p103, %p104
    %p106 = scmp.ne.s32.totalorder %s95, %s98
    %p107 = scmp.eq.s32.totalorder %s24, 1
    %p108 = por %p106, %p107
    %p109 = scmp.ne.s32.totalorder %s98, %s99
    %p110 = scmp.eq.s32.totalorder %s24, 0
    %p111 = por %p109, %p110
    %p112 = scmp.ne.s32.totalorder %s98, %s99
    %p113 = scmp.eq.s32.totalorder %s25, 1
    %p114 = por %p112, %p113
    %p116 = scmp.ne.s32.totalorder %s99, %s115
    %p117 = scmp.eq.s32.totalorder %s25, 0
    %p118 = por %p116, %p117
    %s120 = sadd.s32 %s119, 1
    %p123 = scmp.eq.s32.totalorder %s19, 1
    %p124 = scmp.ne.s32.totalorder %s119, %s121
    %p125 = scmp.eq.s32.totalorder %s19, 0
    %p126 = por %p124, %p125
    %p127 = scmp.ne.s32.totalorder %s119, %s121
    %p128 = scmp.eq.s32.totalorder %s24, 1
    %p129 = por %p127, %p128
    %p130 = scmp.ne.s32.totalorder %s121, %s122
    %p131 = scmp.eq.s32.totalorder %s24, 0
    %p132 = por %p130, %p131
    %p133 = scmp.ne.s32.totalorder %s121, %s122
    %p134 = scmp.eq.s32.totalorder %s25, 1
    %p135 = por %p133, %p134
    %p137 = scmp.ne.s32.totalorder %s122, %s136
    %p138 = scmp.eq.s32.totalorder %s25, 0
    %p139 = por %p137, %p138
    %s141 = sadd.s32 %s140, 1
    %p144 = scmp.eq.s32.totalorder %s19, 1
    %p145 = scmp.ne.s32.totalorder %s140, %s142
    %p146 = scmp.eq.s32.totalorder %s19, 0
    %p147 = por %p145, %p146
    %p148 = scmp.ne.s32.totalorder %s140, %s142
    %p149 = scmp.eq.s32.totalorder %s24, 1
    %p150 = por %p148, %p149
    %p151 = scmp.ne.s32.totalorder %s142, %s143
    %p152 = scmp.eq.s32.totalorder %s24, 0
    %p153 = por %p151, %p152
    %p154 = scmp.ne.s32.totalorder %s142, %s143
    %p155 = scmp.eq.s32.totalorder %s25, 1
    %p156 = por %p154, %p155
    %p158 = scmp.ne.s32.totalorder %s143, %s157
    %p159 = scmp.eq.s32.totalorder %s25, 0
    %p160 = por %p158, %p159
    %s162 = sadd.s32 %s161, 1
    %p165 = scmp.eq.s32.totalorder %s19, 1
    %p166 = scmp.ne.s32.totalorder %s161, %s163
    %p167 = scmp.eq.s32.totalorder %s19, 0
    %p168 = por %p166, %p167
    %p169 = scmp.ne.s32.totalorder %s161, %s163
    %p170 = scmp.eq.s32.totalorder %s24, 1
    %p171 = por %p169, %p170
    %p172 = scmp.ne.s32.totalorder %s163, %s164
    %p173 = scmp.eq.s32.totalorder %s24, 0
    %p174 = por %p172, %p173
    %p175 = scmp.ne.s32.totalorder %s163, %s164
    %p176 = scmp.eq.s32.totalorder %s25, 1
    %p177 = por %p175, %p176
    %p179 = scmp.ne.s32.totalorder %s164, %s178
    %p180 = scmp.eq.s32.totalorder %s25, 0
    %p181 = por %p179, %p180
    %s183 = sadd.s32 %s182, 1
    %p186 = scmp.eq.s32.totalorder %s19, 1
    %p187 = scmp.ne.s32.totalorder %s182, %s184
    %p188 = scmp.eq.s32.totalorder %s19, 0
    %p189 = por %p187, %p188
    %p190 = scmp.ne.s32.totalorder %s182, %s184
    %p191 = scmp.eq.s32.totalorder %s24, 1
    %p192 = por %p190, %p191
    %p193 = scmp.ne.s32.totalorder %s184, %s185
    %p194 = scmp.eq.s32.totalorder %s24, 0
    %p195 = por %p193, %p194
    %p196 = scmp.ne.s32.totalorder %s184, %s185
    %p197 = scmp.eq.s32.totalorder %s25, 1
    %p198 = por %p196, %p197
    %p200 = scmp.ne.s32.totalorder %s185, %s199
    %p201 = scmp.eq.s32.totalorder %s25, 0
    %p202 = por %p200, %p201
    %s204 = sadd.s32 %s203, 1
    %p207 = scmp.eq.s32.totalorder %s19, 1
    %p208 = scmp.ne.s32.totalorder %s203, %s205
    %p209 = scmp.eq.s32.totalorder %s19, 0
    %p210 = por %p208, %p209
    %p211 = scmp.ne.s32.totalorder %s203, %s205
    %p212 = scmp.eq.s32.totalorder %s24, 1
    %p213 = por %p211, %p212
    %p214 = scmp.ne.s32.totalorder %s205, %s206
    %p215 = scmp.eq.s32.totalorder %s24, 0
    %p216 = por %p214, %p215
    %p217 = scmp.ne.s32.totalorder %s205, %s206
    %p218 = scmp.eq.s32.totalorder %s25, 1
    %p219 = por %p217, %p218
    %p221 = scmp.ne.s32.totalorder %s206, %s220
    %p222 = scmp.eq.s32.totalorder %s25, 0
    %p223 = por %p221, %p222
    %s225 = sadd.s32 %s224, 1
    %p228 = scmp.eq.s32.totalorder %s19, 1
    %p229 = scmp.ne.s32.totalorder %s224, %s226
    %p230 = scmp.eq.s32.totalorder %s19, 0
    %p231 = por %p229, %p230
    %p232 = scmp.ne.s32.totalorder %s224, %s226
    %p233 = scmp.eq.s32.totalorder %s24, 1
    %p234 = por %p232, %p233
    %p235 = scmp.ne.s32.totalorder %s226, %s227
    %p236 = scmp.eq.s32.totalorder %s24, 0
    %p237 = por %p235, %p236
    %p238 = scmp.ne.s32.totalorder %s226, %s227
    %p239 = scmp.eq.s32.totalorder %s25, 1
    %p240 = por %p238, %p239
    %p242 = scmp.ne.s32.totalorder %s227, %s241
    %p243 = scmp.eq.s32.totalorder %s25, 0
    %p244 = por %p242, %p243
    %s246 = sadd.s32 %s245, 1
    %p249 = scmp.eq.s32.totalorder %s19, 1
    %p250 = scmp.ne.s32.totalorder %s245, %s247
    %p251 = scmp.eq.s32.totalorder %s19, 0
    %p252 = por %p250, %p251
    %p253 = scmp.ne.s32.totalorder %s245, %s247
    %p254 = scmp.eq.s32.totalorder %s24, 1
    %p255 = por %p253, %p254
    %p256 = scmp.ne.s32.totalorder %s247, %s248
    %p257 = scmp.eq.s32.totalorder %s24, 0
    %p258 = por %p256, %p257
    %p259 = scmp.ne.s32.totalorder %s247, %s248
    %p260 = scmp.eq.s32.totalorder %s25, 1
    %p261 = por %p259, %p260
    %p263 = scmp.ne.s32.totalorder %s248, %s262
    %p264 = scmp.eq.s32.totalorder %s25, 0
    %p265 = por %p263, %p264
    %s267 = sadd.s32 %s266, 1
    %p270 = scmp.eq.s32.totalorder %s19, 1
    %p271 = scmp.ne.s32.totalorder %s266, %s268
    %p272 = scmp.eq.s32.totalorder %s19, 0
    %p273 = por %p271, %p272
    %p274 = scmp.ne.s32.totalorder %s266, %s268
    %p275 = scmp.eq.s32.totalorder %s24, 1
    %p276 = por %p274, %p275
    %p277 = scmp.ne.s32.totalorder %s268, %s269
    %p278 = scmp.eq.s32.totalorder %s24, 0
    %p279 = por %p277, %p278
    %p280 = scmp.ne.s32.totalorder %s268, %s269
    %p281 = scmp.eq.s32.totalorder %s25, 1
    %p282 = por %p280, %p281
    %p284 = scmp.ne.s32.totalorder %s269, %s283
    %p285 = scmp.eq.s32.totalorder %s25, 0
    %p286 = por %p284, %p285
    %s288 = sadd.s32 %s287, 1
    %p291 = scmp.eq.s32.totalorder %s19, 1
    %p292 = scmp.ne.s32.totalorder %s287, %s289
    %p293 = scmp.eq.s32.totalorder %s19, 0
    %p294 = por %p292, %p293
    %p295 = scmp.ne.s32.totalorder %s287, %s289
    %p296 = scmp.eq.s32.totalorder %s24, 1
    %p297 = por %p295, %p296
    %p298 = scmp.ne.s32.totalorder %s289, %s290
    %p299 = scmp.eq.s32.totalorder %s24, 0
    %p300 = por %p298, %p299
    %p301 = scmp.ne.s32.totalorder %s289, %s290
    %p302 = scmp.eq.s32.totalorder %s25, 1
    %p303 = por %p301, %p302
    %p305 = scmp.ne.s32.totalorder %s290, %s304
    %p306 = scmp.eq.s32.totalorder %s25, 0
    %p307 = por %p305, %p306
    %s309 = sadd.s32 %s308, 1
    %p312 = scmp.eq.s32.totalorder %s19, 1
    %p313 = scmp.ne.s32.totalorder %s308, %s310
    %p314 = scmp.eq.s32.totalorder %s19, 0
    %p315 = por %p313, %p314
    %p316 = scmp.ne.s32.totalorder %s308, %s310
    %p317 = scmp.eq.s32.totalorder %s24, 1
    %p318 = por %p316, %p317
    %p319 = scmp.ne.s32.totalorder %s310, %s311
    %p320 = scmp.eq.s32.totalorder %s24, 0
    %p321 = por %p319, %p320
    %p322 = scmp.ne.s32.totalorder %s310, %s311
    %p323 = scmp.eq.s32.totalorder %s25, 1
    %p324 = por %p322, %p323
    %p326 = scmp.ne.s32.totalorder %s311, %s325
    %p327 = scmp.eq.s32.totalorder %s25, 0
    %p328 = por %p326, %p327
    %s329 = ssub.s32 %s26, %s38
    %s330 = ssub.s32 %s27, %s34
    %s331 = sor.u32 %s329, %s330
    %p332 = scmp.eq.s32.totalorder %s331, 0
    %s334 = sadd.s32 %s333, 1
    %s335 = scalar_select %p332, %s333, %s334
    %p338 = pneg %p332
    %p339 = scmp.eq.s32.totalorder %s19, 1
    %p340 = por %p338, %p339
    %p341 = scmp.ne.s32.totalorder %s333, %s336
    %p342 = scmp.eq.s32.totalorder %s19, 0
    %p343 = por %p341, %p342
    %p344 = scmp.ne.s32.totalorder %s333, %s336
    %p345 = scmp.eq.s32.totalorder %s24, 1
    %p346 = por %p344, %p345
    %p347 = scmp.ne.s32.totalorder %s336, %s337
    %p348 = scmp.eq.s32.totalorder %s24, 0
    %p349 = por %p347, %p348
    %p350 = scmp.ne.s32.totalorder %s336, %s337
    %p351 = scmp.eq.s32.totalorder %s25, 1
    %p352 = por %p350, %p351
    %p354 = scmp.ne.s32.totalorder %s337, %s353
    %p355 = scmp.eq.s32.totalorder %s25, 0
    %p356 = por %p354, %p355
    %p357 = scmp.le.s32.totalorder 1, %s19
    %p358 = scmp.lt.s32.totalorder %s19, 3
    %p359 = pnand %p357, %p358
    %p360 = pneg %p359
    // Predicated region
    $region9: #{_lambda_.15} parent=5 // pred_check
      _
    $region10: #{_lambda_.15} parent=5 // pred_check_branch
      %362 = sbr.rel (%p359) target = $region12
    $region11: #{_lambda_.15} parent=5 // pred_region
      %s363 = ssub.s32 %s19, 1
      // Predicated region
      $region13: #{_lambda_.15} parent=11 // pred_check
        %p364 = pneg %p132
      $region14: #{_lambda_.15} parent=11 // pred_check_branch
        %366 = sbr.rel (%p364) target = $region16
      $region15: #{_lambda_.15} parent=11 // pred_region
        _
      $region16: #{_lambda_.15} parent=11 // pred_fallthru
        _
      // Predicated region
      $region17: #{_lambda_.15} parent=11 // pred_check
        %p367 = pneg %p153
      $region18: #{_lambda_.15} parent=11 // pred_check_branch
        %369 = sbr.rel (%p367) target = $region20
      $region19: #{_lambda_.15} parent=11 // pred_region
        _
      $region20: #{_lambda_.15} parent=11 // pred_fallthru
        _
      // Predicated region
      $region21: #{_lambda_.15} parent=11 // pred_check
        %p370 = pneg %p174
      $region22: #{_lambda_.15} parent=11 // pred_check_branch
        %372 = sbr.rel (%p370) target = $region24
      $region23: #{_lambda_.15} parent=11 // pred_region
        _
      $region24: #{_lambda_.15} parent=11 // pred_fallthru
        _
      // Predicated region
      $region25: #{_lambda_.15} parent=11 // pred_check
        %p373 = pneg %p195
      $region26: #{_lambda_.15} parent=11 // pred_check_branch
        %375 = sbr.rel (%p373) target = $region28
      $region27: #{_lambda_.15} parent=11 // pred_region
        _
      $region28: #{_lambda_.15} parent=11 // pred_fallthru
        _
      // Predicated region
      $region29: #{_lambda_.15} parent=11 // pred_check
        %p376 = pneg %p216
      $region30: #{_lambda_.15} parent=11 // pred_check_branch
        %378 = sbr.rel (%p376) target = $region32
      $region31: #{_lambda_.15} parent=11 // pred_region
        _
      $region32: #{_lambda_.15} parent=11 // pred_fallthru
        _
      // Predicated region
      $region33: #{_lambda_.15} parent=11 // pred_check
        %p379 = pneg %p237
      $region34: #{_lambda_.15} parent=11 // pred_check_branch
        %381 = sbr.rel (%p379) target = $region36
      $region35: #{_lambda_.15} parent=11 // pred_region
        _
      $region36: #{_lambda_.15} parent=11 // pred_fallthru
        _
      // Predicated region
      $region37: #{_lambda_.15} parent=11 // pred_check
        %p382 = pneg %p258
      $region38: #{_lambda_.15} parent=11 // pred_check_branch
        %384 = sbr.rel (%p382) target = $region40
      $region39: #{_lambda_.15} parent=11 // pred_region
        _
      $region40: #{_lambda_.15} parent=11 // pred_fallthru
        _
      // Predicated region
      $region41: #{_lambda_.15} parent=11 // pred_check
        %p385 = pneg %p279
      $region42: #{_lambda_.15} parent=11 // pred_check_branch
        %387 = sbr.rel (%p385) target = $region44
      $region43: #{_lambda_.15} parent=11 // pred_region
        _
      $region44: #{_lambda_.15} parent=11 // pred_fallthru
        _
      // Predicated region
      $region45: #{_lambda_.15} parent=11 // pred_check
        %p388 = pneg %p300
      $region46: #{_lambda_.15} parent=11 // pred_check_branch
        %390 = sbr.rel (%p388) target = $region48
      $region47: #{_lambda_.15} parent=11 // pred_region
        _
      $region48: #{_lambda_.15} parent=11 // pred_fallthru
        _
      // Predicated region
      $region49: #{_lambda_.15} parent=11 // pred_check
        %p391 = pneg %p321
      $region50: #{_lambda_.15} parent=11 // pred_check_branch
        %393 = sbr.rel (%p391) target = $region52
      $region51: #{_lambda_.15} parent=11 // pred_region
        _
      $region52: #{_lambda_.15} parent=11 // pred_fallthru
        _
    $region12: #{_lambda_.15} parent=5 // pred_fallthru
      _
    %p394 = scmp.lt.s32.totalorder %s19, 2
    // Predicated region
    $region53: #{_lambda_.15} parent=5 // pred_check
      %p395 = pneg %p394
    $region54: #{_lambda_.15} parent=5 // pred_check_branch
      %397 = sbr.rel (%p395) target = $region56
    $region55: #{_lambda_.15} parent=5 // pred_region
      // Predicated region
      $region57: #{_lambda_.15} parent=55 // pred_check
        %p398 = pneg %p53
      $region58: #{_lambda_.15} parent=55 // pred_check_branch
        %400 = sbr.rel (%p398) target = $region60
      $region59: #{_lambda_.15} parent=55 // pred_region
        %p401 = scmp.lt.s32.totalorder %s26, 1
        %s402 = scalar_select %p401, %s26, 1
        %p403 = scmp.lt.s32.totalorder %s27, 0
        %s404 = scalar_select %p403, %s27, 0
        %s405 = sadd.s32 %s404, %s402
        %s406 = smul.addr %s405, 4
        %s407 = scalar_lea.vmem %s0, %s406
      $region60: #{_lambda_.15} parent=55 // pred_fallthru
        _
      // Predicated region
      $region61: #{_lambda_.15} parent=55 // pred_check
        %p408 = pneg %p79
      $region62: #{_lambda_.15} parent=55 // pred_check_branch
        %410 = sbr.rel (%p408) target = $region64
      $region63: #{_lambda_.15} parent=55 // pred_region
        %p411 = scmp.lt.s32.totalorder %s26, 1
        %s412 = scalar_select %p411, %s26, 1
        %s413 = smul.addr %s412, 4
        %s414 = scalar_lea.vmem %s1, %s413
      $region64: #{_lambda_.15} parent=55 // pred_fallthru
        _
      // Predicated region
      $region65: #{_lambda_.15} parent=55 // pred_check
        %p415 = pneg %p105
      $region66: #{_lambda_.15} parent=55 // pred_check_branch
        %417 = sbr.rel (%p415) target = $region68
      $region67: #{_lambda_.15} parent=55 // pred_region
        %p418 = scmp.lt.s32.totalorder %s26, 1
        %s419 = scalar_select %p418, %s26, 1
        %s420 = scalar_lea.vmem %s2, %s419
      $region68: #{_lambda_.15} parent=55 // pred_fallthru
        _
    $region56: #{_lambda_.15} parent=5 // pred_fallthru
      _
    %p421 = scmp.le.s32.totalorder 1, %s19
    %p422 = scmp.lt.s32.totalorder %s19, 3
    %p423 = pnand %p421, %p422
    %p424 = pneg %p423
    // Predicated region
    $region69: #{_lambda_.15} parent=5 // pred_check
      _
    $region70: #{_lambda_.15} parent=5 // pred_check_branch
      %426 = sbr.rel (%p423) target = $region72
    $region71: #{_lambda_.15} parent=5 // pred_region
      %s427 = ssub.s32 %s19, 1
      %p428 = scmp.lt.s32.totalorder %s28, 1
      %s429 = scalar_select %p428, %s28, 1
      %p430 = scmp.lt.s32.totalorder %s29, 0
      %s431 = scalar_select %p430, %s29, 0
      %s432 = sadd.s32 %s431, %s429
      %s433 = smul.addr %s432, 4
      %s434 = scalar_lea.vmem %s0, %s433
      %p435 = pneg %p59
      %p436 = pneg %p56
      %p437 = scmp.lt.s32.totalorder %s28, 1
      %s438 = scalar_select %p437, %s28, 1
      %s439 = smul.addr %s438, 4
      %s440 = scalar_lea.vmem %s1, %s439
      %p441 = pneg %p85
      %p442 = pneg %p82
      %p443 = scmp.lt.s32.totalorder %s28, 1
      %s444 = scalar_select %p443, %s28, 1
      %s445 = scalar_lea.vmem %s2, %s444
      %p446 = pneg %p111
      %p447 = pneg %p108
      %p448 = pneg %p132
      %p449 = pneg %p129
      %p450 = pneg %p153
      %p451 = pneg %p150
      %p452 = pneg %p174
      %p453 = pneg %p171
      %p454 = pneg %p195
      %p455 = pneg %p192
      %p456 = pneg %p216
      %p457 = pneg %p213
      %p458 = pneg %p237
      %p459 = pneg %p234
      %p460 = pneg %p258
      %p461 = pneg %p255
      %p462 = pneg %p279
      %p463 = pneg %p276
      %p464 = pneg %p300
      %p465 = pneg %p297
      %p466 = pneg %p321
      %p467 = pneg %p318
      %p468 = pneg %p349
      %p469 = pneg %p346
      %p470 = scmp.lt.s32.totalorder %s28, 1
      %s471 = scalar_select %p470, %s28, 1
      %p472 = scmp.lt.s32.totalorder %s29, 0
      %s473 = scalar_select %p472, %s29, 0
      %s474 = sadd.s32 %s473, %s471
      %s475 = smul.addr %s474, 4
      %s476 = scalar_lea.vmem %s13, %s475
      %p477 = scmp.lt.s32.totalorder %s28, 1
      %s478 = scalar_select %p477, %s28, 1
      %p479 = scmp.lt.s32.totalorder %s29, 0
      %s480 = scalar_select %p479, %s29, 0
      %s481 = sadd.s32 %s480, %s478
      %s482 = smul.addr %s481, 4
      %s483 = scalar_lea.vmem %s0, %s482
      %p484 = scmp.lt.s32.totalorder %s28, 1
      %s485 = scalar_select %p484, %s28, 1
      %s486 = smul.addr %s485, 4
      %s487 = scalar_lea.vmem %s1, %s486
      %p488 = scmp.lt.s32.totalorder %s28, 1
      %s489 = scalar_select %p488, %s28, 1
      %s490 = scalar_lea.vmem %s2, %s489
      %p491 = scmp.lt.s32.totalorder %s28, 1
      %s492 = scalar_select %p491, %s28, 1
      %p493 = scmp.lt.s32.totalorder %s29, 0
      %s494 = scalar_select %p493, %s29, 0
      %s495 = sadd.s32 %s494, %s492
      %s496 = smul.addr %s495, 4
      %s497 = scalar_lea.vmem %s13, %s496
      %v499 = vld [vmem:[%s483] sm:$0xf]
      %v500 = vld [vmem:[%s487] sm:$0xf]
      %v501 = vld [vmem:[%s490] sm:$0x1]
      %v502 = vld [vmem:[%s3] sm:$0xf]
      %v503 = vld [vmem:[%s3 + $0x4] sm:$0xf]
      %v504 = vld [vmem:[%s3 + $0x8] sm:$0xf]
      %v505 = vld [vmem:[%s3 + $0xc] sm:$0xf]
      %v506 = vld [vmem:[%s4] sm:$0x1]
      %v508 = vperm.slane %v506, 0
      %v514 = vunpack.c.l.b16 %v502
      %v515 = vunpack.c.l.b16 %v503
      %v516 = vunpack.c.l.b16 %v504
      %v517 = vunpack.c.l.b16 %v505
      %v518 = vpack.c.b16 %v515, %v514
      %v519 = vpack.c.b16 %v517, %v516
      %vm522 = vcmask 261120
      %v524 = vsel %vm522, %v499, 0
      %526 = vmatpush.bf16.msra.mxu0 0
      %527 = vmatpush.bf16.msra.mxu0 0
      %528 = vmatpush.bf16.msra.mxu0 0
      %529 = vmatpush.bf16.msra.mxu0 0
      %530 = vmatpush.bf16.msra.mxu0 0
      %531 = vmatpush.bf16.msra.mxu0 0
      %532 = vmatpush.bf16.msra.mxu0 %v519
      %533 = vmatpush.bf16.msra.mxu0 %v518
      %534 = vmatmul.bf16.gmra.mxu0 %v524
      %v535 = vpop.f32.mrf.mxu0
      %v536 = vadd.f32 %v508, %v535
      %v537 = vpop.f32.mrf.mxu0
      %538 = vdwg.mxu0
      %v539 = vld [vmem:[%s5] sm:$0xf]
      %v540 = vld [vmem:[%s5 + $0x4] sm:$0xf]
      %v541 = vld [vmem:[%s5 + $0x8] sm:$0xf]
      %v542 = vld [vmem:[%s5 + $0xc] sm:$0xf]
      %v543 = vld [vmem:[%s6] sm:$0x1]
      %v545 = vperm.slane %v543, 0
      %v551 = vunpack.c.l.b16 %v539
      %v552 = vunpack.c.l.b16 %v540
      %v553 = vunpack.c.l.b16 %v541
      %v554 = vunpack.c.l.b16 %v542
      %v555 = vpack.c.b16 %v552, %v551
      %v556 = vpack.c.b16 %v554, %v553
      %v560 = vsel %vm522, %v500, 0
      %562 = vmatpush.bf16.msra.mxu0 0
      %563 = vmatpush.bf16.msra.mxu0 0
      %564 = vmatpush.bf16.msra.mxu0 0
      %565 = vmatpush.bf16.msra.mxu0 0
      %566 = vmatpush.bf16.msra.mxu0 0
      %567 = vmatpush.bf16.msra.mxu0 0
      %568 = vmatpush.bf16.msra.mxu0 %v556
      %569 = vmatpush.bf16.msra.mxu0 %v555
      %570 = vmatmul.bf16.gmra.mxu0 %v560
      %v571 = vpop.f32.mrf.mxu0
      %v572 = vadd.f32 %v545, %v571
      %v573 = vpop.f32.mrf.mxu0
      %574 = vdwg.mxu0
      %v575 = vld [vmem:[%s7] sm:$0xf]
      %v576 = vld [vmem:[%s7 + $0x4] sm:$0xf]
      %v577 = vld [vmem:[%s7 + $0x8] sm:$0xf]
      %v578 = vld [vmem:[%s7 + $0xc] sm:$0xf]
      %v579 = vld [vmem:[%s8] sm:$0x1]
      %v581 = vperm.slane %v579, 0
      %v587 = vunpack.c.l.b16 %v575
      %v588 = vunpack.c.l.b16 %v576
      %v589 = vunpack.c.l.b16 %v577
      %v590 = vunpack.c.l.b16 %v578
      %v591 = vpack.c.b16 %v588, %v587
      %v592 = vpack.c.b16 %v590, %v589
      %595 = vmatpush.bf16.msra.mxu0 0
      %596 = vmatpush.bf16.msra.mxu0 0
      %597 = vmatpush.bf16.msra.mxu0 0
      %598 = vmatpush.bf16.msra.mxu0 0
      %599 = vmatpush.bf16.msra.mxu0 0
      %600 = vmatpush.bf16.msra.mxu0 0
      %601 = vmatpush.bf16.msra.mxu0 %v592
      %602 = vmatpush.bf16.msra.mxu0 %v591
      %603 = vmatmul.bf16.gmra.mxu0 %v560
      %v604 = vpop.f32.mrf.mxu0
      %v605 = vadd.f32 %v581, %v604
      %v606 = vpop.f32.mrf.mxu0
      %607 = vdwg.mxu0
      %609 = vrot.lane.b32.xlu0 %v536, 120
      %v610 = vpop.permute.xlu0 %609
      %612 = vrot.lane.b32.xlu0 %v536, 112
      %v613 = vpop.permute.xlu0 %612
      %615 = vrot.lane.b32.xlu0 %v536, 104
      %v616 = vpop.permute.xlu0 %615
      %v618 = vrot.slane %v613, 4
      %vm619 = vcmask 1047556
      %v620 = vsel %vm619, %v618, %v536
      %v621 = vrot.slane %v536, 4
      %v622 = vsel %vm619, %v613, %v621
      %v624 = vunpack.c.l.s4 1983009808
      %v625 = vunpack.c.0.s8 %v624
      %v626 = vperm.slane %v620, %v625
      %v628 = vunpack.c.l.s4 1983009808
      %v629 = vunpack.c.0.s8 %v628
      %v630 = vperm.slane %v622, %v629
      %v631 = vrot.slane %v616, 4
      %v632 = vsel %vm619, %v631, %v610
      %v633 = vrot.slane %v610, 4
      %v634 = vsel %vm619, %v616, %v633
      %v636 = vunpack.c.l.s4 1983009808
      %v637 = vunpack.c.0.s8 %v636
      %v638 = vperm.slane %v632, %v637
      %v640 = vunpack.c.l.s4 1983009808
      %v641 = vunpack.c.0.s8 %v640
      %v642 = vperm.slane %v634, %v641
      %v643 = vrot.slane %v638, 4
      %v644 = vsel %vm619, %v643, %v626
      %v645 = vrot.slane %v626, 4
      %v646 = vsel %vm619, %v638, %v645
      %v648 = vunpack.c.l.s4 1934713408
      %v649 = vunpack.c.0.s8 %v648
      %v650 = vperm.slane %v644, %v649
      %v652 = vunpack.c.l.s4 1934713408
      %v653 = vunpack.c.0.s8 %v652
      %v654 = vperm.slane %v646, %v653
      %v655 = vrot.slane %v642, 4
      %v656 = vsel %vm619, %v655, %v630
      %v657 = vrot.slane %v630, 4
      %v658 = vsel %vm619, %v642, %v657
      %v660 = vunpack.c.l.s4 1934713408
      %v661 = vunpack.c.0.s8 %v660
      %v662 = vperm.slane %v656, %v661
      %v664 = vunpack.c.l.s4 1934713408
      %v665 = vunpack.c.0.s8 %v664
      %v666 = vperm.slane %v658, %v665
      %v667 = vrot.slane %v650, 4
      %v668 = vsel %vm619, 0.0, %v667
      %v669 = vrot.slane %v654, 4
      %v670 = vsel %vm619, 0.0, %v669
      %v671 = vrot.slane %v662, 4
      %v672 = vsel %vm619, 0.0, %v671
      %v673 = vrot.slane %v666, 4
      %v674 = vsel %vm619, 0.0, %v673
      %v675 = vsel %vm619, %v669, %v650
      %v677 = vunpack.c.l.s4 1983009808
      %v678 = vunpack.c.0.s8 %v677
      %v679 = vperm.slane %v675, %v678
      %v680 = vrot.slane %v670, 4
      %v681 = vsel %vm619, %v680, %v668
      %v683 = vunpack.c.l.s4 1983009808
      %v684 = vunpack.c.0.s8 %v683
      %v685 = vperm.slane %v681, %v684
      %v686 = vsel %vm619, %v673, %v662
      %v688 = vunpack.c.l.s4 1983009808
      %v689 = vunpack.c.0.s8 %v688
      %v690 = vperm.slane %v686, %v689
      %v691 = vrot.slane %v674, 4
      %v692 = vsel %vm619, %v691, %v672
      %v694 = vunpack.c.l.s4 1983009808
      %v695 = vunpack.c.0.s8 %v694
      %v696 = vperm.slane %v692, %v695
      %v697 = vrot.slane %v685, 4
      %v698 = vsel %vm619, %v697, %v679
      %v699 = vrot.slane %v679, 4
      %v700 = vsel %vm619, %v685, %v699
      %v702 = vunpack.c.l.s4 1934713408
      %v703 = vunpack.c.0.s8 %v702
      %v704 = vperm.slane %v698, %v703
      %v706 = vunpack.c.l.s4 1934713408
      %v707 = vunpack.c.0.s8 %v706
      %v708 = vperm.slane %v700, %v707
      %v709 = vrot.slane %v696, 4
      %v710 = vsel %vm619, %v709, %v690
      %v711 = vrot.slane %v690, 4
      %v712 = vsel %vm619, %v696, %v711
      %v714 = vunpack.c.l.s4 1934713408
      %v715 = vunpack.c.0.s8 %v714
      %v716 = vperm.slane %v710, %v715
      %v718 = vunpack.c.l.s4 1934713408
      %v719 = vunpack.c.0.s8 %v718
      %v720 = vperm.slane %v712, %v719
      %v721 = vrot.slane %v716, 4
      %v722 = vsel %vm619, %v721, %v704
      %v723 = vrot.slane %v704, 4
      %v724 = vsel %vm619, %v716, %v723
      %v725 = vrot.slane %v720, 4
      %v726 = vsel %vm619, %v725, %v708
      %v727 = vrot.slane %v708, 4
      %v728 = vsel %vm619, %v720, %v727
      %v729 = vpack.c.bf16 %v722, %v722
      %v730 = vpack.c.bf16 %v724, %v724
      %v731 = vpack.c.bf16 %v726, %v726
      %v732 = vpack.c.bf16 %v728, %v728
      %734 = vrot.lane.b32.xlu0 %v572, 120
      %v735 = vpop.permute.xlu0 %734
      %737 = vrot.lane.b32.xlu0 %v572, 112
      %v738 = vpop.permute.xlu0 %737
      %740 = vrot.lane.b32.xlu0 %v572, 104
      %v741 = vpop.permute.xlu0 %740
      %v743 = vrot.slane %v738, 4
      %v744 = vsel %vm619, %v743, %v572
      %v745 = vrot.slane %v572, 4
      %v746 = vsel %vm619, %v738, %v745
      %v748 = vunpack.c.l.s4 1983009808
      %v749 = vunpack.c.0.s8 %v748
      %v750 = vperm.slane %v744, %v749
      %v752 = vunpack.c.l.s4 1983009808
      %v753 = vunpack.c.0.s8 %v752
      %v754 = vperm.slane %v746, %v753
      %v755 = vrot.slane %v741, 4
      %v756 = vsel %vm619, %v755, %v735
      %v757 = vrot.slane %v735, 4
      %v758 = vsel %vm619, %v741, %v757
      %v760 = vunpack.c.l.s4 1983009808
      %v761 = vunpack.c.0.s8 %v760
      %v762 = vperm.slane %v756, %v761
      %v764 = vunpack.c.l.s4 1983009808
      %v765 = vunpack.c.0.s8 %v764
      %v766 = vperm.slane %v758, %v765
      %v767 = vrot.slane %v762, 4
      %v768 = vsel %vm619, %v767, %v750
      %v769 = vrot.slane %v750, 4
      %v770 = vsel %vm619, %v762, %v769
      %v772 = vunpack.c.l.s4 1934713408
      %v773 = vunpack.c.0.s8 %v772
      %v774 = vperm.slane %v768, %v773
      %v776 = vunpack.c.l.s4 1934713408
      %v777 = vunpack.c.0.s8 %v776
      %v778 = vperm.slane %v770, %v777
      %v779 = vrot.slane %v766, 4
      %v780 = vsel %vm619, %v779, %v754
      %v781 = vrot.slane %v754, 4
      %v782 = vsel %vm619, %v766, %v781
      %v784 = vunpack.c.l.s4 1934713408
      %v785 = vunpack.c.0.s8 %v784
      %v786 = vperm.slane %v780, %v785
      %v788 = vunpack.c.l.s4 1934713408
      %v789 = vunpack.c.0.s8 %v788
      %v790 = vperm.slane %v782, %v789
      %v791 = vrot.slane %v774, 4
      %v792 = vsel %vm619, 0.0, %v791
      %v793 = vrot.slane %v778, 4
      %v794 = vsel %vm619, 0.0, %v793
      %v795 = vrot.slane %v786, 4
      %v796 = vsel %vm619, 0.0, %v795
      %v797 = vrot.slane %v790, 4
      %v798 = vsel %vm619, 0.0, %v797
      %v799 = vsel %vm619, %v793, %v774
      %v801 = vunpack.c.l.s4 1983009808
      %v802 = vunpack.c.0.s8 %v801
      %v803 = vperm.slane %v799, %v802
      %v804 = vrot.slane %v794, 4
      %v805 = vsel %vm619, %v804, %v792
      %v807 = vunpack.c.l.s4 1983009808
      %v808 = vunpack.c.0.s8 %v807
      %v809 = vperm.slane %v805, %v808
      %v810 = vsel %vm619, %v797, %v786
      %v812 = vunpack.c.l.s4 1983009808
      %v813 = vunpack.c.0.s8 %v812
      %v814 = vperm.slane %v810, %v813
      %v815 = vrot.slane %v798, 4
      %v816 = vsel %vm619, %v815, %v796
      %v818 = vunpack.c.l.s4 1983009808
      %v819 = vunpack.c.0.s8 %v818
      %v820 = vperm.slane %v816, %v819
      %v821 = vrot.slane %v809, 4
      %v822 = vsel %vm619, %v821, %v803
      %v823 = vrot.slane %v803, 4
      %v824 = vsel %vm619, %v809, %v823
      %v826 = vunpack.c.l.s4 1934713408
      %v827 = vunpack.c.0.s8 %v826
      %v828 = vperm.slane %v822, %v827
      %v830 = vunpack.c.l.s4 1934713408
      %v831 = vunpack.c.0.s8 %v830
      %v832 = vperm.slane %v824, %v831
      %v833 = vrot.slane %v820, 4
      %v834 = vsel %vm619, %v833, %v814
      %v835 = vrot.slane %v814, 4
      %v836 = vsel %vm619, %v820, %v835
      %v838 = vunpack.c.l.s4 1934713408
      %v839 = vunpack.c.0.s8 %v838
      %v840 = vperm.slane %v834, %v839
      %v842 = vunpack.c.l.s4 1934713408
      %v843 = vunpack.c.0.s8 %v842
      %v844 = vperm.slane %v836, %v843
      %v845 = vrot.slane %v840, 4
      %v846 = vsel %vm619, %v845, %v828
      %v847 = vrot.slane %v828, 4
      %v848 = vsel %vm619, %v840, %v847
      %v849 = vrot.slane %v844, 4
      %v850 = vsel %vm619, %v849, %v832
      %v851 = vrot.slane %v832, 4
      %v852 = vsel %vm619, %v844, %v851
      %v853 = vpack.c.bf16 %v846, %v846
      %v854 = vpack.c.bf16 %v848, %v848
      %v855 = vpack.c.bf16 %v850, %v850
      %v856 = vpack.c.bf16 %v852, %v852
      %858 = vrot.lane.b32.xlu0 %v605, 120
      %v859 = vpop.permute.xlu0 %858
      %861 = vrot.lane.b32.xlu0 %v605, 112
      %v862 = vpop.permute.xlu0 %861
      %864 = vrot.lane.b32.xlu0 %v605, 104
      %v865 = vpop.permute.xlu0 %864
      %v867 = vrot.slane %v862, 4
      %v868 = vsel %vm619, %v867, %v605
      %v869 = vrot.slane %v605, 4
      %v870 = vsel %vm619, %v862, %v869
      %v872 = vunpack.c.l.s4 1983009808
      %v873 = vunpack.c.0.s8 %v872
      %v874 = vperm.slane %v868, %v873
      %v876 = vunpack.c.l.s4 1983009808
      %v877 = vunpack.c.0.s8 %v876
      %v878 = vperm.slane %v870, %v877
      %v879 = vrot.slane %v865, 4
      %v880 = vsel %vm619, %v879, %v859
      %v881 = vrot.slane %v859, 4
      %v882 = vsel %vm619, %v865, %v881
      %v884 = vunpack.c.l.s4 1983009808
      %v885 = vunpack.c.0.s8 %v884
      %v886 = vperm.slane %v880, %v885
      %v888 = vunpack.c.l.s4 1983009808
      %v889 = vunpack.c.0.s8 %v888
      %v890 = vperm.slane %v882, %v889
      %v891 = vrot.slane %v886, 4
      %v892 = vsel %vm619, %v891, %v874
      %v893 = vrot.slane %v874, 4
      %v894 = vsel %vm619, %v886, %v893
      %v896 = vunpack.c.l.s4 1934713408
      %v897 = vunpack.c.0.s8 %v896
      %v898 = vperm.slane %v892, %v897
      %v900 = vunpack.c.l.s4 1934713408
      %v901 = vunpack.c.0.s8 %v900
      %v902 = vperm.slane %v894, %v901
      %v903 = vrot.slane %v890, 4
      %v904 = vsel %vm619, %v903, %v878
      %v905 = vrot.slane %v878, 4
      %v906 = vsel %vm619, %v890, %v905
      %v908 = vunpack.c.l.s4 1934713408
      %v909 = vunpack.c.0.s8 %v908
      %v910 = vperm.slane %v904, %v909
      %v912 = vunpack.c.l.s4 1934713408
      %v913 = vunpack.c.0.s8 %v912
      %v914 = vperm.slane %v906, %v913
      %v915 = vrot.slane %v898, 4
      %v916 = vsel %vm619, 0.0, %v915
      %v917 = vrot.slane %v902, 4
      %v918 = vsel %vm619, 0.0, %v917
      %v919 = vrot.slane %v910, 4
      %v920 = vsel %vm619, 0.0, %v919
      %v921 = vrot.slane %v914, 4
      %v922 = vsel %vm619, 0.0, %v921
      %v923 = vsel %vm619, %v917, %v898
      %v925 = vunpack.c.l.s4 1983009808
      %v926 = vunpack.c.0.s8 %v925
      %v927 = vperm.slane %v923, %v926
      %v928 = vrot.slane %v918, 4
      %v929 = vsel %vm619, %v928, %v916
      %v931 = vunpack.c.l.s4 1983009808
      %v932 = vunpack.c.0.s8 %v931
      %v933 = vperm.slane %v929, %v932
      %v934 = vsel %vm619, %v921, %v910
      %v936 = vunpack.c.l.s4 1983009808
      %v937 = vunpack.c.0.s8 %v936
      %v938 = vperm.slane %v934, %v937
      %v939 = vrot.slane %v922, 4
      %v940 = vsel %vm619, %v939, %v920
      %v942 = vunpack.c.l.s4 1983009808
      %v943 = vunpack.c.0.s8 %v942
      %v944 = vperm.slane %v940, %v943
      %v945 = vrot.slane %v933, 4
      %v946 = vsel %vm619, %v945, %v927
      %v947 = vrot.slane %v927, 4
      %v948 = vsel %vm619, %v933, %v947
      %v950 = vunpack.c.l.s4 1934713408
      %v951 = vunpack.c.0.s8 %v950
      %v952 = vperm.slane %v946, %v951
      %v954 = vunpack.c.l.s4 1934713408
      %v955 = vunpack.c.0.s8 %v954
      %v956 = vperm.slane %v948, %v955
      %v957 = vrot.slane %v944, 4
      %v958 = vsel %vm619, %v957, %v938
      %v959 = vrot.slane %v938, 4
      %v960 = vsel %vm619, %v944, %v959
      %v962 = vunpack.c.l.s4 1934713408
      %v963 = vunpack.c.0.s8 %v962
      %v964 = vperm.slane %v958, %v963
      %v966 = vunpack.c.l.s4 1934713408
      %v967 = vunpack.c.0.s8 %v966
      %v968 = vperm.slane %v960, %v967
      %v969 = vrot.slane %v964, 4
      %v970 = vsel %vm619, %v969, %v952
      %v971 = vrot.slane %v952, 4
      %v972 = vsel %vm619, %v964, %v971
      %v973 = vrot.slane %v968, 4
      %v974 = vsel %vm619, %v973, %v956
      %v975 = vrot.slane %v956, 4
      %v976 = vsel %vm619, %v968, %v975
      %v977 = vpack.c.bf16 %v970, %v970
      %v978 = vpack.c.bf16 %v972, %v972
      %v979 = vpack.c.bf16 %v974, %v974
      %v980 = vpack.c.bf16 %v976, %v976
      %v982 = vperm.slane %v501, 0
      %vm984 = vcmask 64512
      %v986 = vsel %vm984, %v729, 0
      %v989 = vsel %vm984, %v853, 0
      %991 = vmatpush.bf16.xpose.msra.mxu0 0
      %992 = vmatpush.bf16.xpose.msra.mxu0 0
      %993 = vmatpush.bf16.xpose.msra.mxu0 0
      %994 = vmatpush.bf16.xpose.msra.mxu0 0
      %995 = vmatpush.bf16.xpose.msra.mxu0 0
      %996 = vmatpush.bf16.xpose.msra.mxu0 0
      %997 = vmatpush.bf16.xpose.msra.mxu0 0
      %998 = vmatpush.bf16.xpose.msra.mxu0 %v989
      %999 = vmatmul.bf16.gmra.mxu0 %v986
      %v1000 = vpop.f32.mrf.mxu0
      %v1001 = vadd.f32 %v982, %v1000
      %v1002 = vpop.f32.mrf.mxu0
      %1003 = vdwg.mxu0
      %v1005 = vsel %vm984, %v730, 0
      %v1008 = vsel %vm984, %v854, 0
      %1010 = vmatpush.bf16.xpose.msra.mxu0 0
      %1011 = vmatpush.bf16.xpose.msra.mxu0 0
      %1012 = vmatpush.bf16.xpose.msra.mxu0 0
      %1013 = vmatpush.bf16.xpose.msra.mxu0 0
      %1014 = vmatpush.bf16.xpose.msra.mxu0 0
      %1015 = vmatpush.bf16.xpose.msra.mxu0 0
      %1016 = vmatpush.bf16.xpose.msra.mxu0 0
      %1017 = vmatpush.bf16.xpose.msra.mxu0 %v1008
      %1018 = vmatmul.bf16.gmra.mxu0 %v1005
      %v1019 = vpop.f32.mrf.mxu0
      %v1020 = vadd.f32 %v982, %v1019
      %v1021 = vpop.f32.mrf.mxu0
      %1022 = vdwg.mxu0
      %v1024 = vsel %vm984, %v731, 0
      %v1027 = vsel %vm984, %v855, 0
      %1029 = vmatpush.bf16.xpose.msra.mxu0 0
      %1030 = vmatpush.bf16.xpose.msra.mxu0 0
      %1031 = vmatpush.bf16.xpose.msra.mxu0 0
      %1032 = vmatpush.bf16.xpose.msra.mxu0 0
      %1033 = vmatpush.bf16.xpose.msra.mxu0 0
      %1034 = vmatpush.bf16.xpose.msra.mxu0 0
      %1035 = vmatpush.bf16.xpose.msra.mxu0 0
      %1036 = vmatpush.bf16.xpose.msra.mxu0 %v1027
      %1037 = vmatmul.bf16.gmra.mxu0 %v1024
      %v1038 = vpop.f32.mrf.mxu0
      %v1039 = vadd.f32 %v982, %v1038
      %v1040 = vpop.f32.mrf.mxu0
      %1041 = vdwg.mxu0
      %v1043 = vsel %vm984, %v732, 0
      %v1046 = vsel %vm984, %v856, 0
      %1048 = vmatpush.bf16.xpose.msra.mxu0 0
      %1049 = vmatpush.bf16.xpose.msra.mxu0 0
      %1050 = vmatpush.bf16.xpose.msra.mxu0 0
      %1051 = vmatpush.bf16.xpose.msra.mxu0 0
      %1052 = vmatpush.bf16.xpose.msra.mxu0 0
      %1053 = vmatpush.bf16.xpose.msra.mxu0 0
      %1054 = vmatpush.bf16.xpose.msra.mxu0 0
      %1055 = vmatpush.bf16.xpose.msra.mxu0 %v1046
      %1056 = vmatmul.bf16.gmra.mxu0 %v1043
      %v1057 = vpop.f32.mrf.mxu0
      %v1058 = vadd.f32 %v982, %v1057
      %v1059 = vpop.f32.mrf.mxu0
      %1060 = vdwg.mxu0
      %s1061 = smul.u32 %s29, 8
      %v1062 = vlaneseq
      %v1063 = vshrl.u32 %v1062, 7
      %v1064 = vstv %s1061
      %v1065 = vadd.s32 %v1064, %v1063
      %v1066 = vlaneseq
      %v1067 = vand.u32 %v1066, 127
      %vm1068 = vcmp.gt.s32.totalorder %v1067, %v1065
      %v1069 = vsel %vm1068, -1e+30, 0.0
      %v1070 = vadd.f32 %v1001, %v1069
      %v1071 = vadd.f32 %v1020, %v1069
      %v1072 = vadd.f32 %v1039, %v1069
      %v1073 = vadd.f32 %v1058, %v1069
      %v1074 = vsel %vm984, %v1070, -inf
      %1075 = vmax.xlane.f32.xlu0 %v1074
      %v1076 = vpop.xlane.xlu0 %1075
      %v1077 = vsel %vm984, %v1071, -inf
      %1078 = vmax.xlane.f32.xlu0 %v1077
      %v1079 = vpop.xlane.xlu0 %1078
      %v1080 = vsel %vm984, %v1072, -inf
      %1081 = vmax.xlane.f32.xlu0 %v1080
      %v1082 = vpop.xlane.xlu0 %1081
      %v1083 = vsel %vm984, %v1073, -inf
      %1084 = vmax.xlane.f32.xlu0 %v1083
      %v1085 = vpop.xlane.xlu0 %1084
      %v1086 = vsub.f32 %v1070, %v1076
      %v1087 = vsub.f32 %v1071, %v1079
      %v1088 = vsub.f32 %v1072, %v1082
      %v1089 = vsub.f32 %v1073, %v1085
      %v1090 = vmul.f32 %v1086, 1.442695
      %v1091 = vpow.pop %v1090
      %v1092 = vmul.f32 %v1087, 1.442695
      %v1093 = vpow.pop %v1092
      %v1094 = vmul.f32 %v1088, 1.442695
      %v1095 = vpow.pop %v1094
      %v1096 = vmul.f32 %v1089, 1.442695
      %v1097 = vpow.pop %v1096
      %v1098 = vsel %vm984, %v1091, 0.0
      %1099 = vadd.xlane.f32.xlu0 %v1098
      %v1100 = vpop.xlane.xlu0 %1099
      %v1101 = vsel %vm984, %v1093, 0.0
      %1102 = vadd.xlane.f32.xlu0 %v1101
      %v1103 = vpop.xlane.xlu0 %1102
      %v1104 = vsel %vm984, %v1095, 0.0
      %1105 = vadd.xlane.f32.xlu0 %v1104
      %v1106 = vpop.xlane.xlu0 %1105
      %v1107 = vsel %vm984, %v1097, 0.0
      %1108 = vadd.xlane.f32.xlu0 %v1107
      %v1109 = vpop.xlane.xlu0 %1108
      %v1110 = vrcp.pop %v1100
      %v1111 = vrcp.pop %v1103
      %v1112 = vrcp.pop %v1106
      %v1113 = vrcp.pop %v1109
      %v1114 = vmul.f32 %v1091, %v1110
      %v1115 = vmul.f32 %v1093, %v1111
      %v1116 = vmul.f32 %v1095, %v1112
      %v1117 = vmul.f32 %v1097, %v1113
      %v1118 = vpack.c.bf16 %v1114, %v1114
      %v1119 = vpack.c.bf16 %v1115, %v1115
      %v1120 = vpack.c.bf16 %v1116, %v1116
      %v1121 = vpack.c.bf16 %v1117, %v1117
      %v1123 = vsel %vm984, %v1118, 0
      %vm1125 = vcmask 1043456
      %v1127 = vsel %vm1125, %v977, 0
      %1129 = vmatpush.bf16.msra.mxu0 0
      %1130 = vmatpush.bf16.msra.mxu0 0
      %1131 = vmatpush.bf16.msra.mxu0 0
      %1132 = vmatpush.bf16.msra.mxu0 0
      %1133 = vmatpush.bf16.msra.mxu0 0
      %1134 = vmatpush.bf16.msra.mxu0 0
      %1135 = vmatpush.bf16.msra.mxu0 0
      %1136 = vmatpush.bf16.msra.mxu0 %v1127
      %1137 = vmatmul.bf16.gmra.mxu0 %v1123
      %v1138 = vpop.f32.mrf.mxu0
      %v1139 = vadd.f32 0.0, %v1138
      %v1140 = vpop.f32.mrf.mxu0
      %1141 = vdwg.mxu0
      %v1143 = vsel %vm984, %v1119, 0
      %v1146 = vsel %vm1125, %v978, 0
      %1148 = vmatpush.bf16.msra.mxu0 0
      %1149 = vmatpush.bf16.msra.mxu0 0
      %1150 = vmatpush.bf16.msra.mxu0 0
      %1151 = vmatpush.bf16.msra.mxu0 0
      %1152 = vmatpush.bf16.msra.mxu0 0
      %1153 = vmatpush.bf16.msra.mxu0 0
      %1154 = vmatpush.bf16.msra.mxu0 0
      %1155 = vmatpush.bf16.msra.mxu0 %v1146
      %1156 = vmatmul.bf16.gmra.mxu0 %v1143
      %v1157 = vpop.f32.mrf.mxu0
      %v1158 = vadd.f32 0.0, %v1157
      %v1159 = vpop.f32.mrf.mxu0
      %1160 = vdwg.mxu0
      %v1162 = vsel %vm984, %v1120, 0
      %v1165 = vsel %vm1125, %v979, 0
      %1167 = vmatpush.bf16.msra.mxu0 0
      %1168 = vmatpush.bf16.msra.mxu0 0
      %1169 = vmatpush.bf16.msra.mxu0 0
      %1170 = vmatpush.bf16.msra.mxu0 0
      %1171 = vmatpush.bf16.msra.mxu0 0
      %1172 = vmatpush.bf16.msra.mxu0 0
      %1173 = vmatpush.bf16.msra.mxu0 0
      %1174 = vmatpush.bf16.msra.mxu0 %v1165
      %1175 = vmatmul.bf16.gmra.mxu0 %v1162
      %v1176 = vpop.f32.mrf.mxu0
      %v1177 = vadd.f32 0.0, %v1176
      %v1178 = vpop.f32.mrf.mxu0
      %1179 = vdwg.mxu0
      %v1181 = vsel %vm984, %v1121, 0
      %v1184 = vsel %vm1125, %v980, 0
      %1186 = vmatpush.bf16.msra.mxu0 0
      %1187 = vmatpush.bf16.msra.mxu0 0
      %1188 = vmatpush.bf16.msra.mxu0 0
      %1189 = vmatpush.bf16.msra.mxu0 0
      %1190 = vmatpush.bf16.msra.mxu0 0
      %1191 = vmatpush.bf16.msra.mxu0 0
      %1192 = vmatpush.bf16.msra.mxu0 0
      %1193 = vmatpush.bf16.msra.mxu0 %v1184
      %1194 = vmatmul.bf16.gmra.mxu0 %v1181
      %v1195 = vpop.f32.mrf.mxu0
      %v1196 = vadd.f32 0.0, %v1195
      %v1197 = vpop.f32.mrf.mxu0
      %1198 = vdwg.mxu0
      %v1199 = vrot.slane %v1177, 4
      %v1200 = vsel %vm619, %v1199, %v1139
      %v1201 = vrot.slane %v1139, 4
      %v1202 = vsel %vm619, %v1177, %v1201
      %v1204 = vunpack.c.l.s4 1983009808
      %v1205 = vunpack.c.0.s8 %v1204
      %v1206 = vperm.slane %v1200, %v1205
      %v1208 = vunpack.c.l.s4 1983009808
      %v1209 = vunpack.c.0.s8 %v1208
      %v1210 = vperm.slane %v1202, %v1209
      %v1211 = vrot.slane %v1196, 4
      %v1212 = vsel %vm619, %v1211, %v1158
      %v1213 = vrot.slane %v1158, 4
      %v1214 = vsel %vm619, %v1196, %v1213
      %v1216 = vunpack.c.l.s4 1983009808
      %v1217 = vunpack.c.0.s8 %v1216
      %v1218 = vperm.slane %v1212, %v1217
      %v1220 = vunpack.c.l.s4 1983009808
      %v1221 = vunpack.c.0.s8 %v1220
      %v1222 = vperm.slane %v1214, %v1221
      %v1223 = vrot.slane %v1218, 4
      %v1224 = vsel %vm619, %v1223, %v1206
      %v1225 = vrot.slane %v1206, 4
      %v1226 = vsel %vm619, %v1218, %v1225
      %v1228 = vunpack.c.l.s4 1934713408
      %v1229 = vunpack.c.0.s8 %v1228
      %v1230 = vperm.slane %v1224, %v1229
      %v1232 = vunpack.c.l.s4 1934713408
      %v1233 = vunpack.c.0.s8 %v1232
      %v1234 = vperm.slane %v1226, %v1233
      %v1235 = vrot.slane %v1222, 4
      %v1236 = vsel %vm619, %v1235, %v1210
      %v1237 = vrot.slane %v1210, 4
      %v1238 = vsel %vm619, %v1222, %v1237
      %v1240 = vunpack.c.l.s4 1934713408
      %v1241 = vunpack.c.0.s8 %v1240
      %v1242 = vperm.slane %v1236, %v1241
      %v1244 = vunpack.c.l.s4 1934713408
      %v1245 = vunpack.c.0.s8 %v1244
      %v1246 = vperm.slane %v1238, %v1245
      %v1247 = vrot.slane %v1230, 4
      %v1248 = vsel %vm619, 0.0, %v1247
      %v1249 = vrot.slane %v1234, 4
      %v1250 = vsel %vm619, 0.0, %v1249
      %v1251 = vrot.slane %v1242, 4
      %v1252 = vsel %vm619, 0.0, %v1251
      %v1253 = vrot.slane %v1246, 4
      %v1254 = vsel %vm619, 0.0, %v1253
      %v1255 = vsel %vm619, %v1249, %v1230
      %v1257 = vunpack.c.l.s4 1983009808
      %v1258 = vunpack.c.0.s8 %v1257
      %v1259 = vperm.slane %v1255, %v1258
      %v1260 = vrot.slane %v1250, 4
      %v1261 = vsel %vm619, %v1260, %v1248
      %v1263 = vunpack.c.l.s4 1983009808
      %v1264 = vunpack.c.0.s8 %v1263
      %v1265 = vperm.slane %v1261, %v1264
      %v1266 = vsel %vm619, %v1253, %v1242
      %v1268 = vunpack.c.l.s4 1983009808
      %v1269 = vunpack.c.0.s8 %v1268
      %v1270 = vperm.slane %v1266, %v1269
      %v1271 = vrot.slane %v1254, 4
      %v1272 = vsel %vm619, %v1271, %v1252
      %v1274 = vunpack.c.l.s4 1983009808
      %v1275 = vunpack.c.0.s8 %v1274
      %v1276 = vperm.slane %v1272, %v1275
      %v1277 = vrot.slane %v1265, 4
      %v1278 = vsel %vm619, %v1277, %v1259
      %v1279 = vrot.slane %v1259, 4
      %v1280 = vsel %vm619, %v1265, %v1279
      %v1282 = vunpack.c.l.s4 1934713408
      %v1283 = vunpack.c.0.s8 %v1282
      %v1284 = vperm.slane %v1278, %v1283
      %v1286 = vunpack.c.l.s4 1934713408
      %v1287 = vunpack.c.0.s8 %v1286
      %v1288 = vperm.slane %v1280, %v1287
      %v1289 = vrot.slane %v1276, 4
      %v1290 = vsel %vm619, %v1289, %v1270
      %v1291 = vrot.slane %v1270, 4
      %v1292 = vsel %vm619, %v1276, %v1291
      %v1294 = vunpack.c.l.s4 1934713408
      %v1295 = vunpack.c.0.s8 %v1294
      %v1296 = vperm.slane %v1290, %v1295
      %v1298 = vunpack.c.l.s4 1934713408
      %v1299 = vunpack.c.0.s8 %v1298
      %v1300 = vperm.slane %v1292, %v1299
      %v1301 = vrot.slane %v1296, 4
      %v1302 = vsel %vm619, %v1301, %v1284
      %v1303 = vrot.slane %v1284, 4
      %v1304 = vsel %vm619, %v1296, %v1303
      %v1305 = vrot.slane %v1300, 4
      %v1306 = vsel %vm619, %v1305, %v1288
      %v1307 = vrot.slane %v1288, 4
      %v1308 = vsel %vm619, %v1300, %v1307
      %1310 = vrot.lane.b32.xlu0 %v1304, 8
      %v1311 = vpop.permute.xlu0 %1310
      %1314 = vrot.lane.b32.xlu0 %v1306, 16
      %v1315 = vpop.permute.xlu0 %1314
      %1318 = vrot.lane.b32.xlu0 %v1308, 24
      %v1319 = vpop.permute.xlu0 %1318
      %v1321 = vsel %vm984, %v1302, %v1311
      %vm1322 = vcmask 130048
      %v1323 = vsel %vm1322, %v1321, %v1315
      %vm1324 = vcmask 195584
      %v1325 = vsel %vm1324, %v1323, %v1319
      %v1326 = vpack.c.bf16 %v1325, %v1325
      %v1327 = vld [vmem:[%s9] sm:$0xf]
      %v1328 = vld [vmem:[%s9 + $0x4] sm:$0xf]
      %v1329 = vld [vmem:[%s9 + $0x8] sm:$0xf]
      %v1330 = vld [vmem:[%s9 + $0xc] sm:$0xf]
      %v1331 = vld [vmem:[%s10] sm:$0x1]
      %v1333 = vperm.slane %v1331, 0
      %v1339 = vunpack.c.l.b16 %v1327
      %v1340 = vunpack.c.l.b16 %v1328
      %v1341 = vunpack.c.l.b16 %v1329
      %v1342 = vunpack.c.l.b16 %v1330
      %v1343 = vpack.c.b16 %v1340, %v1339
      %v1344 = vpack.c.b16 %v1342, %v1341
      %v1348 = vsel %vm522, %v1326, 0
      %1350 = vmatpush.bf16.msra.mxu0 0
      %1351 = vmatpush.bf16.msra.mxu0 0
      %1352 = vmatpush.bf16.msra.mxu0 0
      %1353 = vmatpush.bf16.msra.mxu0 0
      %1354 = vmatpush.bf16.msra.mxu0 0
      %1355 = vmatpush.bf16.msra.mxu0 0
      %1356 = vmatpush.bf16.msra.mxu0 %v1344
      %1357 = vmatpush.bf16.msra.mxu0 %v1343
      %1358 = vmatmul.bf16.gmra.mxu0 %v1348
      %v1359 = vpop.f32.mrf.mxu0
      %v1360 = vadd.f32 %v1333, %v1359
      %v1361 = vpop.f32.mrf.mxu0
      %1362 = vdwg.mxu0
      %v1363 = vunpack.c.l.bf16 %v499
      %v1364 = vadd.f32 %v1363, %v1360
      %v1365 = vsel %vm522, %v1364, 0.0
      %1366 = vadd.xlane.f32.xlu0 %v1365
      %v1367 = vpop.xlane.xlu0 %1366
      %v1368 = vrcp.pop 32.0
      %v1369 = vmul.f32 32.0, %v1368
      %v1370 = vsub.f32 1.0, %v1369
      %v1371 = vmul.f32 %v1368, %v1370
      %v1372 = vadd.f32 %v1368, %v1371
      %vm1373 = vweird.f32 %v1368
      %v1374 = vsel %vm1373, %v1368, %v1372
      %v1375 = vmul.f32 %v1367, %v1374
      %v1376 = vsub.f32 %v1364, %v1375
      %v1377 = vmul.f32 %v1376, %v1376
      %v1378 = vsel %vm522, %v1377, 0.0
      %1379 = vadd.xlane.f32.xlu0 %v1378
      %v1380 = vpop.xlane.xlu0 %1379
      %v1381 = vmul.f32 %v1380, %v1374
      %v1382 = vadd.f32 %v1381, 1e-05
      %v1383 = vrsqrt.pop %v1382
      %v1384 = vmul.f32 %v1383, %v1382
      %v1385 = vmul.f32 %v1384, %v1383
      %v1386 = vmul.f32 0.5, %v1385
      %v1387 = vsub.f32 1.5, %v1386
      %v1388 = vmul.f32 %v1383, %v1387
      %vm1389 = vweird.f32 %v1382
      %vm1390 = vweird.f32 %v1383
      %vm1391 = vmor %vm1389, %vm1390
      %v1392 = vsel %vm1391, %v1383, %v1388
      %v1393 = vmul.f32 %v1376, %v1392
      %v1394 = vld [vmem:[%s11] sm:$0x1]
      %v1396 = vperm.slane %v1394, 0
      %v1398 = vmul.f32 %v1393, %v1396
      %v1399 = vld [vmem:[%s12] sm:$0x1]
      %v1401 = vperm.slane %v1399, 0
      %v1403 = vadd.f32 %v1398, %v1401
      %v1404 = vpack.c.bf16 %v1403, %v1403
      %vm1405 = vcmask 257024
      %1406 = vst.msk [vmem:[%s497] sm:$0xf] %vm1405, %v1404
      %p1407 = scmp.lt.s32.totalorder %s28, 1
      %s1408 = scalar_select %p1407, %s28, 1
      %p1409 = scmp.lt.s32.totalorder %s29, 0
      %s1410 = scalar_select %p1409, %s29, 0
      %s1411 = sadd.s32 %s1410, %s1408
      %s1412 = smul.addr %s1411, 4
      %s1413 = scalar_lea.vmem %s13, %s1412
      // Predicated region
      $region73: #{_lambda_.15} parent=71 // pred_check
        %p1414 = pneg %p346
      $region74: #{_lambda_.15} parent=71 // pred_check_branch
        %1416 = sbr.rel (%p1414) target = $region76
      $region75: #{_lambda_.15} parent=71 // pred_region
        _
      $region76: #{_lambda_.15} parent=71 // pred_fallthru
        _
    $region72: #{_lambda_.15} parent=5 // pred_fallthru
      _
    %p1417 = scmp.le.s32.totalorder 2, %s19
    // Predicated region
    $region77: #{_lambda_.15} parent=5 // pred_check
      %p1418 = pneg %p1417
    $region78: #{_lambda_.15} parent=5 // pred_check_branch
      %1420 = sbr.rel (%p1418) target = $region80
    $region79: #{_lambda_.15} parent=5 // pred_region
      %s1421 = ssub.s32 %s19, 2
      // Predicated region
      $region81: #{_lambda_.15} parent=79 // pred_check
        %p1422 = pneg %p352
      $region82: #{_lambda_.15} parent=79 // pred_check_branch
        %1424 = sbr.rel (%p1422) target = $region84
      $region83: #{_lambda_.15} parent=79 // pred_region
        %p1425 = scmp.lt.s32.totalorder %s30, 1
        %s1426 = scalar_select %p1425, %s30, 1
        %p1427 = scmp.lt.s32.totalorder %s31, 0
        %s1428 = scalar_select %p1427, %s31, 0
        %s1429 = sadd.s32 %s1428, %s1426
        %s1430 = smul.addr %s1429, 4
        %s1431 = scalar_lea.vmem %s13, %s1430
      $region84: #{_lambda_.15} parent=79 // pred_fallthru
        _
    $region80: #{_lambda_.15} parent=5 // pred_fallthru
      _
  $region6: #{_lambda_.15} parent=0 // loop_footer
    %s23 = sadd.s32 1, %s19
  $region7: #{_lambda_.15} parent=0 // loop_footer_branch
    %18 = sbr.rel target = $region3
  $region8: #{_lambda_.15} parent=0 // loop_exit
    _

</llo_original>
